<compile_context>
chip_gen: v6e
topology: v6e:2x2x1
jax: 0.10.0
libtpu: 0.0.40
codegen_flags: <defaults>
</compile_context>

<pallas_src>
import functools
import math

import jax
import jax.numpy as jnp
from jax import lax
from jax.experimental import pallas as pl
from jax.experimental.pallas import tpu as pltpu


def _gelu_tanh(x):
    # TODO(synk): HF RoBERTa uses exact erf-GELU; tanh approximation used here
    # (guaranteed to lower on Pallas TPU); numerical difference is ~1e-3.
    c = math.sqrt(2.0 / math.pi)
    return 0.5 * x * (1.0 + jnp.tanh(c * (x + 0.044715 * x * x * x)))


def _layer_norm(x, gamma, beta, eps):
    mu = jnp.mean(x, axis=-1, keepdims=True)
    var = jnp.mean((x - mu) * (x - mu), axis=-1, keepdims=True)
    return (x - mu) * lax.rsqrt(var + eps) * gamma + beta


def roberta_layer_kernel(*refs, num_heads, eps, separate_kv):
    if separate_kv:
        (hs_q_ref, hs_kv_ref, mask_ref,
         wq_ref, bq_ref, wk_ref, bk_ref, wv_ref, bv_ref,
         wao_ref, bao_ref, g1_ref, be1_ref,
         wi_ref, bi_ref, wo_ref, bo_ref, g2_ref, be2_ref,
         out_ref) = refs
    else:
        (hs_q_ref, mask_ref,
         wq_ref, bq_ref, wk_ref, bk_ref, wv_ref, bv_ref,
         wao_ref, bao_ref, g1_ref, be1_ref,
         wi_ref, bi_ref, wo_ref, bo_ref, g2_ref, be2_ref,
         out_ref) = refs
        hs_kv_ref = hs_q_ref

    f32 = jnp.float32
    bf16 = jnp.bfloat16

    hs_q = hs_q_ref[0]                       # [TS, H] f32 (residual path stays f32)
    hs_q_b = hs_q.astype(bf16)               # MXU operand (query tile)
    # full-sequence K/V operand; shares the query tile when the seq is untiled
    hs_kv_b = hs_kv_ref[0].astype(bf16) if separate_kv else hs_q_b
    mask = mask_ref[0, 0]                    # [1, S]  additive mask, f32

    ts = hs_q.shape[0]
    hidden = wao_ref.shape[-1]

    # Self-attention. Per-head weights are head-major ([nH, H, dh] / [nH, dh, H]),
    # so slicing is only on the leading (head) axis; the attention-output dense is
    # accumulated per head (ao += ctx_h @ Wao_h), so no concat / lane slicing.
    # 1/sqrt(head_dim) is pre-folded into Wq / bq on the host.
    ao = jnp.zeros((ts, hidden), f32)
    for h in range(num_heads):               # static, small head loop
        qh = jnp.dot(hs_q_b, wq_ref[h], preferred_element_type=f32) + bq_ref[h]
        kh = jnp.dot(hs_kv_b, wk_ref[h], preferred_element_type=f32) + bk_ref[h]
        vh = jnp.dot(hs_kv_b, wv_ref[h], preferred_element_type=f32) + bv_ref[h]

        # QK^T without an explicit transpose: contract the last dims of q and k.
        scores = lax.dot_general(
            qh.astype(bf16), kh.astype(bf16),
            dimension_numbers=(((1,), (1,)), ((), ())),
            preferred_element_type=f32) + mask                   # [TS, S] f32

        m = jnp.max(scores, axis=-1, keepdims=True)
        e = jnp.exp(scores - m)
        p = e * pl.reciprocal(jnp.sum(e, axis=-1, keepdims=True), approx=True)

        ctx_h = jnp.dot(p.astype(bf16), vh.astype(bf16),
                        preferred_element_type=f32)              # [TS, dh]
        ao = ao + jnp.dot(ctx_h.astype(bf16), wao_ref[h],
                          preferred_element_type=f32)            # [TS, H]

    ao = ao + bao_ref[...]
    # attention output dense + residual + LayerNorm (TtRobertaSelfOutput)
    attn_out = _layer_norm(ao + hs_q, g1_ref[...], be1_ref[...], eps)

    # intermediate dense + GELU (TtRobertaIntermediate), elementwise math in f32
    inter = jnp.dot(attn_out.astype(bf16), wi_ref[...],
                    preferred_element_type=f32) + bi_ref[...]
    inter = _gelu_tanh(inter)

    # output dense + residual + LayerNorm (TtRobertaOutput)
    o = jnp.dot(inter.astype(bf16), wo_ref[...],
                preferred_element_type=f32) + bo_ref[...]
    out_ref[0] = _layer_norm(o + attn_out, g2_ref[...], be2_ref[...], eps)


def tt_roberta_layer(hidden_states, attention_mask, params, *, num_heads,
                     eps=1e-5, tile_s=None):
    """Returns layer_output [B, S, H] (the `(layer_output,)` tuple's only element,
    since output_attentions=False and is_decoder=False)."""
    B, S, H = hidden_states.shape
    head_dim = H // num_heads
    I = params["wi"].shape[1]
    bf16, f32 = jnp.bfloat16, jnp.float32

    # sequence (query) tile: must divide S and be a multiple of 8 (or equal S)
    if tile_s is None:
        tile_s = 256 if (S > 256 and S % 256 == 0) else S
    assert S % tile_s == 0 and (tile_s % 8 == 0 or tile_s == S)
    n_s = S // tile_s
    separate_kv = n_s > 1          # only DMA a second (full-seq) hs block if tiled

    scale = 1.0 / math.sqrt(head_dim)

    # Head-major, bf16 weight layout (f32 biases / LN params).
    def head_major(w):   # [H, H] -> [nH, H, dh]
        return jnp.transpose(w.reshape(H, num_heads, head_dim), (1, 0, 2)).astype(bf16)

    wq = head_major(params["wq"] * scale)            # attention scale folded in
    wk, wv = head_major(params["wk"]), head_major(params["wv"])
    bq = (params["bq"] * scale).reshape(num_heads, 1, head_dim).astype(f32)
    bk = params["bk"].reshape(num_heads, 1, head_dim).astype(f32)
    bv = params["bv"].reshape(num_heads, 1, head_dim).astype(f32)
    wao = params["wao"].reshape(num_heads, head_dim, H).astype(bf16)
    wi = params["wi"].astype(bf16)
    wo = params["wo"].astype(bf16)

    kernel = functools.partial(
        roberta_layer_kernel, num_heads=num_heads, eps=eps, separate_kv=separate_kv)

    # Advisory cost estimate so XLA can schedule around this large custom call.
    mm_flops = 2 * B * S * (4 * H * H + 2 * H * I)
    attn_flops = 4 * B * num_heads * S * S * head_dim
    n_hs_streams = 2 if separate_kv else 1
    cost = pl.CostEstimate(
        flops=int(mm_flops + attn_flops),
        transcendentals=int(B * num_heads * S * S + B * S * I),
        bytes_accessed=int((4 * H * H + 2 * H * I) * 2 + (8 * H + 2 * I) * 4
                           + (1 + n_hs_streams) * B * S * H * 4 + B * S * 4),
    )

    # Explicit scoped-VMEM limit derived from the real footprint (with headroom),
    # clamped to [32 MiB, 64 MiB] so it is valid on v5e/v6e/v7x.
    weight_vmem = (4 * H * H + 2 * H * I) * 2              # bf16 weights
    const_vmem = (8 * H + 2 * I) * 4                       # biases + LN params (f32)
    act_vmem = (2 * tile_s * H + (S * H if separate_kv else 0)) * 4
    tmp_vmem = (3 * tile_s * S + 3 * S * head_dim
                + 2 * tile_s * I + 8 * tile_s * H) * 4     # in-kernel temporaries
    vmem_est = 2 * weight_vmem + 2 * const_vmem + 4 * act_vmem + tmp_vmem
    vmem_limit = int(min(max(vmem_est * 3 // 2, 32 * 1024 * 1024), 64 * 1024 * 1024))

    hs_args = (hidden_states, hidden_states) if separate_kv else (hidden_states,)
    args = hs_args + (attention_mask,
                      wq, bq, wk, bk, wv, bv,
                      wao, params["bao"], params["g1"], params["be1"],
                      wi, params["bi"], wo, params["bo"],
                      params["g2"], params["be2"])

    def build(single_buffer_weights):
        pipe = None
        if single_buffer_weights and hasattr(pl, "Buffered"):
            pipe = pl.Buffered(1)   # grid-invariant weights: no second buffer

        def const_spec(shape):
            kwargs = {} if pipe is None else {"pipeline_mode": pipe}
            return pl.BlockSpec(shape, lambda b, s, _n=len(shape): (0,) * _n, **kwargs)

        hs_specs = [pl.BlockSpec((1, tile_s, H), lambda b, s: (b, s, 0))]  # query tile
        if separate_kv:
            hs_specs.append(pl.BlockSpec((1, S, H), lambda b, s: (b, 0, 0)))  # full seq K/V

        return pl.pallas_call(
            kernel,
            out_shape=jax.ShapeDtypeStruct((B, S, H), f32),
            grid=(B, n_s),
            in_specs=hs_specs + [
                pl.BlockSpec((1, 1, 1, S), lambda b, s: (b, 0, 0, 0)),  # attention_mask
                const_spec((num_heads, H, head_dim)), const_spec((num_heads, 1, head_dim)),  # Wq, bq
                const_spec((num_heads, H, head_dim)), const_spec((num_heads, 1, head_dim)),  # Wk, bk
                const_spec((num_heads, H, head_dim)), const_spec((num_heads, 1, head_dim)),  # Wv, bv
                const_spec((num_heads, head_dim, H)), const_spec((1, H)),                    # Wao, bao
                const_spec((1, H)), const_spec((1, H)),                                      # LN1 gamma/beta
                const_spec((H, I)), const_spec((1, I)),                                      # Wi, bi
                const_spec((I, H)), const_spec((1, H)),                                      # Wo, bo
                const_spec((1, H)), const_spec((1, H)),                                      # LN2 gamma/beta
            ],
            out_specs=pl.BlockSpec((1, tile_s, H), lambda b, s: (b, s, 0)),
            compiler_params=pltpu.CompilerParams(
                dimension_semantics=("parallel", "parallel"),
                vmem_limit_bytes=vmem_limit),
            cost_estimate=cost,
        )

    try:
        out = build(single_buffer_weights=True)(*args)
        return jax.block_until_ready(out)
    except Exception:
        # TODO(synk): pipeline_mode=pl.Buffered(1) (single-buffered invariant
        # weights) unsupported on this JAX version; fall back to default
        # double-buffered weight pipeline.
        return build(single_buffer_weights=False)(*args)


def ref_roberta_layer(hs, mask, p, *, num_heads, eps=1e-5):
    """Plain-JAX reference with matching math/dtype handling (bf16 MXU operands,
    f32 accumulation & elementwise) for the correctness check."""
    B, S, H = hs.shape
    dh = H // num_heads
    bf, f32 = jnp.bfloat16, jnp.float32

    def mm(a, b):  # [..., K] @ [K, N] with bf16 operands, f32 accumulation
        return lax.dot_general(a.astype(bf), b.astype(bf),
                               dimension_numbers=(((a.ndim - 1,), (0,)), ((), ())),
                               preferred_element_type=f32)

    q = (mm(hs, p["wq"]) + p["bq"]) / math.sqrt(dh)
    k = mm(hs, p["wk"]) + p["bk"]
    v = mm(hs, p["wv"]) + p["bv"]

    def split(x):  # [B,S,H] -> [B,nH,S,dh]
        return x.reshape(B, S, num_heads, dh).transpose(0, 2, 1, 3)

    q, k, v = split(q), split(k), split(v)
    scores = jnp.einsum("bhqd,bhkd->bhqk", q.astype(bf), k.astype(bf),
                        preferred_element_type=f32) + mask
    probs = jax.nn.softmax(scores, axis=-1)
    ctx = jnp.einsum("bhqk,bhkd->bhqd", probs.astype(bf), v.astype(bf),
                     preferred_element_type=f32)
    ctx = ctx.transpose(0, 2, 1, 3).reshape(B, S, H)

    ao = mm(ctx, p["wao"]) + p["bao"]
    attn_out = _layer_norm(ao + hs, p["g1"], p["be1"], eps)
    inter = _gelu_tanh(mm(attn_out, p["wi"]) + p["bi"])
    o = mm(inter, p["wo"]) + p["bo"]
    return _layer_norm(o + attn_out, p["g2"], p["be2"], eps)


def make_params(key, hidden, intermediate):
    keys = jax.random.split(key, 12)
    s = 0.02

    def w(k, shape):
        return (s * jax.random.normal(k, shape)).astype(jnp.float32)

    return {
        "wq": w(keys[0], (hidden, hidden)),  "bq": w(keys[1], (1, hidden)),
        "wk": w(keys[2], (hidden, hidden)),  "bk": w(keys[3], (1, hidden)),
        "wv": w(keys[4], (hidden, hidden)),  "bv": w(keys[5], (1, hidden)),
        "wao": w(keys[6], (hidden, hidden)), "bao": w(keys[7], (1, hidden)),
        "g1": jnp.ones((1, hidden), jnp.float32),
        "be1": jnp.zeros((1, hidden), jnp.float32),
        "wi": w(keys[8], (hidden, intermediate)), "bi": w(keys[9], (1, intermediate)),
        "wo": w(keys[10], (intermediate, hidden)), "bo": w(keys[11], (1, hidden)),
        "g2": jnp.ones((1, hidden), jnp.float32),
        "be2": jnp.zeros((1, hidden), jnp.float32),
    }


if __name__ == "__main__":
    B, S, H, NUM_HEADS, INTER = 2, 8, 32, 2, 64

    key = jax.random.PRNGKey(0)
    k_hs, k_p = jax.random.split(key, 2)
    hidden_states = jax.random.normal(k_hs, (B, S, H), dtype=jnp.float32)

    # Additive attention mask: batch 0 attends to all positions, batch 1 has
    # its last two key positions masked out.
    keep = jnp.ones((B, S), jnp.float32).at[1, -2:].set(0.0)
    attention_mask = ((1.0 - keep) * -1e9).reshape(B, 1, 1, S).astype(jnp.float32)

    params = make_params(k_p, H, INTER)

    layer_output = tt_roberta_layer(
        hidden_states, attention_mask, params, num_heads=NUM_HEADS
    )
    layer_output = jax.block_until_ready(layer_output)

    expected = ref_roberta_layer(
        hidden_states, attention_mask, params, num_heads=NUM_HEADS
    )
    assert layer_output.shape == (B, S, H)
    max_err = float(jnp.max(jnp.abs(layer_output - expected)))
    assert jnp.allclose(layer_output, expected, atol=1e-2, rtol=1e-2), max_err
    print("KERNEL_OK")
</pallas_src>

<mosaic_0001>
module attributes {stable_mosaic.version = 11 : i64} {
  func.func @roberta_layer_kernel(%arg0: i32, %arg1: i32, %arg2: memref<1x8x32xf32, #tpu.memory_space<vmem>>, %arg3: memref<1x1x1x8xf32, #tpu.memory_space<vmem>>, %arg4: memref<2x32x16xbf16, #tpu.memory_space<vmem>>, %arg5: memref<2x1x16xf32, #tpu.memory_space<vmem>>, %arg6: memref<2x32x16xbf16, #tpu.memory_space<vmem>>, %arg7: memref<2x1x16xf32, #tpu.memory_space<vmem>>, %arg8: memref<2x32x16xbf16, #tpu.memory_space<vmem>>, %arg9: memref<2x1x16xf32, #tpu.memory_space<vmem>>, %arg10: memref<2x16x32xbf16, #tpu.memory_space<vmem>>, %arg11: memref<1x32xf32, #tpu.memory_space<vmem>>, %arg12: memref<1x32xf32, #tpu.memory_space<vmem>>, %arg13: memref<1x32xf32, #tpu.memory_space<vmem>>, %arg14: memref<32x64xbf16, #tpu.memory_space<vmem>>, %arg15: memref<1x64xf32, #tpu.memory_space<vmem>>, %arg16: memref<64x32xbf16, #tpu.memory_space<vmem>>, %arg17: memref<1x32xf32, #tpu.memory_space<vmem>>, %arg18: memref<1x32xf32, #tpu.memory_space<vmem>>, %arg19: memref<1x32xf32, #tpu.memory_space<vmem>>, %arg20: memref<1x8x32xf32, #tpu.memory_space<vmem>>) attributes {dimension_semantics = [#tpu.dimension_semantics<parallel>, #tpu.dimension_semantics<parallel>], iteration_bounds = array<i64: 2, 1>, scalar_prefetch = 0 : i64, scratch_operands = 0 : i64, tpu.core_type = #tpu.core_type<tc>, window_params = [{transform_indices = @transform_0, window_bounds = array<i64: 1, 8, 32>}, {transform_indices = @transform_1, window_bounds = array<i64: 1, 1, 1, 8>}, {pipeline_mode = #tpu.pipeline_mode<synchronous>, transform_indices = @transform_2, window_bounds = array<i64: 2, 32, 16>}, {pipeline_mode = #tpu.pipeline_mode<synchronous>, transform_indices = @transform_3, window_bounds = array<i64: 2, 1, 16>}, {pipeline_mode = #tpu.pipeline_mode<synchronous>, transform_indices = @transform_4, window_bounds = array<i64: 2, 32, 16>}, {pipeline_mode = #tpu.pipeline_mode<synchronous>, transform_indices = @transform_5, window_bounds = array<i64: 2, 1, 16>}, {pipeline_mode = #tpu.pipeline_mode<synchronous>, transform_indices = @transform_6, window_bounds = array<i64: 2, 32, 16>}, {pipeline_mode = #tpu.pipeline_mode<synchronous>, transform_indices = @transform_7, window_bounds = array<i64: 2, 1, 16>}, {pipeline_mode = #tpu.pipeline_mode<synchronous>, transform_indices = @transform_8, window_bounds = array<i64: 2, 16, 32>}, {pipeline_mode = #tpu.pipeline_mode<synchronous>, transform_indices = @transform_9, window_bounds = array<i64: 1, 32>}, {pipeline_mode = #tpu.pipeline_mode<synchronous>, transform_indices = @transform_10, window_bounds = array<i64: 1, 32>}, {pipeline_mode = #tpu.pipeline_mode<synchronous>, transform_indices = @transform_11, window_bounds = array<i64: 1, 32>}, {pipeline_mode = #tpu.pipeline_mode<synchronous>, transform_indices = @transform_12, window_bounds = array<i64: 32, 64>}, {pipeline_mode = #tpu.pipeline_mode<synchronous>, transform_indices = @transform_13, window_bounds = array<i64: 1, 64>}, {pipeline_mode = #tpu.pipeline_mode<synchronous>, transform_indices = @transform_14, window_bounds = array<i64: 64, 32>}, {pipeline_mode = #tpu.pipeline_mode<synchronous>, transform_indices = @transform_15, window_bounds = array<i64: 1, 32>}, {pipeline_mode = #tpu.pipeline_mode<synchronous>, transform_indices = @transform_16, window_bounds = array<i64: 1, 32>}, {pipeline_mode = #tpu.pipeline_mode<synchronous>, transform_indices = @transform_17, window_bounds = array<i64: 1, 32>}, {transform_indices = @transform_18, window_bounds = array<i64: 1, 8, 32>}]} {
    %c0 = arith.constant 0 : index
    %c0_0 = arith.constant 0 : index
    %c0_1 = arith.constant 0 : index
    %0 = vector.load %arg2[%c0, %c0_0, %c0_1] : memref<1x8x32xf32, #tpu.memory_space<vmem>>, vector<1x8x32xf32>
    %1 = vector.shape_cast %0 : vector<1x8x32xf32> to vector<8x32xf32>
    %2 = arith.truncf %1 : vector<8x32xf32> to vector<8x32xbf16>
    %c0_2 = arith.constant 0 : index
    %c0_3 = arith.constant 0 : index
    %c0_4 = arith.constant 0 : index
    %c0_5 = arith.constant 0 : index
    %3 = vector.load %arg3[%c0_2, %c0_3, %c0_4, %c0_5] : memref<1x1x1x8xf32, #tpu.memory_space<vmem>>, vector<1x1x1x8xf32>
    %4 = vector.shape_cast %3 : vector<1x1x1x8xf32> to vector<1x8xf32>
    %cst = arith.constant 0.000000e+00 : f32
    %5 = vector.broadcast %cst : f32 to vector<8x32xf32>
    %c0_6 = arith.constant 0 : index
    %c0_7 = arith.constant 0 : index
    %c0_8 = arith.constant 0 : index
    %6 = vector.load %arg4[%c0_6, %c0_7, %c0_8] : memref<2x32x16xbf16, #tpu.memory_space<vmem>>, vector<1x32x16xbf16>
    %7 = vector.shape_cast %6 : vector<1x32x16xbf16> to vector<32x16xbf16>
    %cst_9 = arith.constant dense<0.000000e+00> : vector<8x16xf32>
    %8 = tpu.matmul %2, %7, %cst_9 {dimension_numbers = #tpu.dot_dimension_numbers<[1], [0], [0], [1], [0, 0, 1, 1], [], []>} : vector<8x32xbf16>, vector<32x16xbf16>, vector<8x16xf32> -> vector<8x16xf32>
    %c0_10 = arith.constant 0 : index
    %c0_11 = arith.constant 0 : index
    %c0_12 = arith.constant 0 : index
    %9 = vector.load %arg5[%c0_10, %c0_11, %c0_12] : memref<2x1x16xf32, #tpu.memory_space<vmem>>, vector<1x1x16xf32>
    %10 = vector.shape_cast %9 : vector<1x1x16xf32> to vector<1x16xf32>
    %11 = vector.broadcast %10 : vector<1x16xf32> to vector<8x16xf32>
    %12 = arith.addf %8, %11 : vector<8x16xf32>
    %c0_13 = arith.constant 0 : index
    %c0_14 = arith.constant 0 : index
    %c0_15 = arith.constant 0 : index
    %13 = vector.load %arg6[%c0_13, %c0_14, %c0_15] : memref<2x32x16xbf16, #tpu.memory_space<vmem>>, vector<1x32x16xbf16>
    %14 = vector.shape_cast %13 : vector<1x32x16xbf16> to vector<32x16xbf16>
    %cst_16 = arith.constant dense<0.000000e+00> : vector<8x16xf32>
    %15 = tpu.matmul %2, %14, %cst_16 {dimension_numbers = #tpu.dot_dimension_numbers<[1], [0], [0], [1], [0, 0, 1, 1], [], []>} : vector<8x32xbf16>, vector<32x16xbf16>, vector<8x16xf32> -> vector<8x16xf32>
    %c0_17 = arith.constant 0 : index
    %c0_18 = arith.constant 0 : index
    %c0_19 = arith.constant 0 : index
    %16 = vector.load %arg7[%c0_17, %c0_18, %c0_19] : memref<2x1x16xf32, #tpu.memory_space<vmem>>, vector<1x1x16xf32>
    %17 = vector.shape_cast %16 : vector<1x1x16xf32> to vector<1x16xf32>
    %18 = vector.broadcast %17 : vector<1x16xf32> to vector<8x16xf32>
    %19 = arith.addf %15, %18 : vector<8x16xf32>
    %c0_20 = arith.constant 0 : index
    %c0_21 = arith.constant 0 : index
    %c0_22 = arith.constant 0 : index
    %20 = vector.load %arg8[%c0_20, %c0_21, %c0_22] : memref<2x32x16xbf16, #tpu.memory_space<vmem>>, vector<1x32x16xbf16>
    %21 = vector.shape_cast %20 : vector<1x32x16xbf16> to vector<32x16xbf16>
    %cst_23 = arith.constant dense<0.000000e+00> : vector<8x16xf32>
    %22 = tpu.matmul %2, %21, %cst_23 {dimension_numbers = #tpu.dot_dimension_numbers<[1], [0], [0], [1], [0, 0, 1, 1], [], []>} : vector<8x32xbf16>, vector<32x16xbf16>, vector<8x16xf32> -> vector<8x16xf32>
    %c0_24 = arith.constant 0 : index
    %c0_25 = arith.constant 0 : index
    %c0_26 = arith.constant 0 : index
    %23 = vector.load %arg9[%c0_24, %c0_25, %c0_26] : memref<2x1x16xf32, #tpu.memory_space<vmem>>, vector<1x1x16xf32>
    %24 = vector.shape_cast %23 : vector<1x1x16xf32> to vector<1x16xf32>
    %25 = vector.broadcast %24 : vector<1x16xf32> to vector<8x16xf32>
    %26 = arith.addf %22, %25 : vector<8x16xf32>
    %27 = arith.truncf %12 : vector<8x16xf32> to vector<8x16xbf16>
    %28 = arith.truncf %19 : vector<8x16xf32> to vector<8x16xbf16>
    %cst_27 = arith.constant dense<0.000000e+00> : vector<8x8xf32>
    %29 = tpu.matmul %27, %28, %cst_27 {dimension_numbers = #tpu.dot_dimension_numbers<[1], [1], [0], [0], [0, 0, 1, 0], [], []>} : vector<8x16xbf16>, vector<8x16xbf16>, vector<8x8xf32> -> vector<8x8xf32>
    %30 = vector.broadcast %4 : vector<1x8xf32> to vector<8x8xf32>
    %31 = arith.addf %29, %30 : vector<8x8xf32>
    %cst_28 = arith.constant dense<0xFF800000> : vector<8xf32>
    %32 = vector.multi_reduction <maximumf>, %31, %cst_28 [1] : vector<8x8xf32> to vector<8xf32>
    %33 = vector.shape_cast %32 : vector<8xf32> to vector<8x1xf32>
    %34 = vector.broadcast %33 : vector<8x1xf32> to vector<8x8xf32>
    %35 = arith.subf %31, %34 : vector<8x8xf32>
    %36 = math.exp %35 : vector<8x8xf32>
    %cst_29 = arith.constant dense<0.000000e+00> : vector<8xf32>
    %37 = vector.multi_reduction <add>, %36, %cst_29 [1] : vector<8x8xf32> to vector<8xf32>
    %38 = vector.shape_cast %37 : vector<8xf32> to vector<8x1xf32>
    %39 = tpu.reciprocal %38 {approx = true} : vector<8x1xf32> -> vector<8x1xf32>
    %40 = vector.broadcast %39 : vector<8x1xf32> to vector<8x8xf32>
    %41 = arith.mulf %36, %40 : vector<8x8xf32>
    %42 = arith.truncf %41 : vector<8x8xf32> to vector<8x8xbf16>
    %43 = arith.truncf %26 : vector<8x16xf32> to vector<8x16xbf16>
    %cst_30 = arith.constant dense<0.000000e+00> : vector<8x16xf32>
    %44 = tpu.matmul %42, %43, %cst_30 {dimension_numbers = #tpu.dot_dimension_numbers<[1], [0], [0], [1], [0, 0, 1, 1], [], []>} : vector<8x8xbf16>, vector<8x16xbf16>, vector<8x16xf32> -> vector<8x16xf32>
    %45 = arith.truncf %44 : vector<8x16xf32> to vector<8x16xbf16>
    %c0_31 = arith.constant 0 : index
    %c0_32 = arith.constant 0 : index
    %c0_33 = arith.constant 0 : index
    %46 = vector.load %arg10[%c0_31, %c0_32, %c0_33] : memref<2x16x32xbf16, #tpu.memory_space<vmem>>, vector<1x16x32xbf16>
    %47 = vector.shape_cast %46 : vector<1x16x32xbf16> to vector<16x32xbf16>
    %cst_34 = arith.constant dense<0.000000e+00> : vector<8x32xf32>
    %48 = tpu.matmul %45, %47, %cst_34 {dimension_numbers = #tpu.dot_dimension_numbers<[1], [0], [0], [1], [0, 0, 1, 1], [], []>} : vector<8x16xbf16>, vector<16x32xbf16>, vector<8x32xf32> -> vector<8x32xf32>
    %49 = arith.addf %5, %48 : vector<8x32xf32>
    %c1 = arith.constant 1 : index
    %c0_35 = arith.constant 0 : index
    %c0_36 = arith.constant 0 : index
    %50 = vector.load %arg4[%c1, %c0_35, %c0_36] : memref<2x32x16xbf16, #tpu.memory_space<vmem>>, vector<1x32x16xbf16>
    %51 = vector.shape_cast %50 : vector<1x32x16xbf16> to vector<32x16xbf16>
    %cst_37 = arith.constant dense<0.000000e+00> : vector<8x16xf32>
    %52 = tpu.matmul %2, %51, %cst_37 {dimension_numbers = #tpu.dot_dimension_numbers<[1], [0], [0], [1], [0, 0, 1, 1], [], []>} : vector<8x32xbf16>, vector<32x16xbf16>, vector<8x16xf32> -> vector<8x16xf32>
    %c1_38 = arith.constant 1 : index
    %c0_39 = arith.constant 0 : index
    %c0_40 = arith.constant 0 : index
    %53 = vector.load %arg5[%c1_38, %c0_39, %c0_40] : memref<2x1x16xf32, #tpu.memory_space<vmem>>, vector<1x1x16xf32>
    %54 = vector.shape_cast %53 : vector<1x1x16xf32> to vector<1x16xf32>
    %55 = vector.broadcast %54 : vector<1x16xf32> to vector<8x16xf32>
    %56 = arith.addf %52, %55 : vector<8x16xf32>
    %c1_41 = arith.constant 1 : index
    %c0_42 = arith.constant 0 : index
    %c0_43 = arith.constant 0 : index
    %57 = vector.load %arg6[%c1_41, %c0_42, %c0_43] : memref<2x32x16xbf16, #tpu.memory_space<vmem>>, vector<1x32x16xbf16>
    %58 = vector.shape_cast %57 : vector<1x32x16xbf16> to vector<32x16xbf16>
    %cst_44 = arith.constant dense<0.000000e+00> : vector<8x16xf32>
    %59 = tpu.matmul %2, %58, %cst_44 {dimension_numbers = #tpu.dot_dimension_numbers<[1], [0], [0], [1], [0, 0, 1, 1], [], []>} : vector<8x32xbf16>, vector<32x16xbf16>, vector<8x16xf32> -> vector<8x16xf32>
    %c1_45 = arith.constant 1 : index
    %c0_46 = arith.constant 0 : index
    %c0_47 = arith.constant 0 : index
    %60 = vector.load %arg7[%c1_45, %c0_46, %c0_47] : memref<2x1x16xf32, #tpu.memory_space<vmem>>, vector<1x1x16xf32>
    %61 = vector.shape_cast %60 : vector<1x1x16xf32> to vector<1x16xf32>
    %62 = vector.broadcast %61 : vector<1x16xf32> to vector<8x16xf32>
    %63 = arith.addf %59, %62 : vector<8x16xf32>
    %c1_48 = arith.constant 1 : index
    %c0_49 = arith.constant 0 : index
    %c0_50 = arith.constant 0 : index
    %64 = vector.load %arg8[%c1_48, %c0_49, %c0_50] : memref<2x32x16xbf16, #tpu.memory_space<vmem>>, vector<1x32x16xbf16>
    %65 = vector.shape_cast %64 : vector<1x32x16xbf16> to vector<32x16xbf16>
    %cst_51 = arith.constant dense<0.000000e+00> : vector<8x16xf32>
    %66 = tpu.matmul %2, %65, %cst_51 {dimension_numbers = #tpu.dot_dimension_numbers<[1], [0], [0], [1], [0, 0, 1, 1], [], []>} : vector<8x32xbf16>, vector<32x16xbf16>, vector<8x16xf32> -> vector<8x16xf32>
    %c1_52 = arith.constant 1 : index
    %c0_53 = arith.constant 0 : index
    %c0_54 = arith.constant 0 : index
    %67 = vector.load %arg9[%c1_52, %c0_53, %c0_54] : memref<2x1x16xf32, #tpu.memory_space<vmem>>, vector<1x1x16xf32>
    %68 = vector.shape_cast %67 : vector<1x1x16xf32> to vector<1x16xf32>
    %69 = vector.broadcast %68 : vector<1x16xf32> to vector<8x16xf32>
    %70 = arith.addf %66, %69 : vector<8x16xf32>
    %71 = arith.truncf %56 : vector<8x16xf32> to vector<8x16xbf16>
    %72 = arith.truncf %63 : vector<8x16xf32> to vector<8x16xbf16>
    %cst_55 = arith.constant dense<0.000000e+00> : vector<8x8xf32>
    %73 = tpu.matmul %71, %72, %cst_55 {dimension_numbers = #tpu.dot_dimension_numbers<[1], [1], [0], [0], [0, 0, 1, 0], [], []>} : vector<8x16xbf16>, vector<8x16xbf16>, vector<8x8xf32> -> vector<8x8xf32>
    %74 = vector.broadcast %4 : vector<1x8xf32> to vector<8x8xf32>
    %75 = arith.addf %73, %74 : vector<8x8xf32>
    %cst_56 = arith.constant dense<0xFF800000> : vector<8xf32>
    %76 = vector.multi_reduction <maximumf>, %75, %cst_56 [1] : vector<8x8xf32> to vector<8xf32>
    %77 = vector.shape_cast %76 : vector<8xf32> to vector<8x1xf32>
    %78 = vector.broadcast %77 : vector<8x1xf32> to vector<8x8xf32>
    %79 = arith.subf %75, %78 : vector<8x8xf32>
    %80 = math.exp %79 : vector<8x8xf32>
    %cst_57 = arith.constant dense<0.000000e+00> : vector<8xf32>
    %81 = vector.multi_reduction <add>, %80, %cst_57 [1] : vector<8x8xf32> to vector<8xf32>
    %82 = vector.shape_cast %81 : vector<8xf32> to vector<8x1xf32>
    %83 = tpu.reciprocal %82 {approx = true} : vector<8x1xf32> -> vector<8x1xf32>
    %84 = vector.broadcast %83 : vector<8x1xf32> to vector<8x8xf32>
    %85 = arith.mulf %80, %84 : vector<8x8xf32>
    %86 = arith.truncf %85 : vector<8x8xf32> to vector<8x8xbf16>
    %87 = arith.truncf %70 : vector<8x16xf32> to vector<8x16xbf16>
    %cst_58 = arith.constant dense<0.000000e+00> : vector<8x16xf32>
    %88 = tpu.matmul %86, %87, %cst_58 {dimension_numbers = #tpu.dot_dimension_numbers<[1], [0], [0], [1], [0, 0, 1, 1], [], []>} : vector<8x8xbf16>, vector<8x16xbf16>, vector<8x16xf32> -> vector<8x16xf32>
    %89 = arith.truncf %88 : vector<8x16xf32> to vector<8x16xbf16>
    %c1_59 = arith.constant 1 : index
    %c0_60 = arith.constant 0 : index
    %c0_61 = arith.constant 0 : index
    %90 = vector.load %arg10[%c1_59, %c0_60, %c0_61] : memref<2x16x32xbf16, #tpu.memory_space<vmem>>, vector<1x16x32xbf16>
    %91 = vector.shape_cast %90 : vector<1x16x32xbf16> to vector<16x32xbf16>
    %cst_62 = arith.constant dense<0.000000e+00> : vector<8x32xf32>
    %92 = tpu.matmul %89, %91, %cst_62 {dimension_numbers = #tpu.dot_dimension_numbers<[1], [0], [0], [1], [0, 0, 1, 1], [], []>} : vector<8x16xbf16>, vector<16x32xbf16>, vector<8x32xf32> -> vector<8x32xf32>
    %93 = arith.addf %49, %92 : vector<8x32xf32>
    %c0_63 = arith.constant 0 : index
    %c0_64 = arith.constant 0 : index
    %94 = vector.load %arg11[%c0_63, %c0_64] : memref<1x32xf32, #tpu.memory_space<vmem>>, vector<1x32xf32>
    %95 = vector.broadcast %94 : vector<1x32xf32> to vector<8x32xf32>
    %96 = arith.addf %93, %95 : vector<8x32xf32>
    %97 = arith.addf %96, %1 : vector<8x32xf32>
    %c0_65 = arith.constant 0 : index
    %c0_66 = arith.constant 0 : index
    %98 = vector.load %arg12[%c0_65, %c0_66] : memref<1x32xf32, #tpu.memory_space<vmem>>, vector<1x32xf32>
    %c0_67 = arith.constant 0 : index
    %c0_68 = arith.constant 0 : index
    %99 = vector.load %arg13[%c0_67, %c0_68] : memref<1x32xf32, #tpu.memory_space<vmem>>, vector<1x32xf32>
    %cst_69 = arith.constant dense<0.000000e+00> : vector<8xf32>
    %100 = vector.multi_reduction <add>, %97, %cst_69 [1] : vector<8x32xf32> to vector<8xf32>
    %101 = vector.shape_cast %100 : vector<8xf32> to vector<8x1xf32>
    %cst_70 = arith.constant 3.200000e+01 : f32
    %102 = vector.broadcast %cst_70 : f32 to vector<8x1xf32>
    %103 = arith.divf %101, %102 : vector<8x1xf32>
    %104 = vector.broadcast %103 : vector<8x1xf32> to vector<8x32xf32>
    %105 = arith.subf %97, %104 : vector<8x32xf32>
    %106 = vector.broadcast %103 : vector<8x1xf32> to vector<8x32xf32>
    %107 = arith.subf %97, %106 : vector<8x32xf32>
    %108 = arith.mulf %105, %107 : vector<8x32xf32>
    %cst_71 = arith.constant dense<0.000000e+00> : vector<8xf32>
    %109 = vector.multi_reduction <add>, %108, %cst_71 [1] : vector<8x32xf32> to vector<8xf32>
    %110 = vector.shape_cast %109 : vector<8xf32> to vector<8x1xf32>
    %cst_72 = arith.constant 3.200000e+01 : f32
    %111 = vector.broadcast %cst_72 : f32 to vector<8x1xf32>
    %112 = arith.divf %110, %111 : vector<8x1xf32>
    %113 = vector.broadcast %103 : vector<8x1xf32> to vector<8x32xf32>
    %114 = arith.subf %97, %113 : vector<8x32xf32>
    %cst_73 = arith.constant 9.99999974E-6 : f32
    %115 = vector.broadcast %cst_73 : f32 to vector<8x1xf32>
    %116 = arith.addf %112, %115 : vector<8x1xf32>
    %117 = math.rsqrt %116 : vector<8x1xf32>
    %118 = vector.broadcast %117 : vector<8x1xf32> to vector<8x32xf32>
    %119 = arith.mulf %114, %118 : vector<8x32xf32>
    %120 = vector.broadcast %98 : vector<1x32xf32> to vector<8x32xf32>
    %121 = arith.mulf %119, %120 : vector<8x32xf32>
    %122 = vector.broadcast %99 : vector<1x32xf32> to vector<8x32xf32>
    %123 = arith.addf %121, %122 : vector<8x32xf32>
    %124 = arith.truncf %123 : vector<8x32xf32> to vector<8x32xbf16>
    %c0_74 = arith.constant 0 : index
    %c0_75 = arith.constant 0 : index
    %125 = vector.load %arg14[%c0_74, %c0_75] : memref<32x64xbf16, #tpu.memory_space<vmem>>, vector<32x64xbf16>
    %cst_76 = arith.constant dense<0.000000e+00> : vector<8x64xf32>
    %126 = tpu.matmul %124, %125, %cst_76 {dimension_numbers = #tpu.dot_dimension_numbers<[1], [0], [0], [1], [0, 0, 1, 1], [], []>} : vector<8x32xbf16>, vector<32x64xbf16>, vector<8x64xf32> -> vector<8x64xf32>
    %c0_77 = arith.constant 0 : index
    %c0_78 = arith.constant 0 : index
    %127 = vector.load %arg15[%c0_77, %c0_78] : memref<1x64xf32, #tpu.memory_space<vmem>>, vector<1x64xf32>
    %128 = vector.broadcast %127 : vector<1x64xf32> to vector<8x64xf32>
    %129 = arith.addf %126, %128 : vector<8x64xf32>
    %cst_79 = arith.constant 5.000000e-01 : f32
    %130 = vector.broadcast %cst_79 : f32 to vector<8x64xf32>
    %131 = arith.mulf %130, %129 : vector<8x64xf32>
    %cst_80 = arith.constant 4.471500e-02 : f32
    %132 = vector.broadcast %cst_80 : f32 to vector<8x64xf32>
    %133 = arith.mulf %132, %129 : vector<8x64xf32>
    %134 = arith.mulf %133, %129 : vector<8x64xf32>
    %135 = arith.mulf %134, %129 : vector<8x64xf32>
    %136 = arith.addf %129, %135 : vector<8x64xf32>
    %cst_81 = arith.constant 0.797884583 : f32
    %137 = vector.broadcast %cst_81 : f32 to vector<8x64xf32>
    %138 = arith.mulf %137, %136 : vector<8x64xf32>
    %139 = math.tanh %138 : vector<8x64xf32>
    %cst_82 = arith.constant 1.000000e+00 : f32
    %140 = vector.broadcast %cst_82 : f32 to vector<8x64xf32>
    %141 = arith.addf %140, %139 : vector<8x64xf32>
    %142 = arith.mulf %131, %141 : vector<8x64xf32>
    %143 = arith.truncf %142 : vector<8x64xf32> to vector<8x64xbf16>
    %c0_83 = arith.constant 0 : index
    %c0_84 = arith.constant 0 : index
    %144 = vector.load %arg16[%c0_83, %c0_84] : memref<64x32xbf16, #tpu.memory_space<vmem>>, vector<64x32xbf16>
    %cst_85 = arith.constant dense<0.000000e+00> : vector<8x32xf32>
    %145 = tpu.matmul %143, %144, %cst_85 {dimension_numbers = #tpu.dot_dimension_numbers<[1], [0], [0], [1], [0, 0, 1, 1], [], []>} : vector<8x64xbf16>, vector<64x32xbf16>, vector<8x32xf32> -> vector<8x32xf32>
    %c0_86 = arith.constant 0 : index
    %c0_87 = arith.constant 0 : index
    %146 = vector.load %arg17[%c0_86, %c0_87] : memref<1x32xf32, #tpu.memory_space<vmem>>, vector<1x32xf32>
    %147 = vector.broadcast %146 : vector<1x32xf32> to vector<8x32xf32>
    %148 = arith.addf %145, %147 : vector<8x32xf32>
    %149 = arith.addf %148, %123 : vector<8x32xf32>
    %c0_88 = arith.constant 0 : index
    %c0_89 = arith.constant 0 : index
    %150 = vector.load %arg18[%c0_88, %c0_89] : memref<1x32xf32, #tpu.memory_space<vmem>>, vector<1x32xf32>
    %c0_90 = arith.constant 0 : index
    %c0_91 = arith.constant 0 : index
    %151 = vector.load %arg19[%c0_90, %c0_91] : memref<1x32xf32, #tpu.memory_space<vmem>>, vector<1x32xf32>
    %cst_92 = arith.constant dense<0.000000e+00> : vector<8xf32>
    %152 = vector.multi_reduction <add>, %149, %cst_92 [1] : vector<8x32xf32> to vector<8xf32>
    %153 = vector.shape_cast %152 : vector<8xf32> to vector<8x1xf32>
    %cst_93 = arith.constant 3.200000e+01 : f32
    %154 = vector.broadcast %cst_93 : f32 to vector<8x1xf32>
    %155 = arith.divf %153, %154 : vector<8x1xf32>
    %156 = vector.broadcast %155 : vector<8x1xf32> to vector<8x32xf32>
    %157 = arith.subf %149, %156 : vector<8x32xf32>
    %158 = vector.broadcast %155 : vector<8x1xf32> to vector<8x32xf32>
    %159 = arith.subf %149, %158 : vector<8x32xf32>
    %160 = arith.mulf %157, %159 : vector<8x32xf32>
    %cst_94 = arith.constant dense<0.000000e+00> : vector<8xf32>
    %161 = vector.multi_reduction <add>, %160, %cst_94 [1] : vector<8x32xf32> to vector<8xf32>
    %162 = vector.shape_cast %161 : vector<8xf32> to vector<8x1xf32>
    %cst_95 = arith.constant 3.200000e+01 : f32
    %163 = vector.broadcast %cst_95 : f32 to vector<8x1xf32>
    %164 = arith.divf %162, %163 : vector<8x1xf32>
    %165 = vector.broadcast %155 : vector<8x1xf32> to vector<8x32xf32>
    %166 = arith.subf %149, %165 : vector<8x32xf32>
    %cst_96 = arith.constant 9.99999974E-6 : f32
    %167 = vector.broadcast %cst_96 : f32 to vector<8x1xf32>
    %168 = arith.addf %164, %167 : vector<8x1xf32>
    %169 = math.rsqrt %168 : vector<8x1xf32>
    %170 = vector.broadcast %169 : vector<8x1xf32> to vector<8x32xf32>
    %171 = arith.mulf %166, %170 : vector<8x32xf32>
    %172 = vector.broadcast %150 : vector<1x32xf32> to vector<8x32xf32>
    %173 = arith.mulf %171, %172 : vector<8x32xf32>
    %174 = vector.broadcast %151 : vector<1x32xf32> to vector<8x32xf32>
    %175 = arith.addf %173, %174 : vector<8x32xf32>
    %c0_97 = arith.constant 0 : index
    %c0_98 = arith.constant 0 : index
    %c0_99 = arith.constant 0 : index
    %176 = vector.load %arg20[%c0_97, %c0_98, %c0_99] : memref<1x8x32xf32, #tpu.memory_space<vmem>>, vector<1x8x32xf32>
    %177 = vector.shape_cast %176 : vector<1x8x32xf32> to vector<8x32xf32>
    %178 = vector.shape_cast %175 : vector<8x32xf32> to vector<1x8x32xf32>
    tpu.vector_store %arg20[%c0_97, %c0_98, %c0_99], %178 {strides = array<i32>} : memref<1x8x32xf32, #tpu.memory_space<vmem>>, vector<1x8x32xf32>,
    return
  }
  func.func @transform_0(%arg0: i32, %arg1: i32) -> (i32, i32, i32) {
    %c0_i32 = arith.constant 0 : i32
    %c0_i32_0 = arith.constant 0 : i32
    return %arg0, %arg1, %c0_i32 : i32, i32, i32
  }
  func.func @transform_1(%arg0: i32, %arg1: i32) -> (i32, i32, i32, i32) {
    %c0_i32 = arith.constant 0 : i32
    %c0_i32_0 = arith.constant 0 : i32
    %c0_i32_1 = arith.constant 0 : i32
    %c0_i32_2 = arith.constant 0 : i32
    return %arg0, %c0_i32, %c0_i32_0, %c0_i32_1 : i32, i32, i32, i32
  }
  func.func @transform_2(%arg0: i32, %arg1: i32) -> (i32, i32, i32) {
    %c0_i32 = arith.constant 0 : i32
    %c0_i32_0 = arith.constant 0 : i32
    %c0_i32_1 = arith.constant 0 : i32
    %c0_i32_2 = arith.constant 0 : i32
    return %c0_i32, %c0_i32_0, %c0_i32_1 : i32, i32, i32
  }
  func.func @transform_3(%arg0: i32, %arg1: i32) -> (i32, i32, i32) {
    %c0_i32 = arith.constant 0 : i32
    %c0_i32_0 = arith.constant 0 : i32
    %c0_i32_1 = arith.constant 0 : i32
    %c0_i32_2 = arith.constant 0 : i32
    return %c0_i32, %c0_i32_0, %c0_i32_1 : i32, i32, i32
  }
  func.func @transform_4(%arg0: i32, %arg1: i32) -> (i32, i32, i32) {
    %c0_i32 = arith.constant 0 : i32
    %c0_i32_0 = arith.constant 0 : i32
    %c0_i32_1 = arith.constant 0 : i32
    %c0_i32_2 = arith.constant 0 : i32
    return %c0_i32, %c0_i32_0, %c0_i32_1 : i32, i32, i32
  }
  func.func @transform_5(%arg0: i32, %arg1: i32) -> (i32, i32, i32) {
    %c0_i32 = arith.constant 0 : i32
    %c0_i32_0 = arith.constant 0 : i32
    %c0_i32_1 = arith.constant 0 : i32
    %c0_i32_2 = arith.constant 0 : i32
    return %c0_i32, %c0_i32_0, %c0_i32_1 : i32, i32, i32
  }
  func.func @transform_6(%arg0: i32, %arg1: i32) -> (i32, i32, i32) {
    %c0_i32 = arith.constant 0 : i32
    %c0_i32_0 = arith.constant 0 : i32
    %c0_i32_1 = arith.constant 0 : i32
    %c0_i32_2 = arith.constant 0 : i32
    return %c0_i32, %c0_i32_0, %c0_i32_1 : i32, i32, i32
  }
  func.func @transform_7(%arg0: i32, %arg1: i32) -> (i32, i32, i32) {
    %c0_i32 = arith.constant 0 : i32
    %c0_i32_0 = arith.constant 0 : i32
    %c0_i32_1 = arith.constant 0 : i32
    %c0_i32_2 = arith.constant 0 : i32
    return %c0_i32, %c0_i32_0, %c0_i32_1 : i32, i32, i32
  }
  func.func @transform_8(%arg0: i32, %arg1: i32) -> (i32, i32, i32) {
    %c0_i32 = arith.constant 0 : i32
    %c0_i32_0 = arith.constant 0 : i32
    %c0_i32_1 = arith.constant 0 : i32
    %c0_i32_2 = arith.constant 0 : i32
    return %c0_i32, %c0_i32_0, %c0_i32_1 : i32, i32, i32
  }
  func.func @transform_9(%arg0: i32, %arg1: i32) -> (i32, i32) {
    %c0_i32 = arith.constant 0 : i32
    %c0_i32_0 = arith.constant 0 : i32
    %c0_i32_1 = arith.constant 0 : i32
    return %c0_i32, %c0_i32_0 : i32, i32
  }
  func.func @transform_10(%arg0: i32, %arg1: i32) -> (i32, i32) {
    %c0_i32 = arith.constant 0 : i32
    %c0_i32_0 = arith.constant 0 : i32
    %c0_i32_1 = arith.constant 0 : i32
    return %c0_i32, %c0_i32_0 : i32, i32
  }
  func.func @transform_11(%arg0: i32, %arg1: i32) -> (i32, i32) {
    %c0_i32 = arith.constant 0 : i32
    %c0_i32_0 = arith.constant 0 : i32
    %c0_i32_1 = arith.constant 0 : i32
    return %c0_i32, %c0_i32_0 : i32, i32
  }
  func.func @transform_12(%arg0: i32, %arg1: i32) -> (i32, i32) {
    %c0_i32 = arith.constant 0 : i32
    %c0_i32_0 = arith.constant 0 : i32
    %c0_i32_1 = arith.constant 0 : i32
    return %c0_i32, %c0_i32_0 : i32, i32
  }
  func.func @transform_13(%arg0: i32, %arg1: i32) -> (i32, i32) {
    %c0_i32 = arith.constant 0 : i32
    %c0_i32_0 = arith.constant 0 : i32
    %c0_i32_1 = arith.constant 0 : i32
    return %c0_i32, %c0_i32_0 : i32, i32
  }
  func.func @transform_14(%arg0: i32, %arg1: i32) -> (i32, i32) {
    %c0_i32 = arith.constant 0 : i32
    %c0_i32_0 = arith.constant 0 : i32
    %c0_i32_1 = arith.constant 0 : i32
    return %c0_i32, %c0_i32_0 : i32, i32
  }
  func.func @transform_15(%arg0: i32, %arg1: i32) -> (i32, i32) {
    %c0_i32 = arith.constant 0 : i32
    %c0_i32_0 = arith.constant 0 : i32
    %c0_i32_1 = arith.constant 0 : i32
    return %c0_i32, %c0_i32_0 : i32, i32
  }
  func.func @transform_16(%arg0: i32, %arg1: i32) -> (i32, i32) {
    %c0_i32 = arith.constant 0 : i32
    %c0_i32_0 = arith.constant 0 : i32
    %c0_i32_1 = arith.constant 0 : i32
    return %c0_i32, %c0_i32_0 : i32, i32
  }
  func.func @transform_17(%arg0: i32, %arg1: i32) -> (i32, i32) {
    %c0_i32 = arith.constant 0 : i32
    %c0_i32_0 = arith.constant 0 : i32
    %c0_i32_1 = arith.constant 0 : i32
    return %c0_i32, %c0_i32_0 : i32, i32
  }
  func.func @transform_18(%arg0: i32, %arg1: i32) -> (i32, i32, i32) {
    %c0_i32 = arith.constant 0 : i32
    %c0_i32_0 = arith.constant 0 : i32
    return %arg0, %arg1, %c0_i32 : i32, i32, i32
  }
}

module attributes {stable_mosaic.version = 11 : i64} {
  func.func @roberta_layer_kernel(%arg0: i32, %arg1: i32, %arg2: memref<1x8x32xf32, #tpu.memory_space<vmem>>, %arg3: memref<1x1x1x8xf32, #tpu.memory_space<vmem>>, %arg4: memref<2x32x16xbf16, #tpu.memory_space<vmem>>, %arg5: memref<2x1x16xf32, #tpu.memory_space<vmem>>, %arg6: memref<2x32x16xbf16, #tpu.memory_space<vmem>>, %arg7: memref<2x1x16xf32, #tpu.memory_space<vmem>>, %arg8: memref<2x32x16xbf16, #tpu.memory_space<vmem>>, %arg9: memref<2x1x16xf32, #tpu.memory_space<vmem>>, %arg10: memref<2x16x32xbf16, #tpu.memory_space<vmem>>, %arg11: memref<1x32xf32, #tpu.memory_space<vmem>>, %arg12: memref<1x32xf32, #tpu.memory_space<vmem>>, %arg13: memref<1x32xf32, #tpu.memory_space<vmem>>, %arg14: memref<32x64xbf16, #tpu.memory_space<vmem>>, %arg15: memref<1x64xf32, #tpu.memory_space<vmem>>, %arg16: memref<64x32xbf16, #tpu.memory_space<vmem>>, %arg17: memref<1x32xf32, #tpu.memory_space<vmem>>, %arg18: memref<1x32xf32, #tpu.memory_space<vmem>>, %arg19: memref<1x32xf32, #tpu.memory_space<vmem>>, %arg20: memref<1x8x32xf32, #tpu.memory_space<vmem>>) attributes {dimension_semantics = [#tpu.dimension_semantics<parallel>, #tpu.dimension_semantics<parallel>], iteration_bounds = array<i64: 2, 1>, scalar_prefetch = 0 : i64, scratch_operands = 0 : i64, tpu.core_type = #tpu.core_type<tc>, window_params = [{transform_indices = @transform_0, window_bounds = array<i64: 1, 8, 32>}, {transform_indices = @transform_1, window_bounds = array<i64: 1, 1, 1, 8>}, {pipeline_mode = #tpu.pipeline_mode<synchronous>, transform_indices = @transform_2, window_bounds = array<i64: 2, 32, 16>}, {pipeline_mode = #tpu.pipeline_mode<synchronous>, transform_indices = @transform_3, window_bounds = array<i64: 2, 1, 16>}, {pipeline_mode = #tpu.pipeline_mode<synchronous>, transform_indices = @transform_4, window_bounds = array<i64: 2, 32, 16>}, {pipeline_mode = #tpu.pipeline_mode<synchronous>, transform_indices = @transform_5, window_bounds = array<i64: 2, 1, 16>}, {pipeline_mode = #tpu.pipeline_mode<synchronous>, transform_indices = @transform_6, window_bounds = array<i64: 2, 32, 16>}, {pipeline_mode = #tpu.pipeline_mode<synchronous>, transform_indices = @transform_7, window_bounds = array<i64: 2, 1, 16>}, {pipeline_mode = #tpu.pipeline_mode<synchronous>, transform_indices = @transform_8, window_bounds = array<i64: 2, 16, 32>}, {pipeline_mode = #tpu.pipeline_mode<synchronous>, transform_indices = @transform_9, window_bounds = array<i64: 1, 32>}, {pipeline_mode = #tpu.pipeline_mode<synchronous>, transform_indices = @transform_10, window_bounds = array<i64: 1, 32>}, {pipeline_mode = #tpu.pipeline_mode<synchronous>, transform_indices = @transform_11, window_bounds = array<i64: 1, 32>}, {pipeline_mode = #tpu.pipeline_mode<synchronous>, transform_indices = @transform_12, window_bounds = array<i64: 32, 64>}, {pipeline_mode = #tpu.pipeline_mode<synchronous>, transform_indices = @transform_13, window_bounds = array<i64: 1, 64>}, {pipeline_mode = #tpu.pipeline_mode<synchronous>, transform_indices = @transform_14, window_bounds = array<i64: 64, 32>}, {pipeline_mode = #tpu.pipeline_mode<synchronous>, transform_indices = @transform_15, window_bounds = array<i64: 1, 32>}, {pipeline_mode = #tpu.pipeline_mode<synchronous>, transform_indices = @transform_16, window_bounds = array<i64: 1, 32>}, {pipeline_mode = #tpu.pipeline_mode<synchronous>, transform_indices = @transform_17, window_bounds = array<i64: 1, 32>}, {transform_indices = @transform_18, window_bounds = array<i64: 1, 8, 32>}]} {
    %c0 = arith.constant 0 : index
    %c0_0 = arith.constant 0 : index
    %c0_1 = arith.constant 0 : index
    %0 = vector.load %arg2[%c0, %c0_0, %c0_1] : memref<1x8x32xf32, #tpu.memory_space<vmem>>, vector<1x8x32xf32>
    %1 = vector.shape_cast %0 : vector<1x8x32xf32> to vector<8x32xf32>
    %2 = arith.truncf %1 : vector<8x32xf32> to vector<8x32xbf16>
    %c0_2 = arith.constant 0 : index
    %c0_3 = arith.constant 0 : index
    %c0_4 = arith.constant 0 : index
    %c0_5 = arith.constant 0 : index
    %3 = vector.load %arg3[%c0_2, %c0_3, %c0_4, %c0_5] : memref<1x1x1x8xf32, #tpu.memory_space<vmem>>, vector<1x1x1x8xf32>
    %4 = vector.shape_cast %3 : vector<1x1x1x8xf32> to vector<1x8xf32>
    %cst = arith.constant 0.000000e+00 : f32
    %5 = vector.broadcast %cst : f32 to vector<8x32xf32>
    %c0_6 = arith.constant 0 : index
    %c0_7 = arith.constant 0 : index
    %c0_8 = arith.constant 0 : index
    %6 = vector.load %arg4[%c0_6, %c0_7, %c0_8] : memref<2x32x16xbf16, #tpu.memory_space<vmem>>, vector<1x32x16xbf16>
    %7 = vector.shape_cast %6 : vector<1x32x16xbf16> to vector<32x16xbf16>
    %cst_9 = arith.constant dense<0.000000e+00> : vector<8x16xf32>
    %8 = tpu.matmul %2, %7, %cst_9 {dimension_numbers = #tpu.dot_dimension_numbers<[1], [0], [0], [1], [0, 0, 1, 1], [], []>} : vector<8x32xbf16>, vector<32x16xbf16>, vector<8x16xf32> -> vector<8x16xf32>
    %c0_10 = arith.constant 0 : index
    %c0_11 = arith.constant 0 : index
    %c0_12 = arith.constant 0 : index
    %9 = vector.load %arg5[%c0_10, %c0_11, %c0_12] : memref<2x1x16xf32, #tpu.memory_space<vmem>>, vector<1x1x16xf32>
    %10 = vector.shape_cast %9 : vector<1x1x16xf32> to vector<1x16xf32>
    %11 = vector.broadcast %10 : vector<1x16xf32> to vector<8x16xf32>
    %12 = arith.addf %8, %11 : vector<8x16xf32>
    %c0_13 = arith.constant 0 : index
    %c0_14 = arith.constant 0 : index
    %c0_15 = arith.constant 0 : index
    %13 = vector.load %arg6[%c0_13, %c0_14, %c0_15] : memref<2x32x16xbf16, #tpu.memory_space<vmem>>, vector<1x32x16xbf16>
    %14 = vector.shape_cast %13 : vector<1x32x16xbf16> to vector<32x16xbf16>
    %cst_16 = arith.constant dense<0.000000e+00> : vector<8x16xf32>
    %15 = tpu.matmul %2, %14, %cst_16 {dimension_numbers = #tpu.dot_dimension_numbers<[1], [0], [0], [1], [0, 0, 1, 1], [], []>} : vector<8x32xbf16>, vector<32x16xbf16>, vector<8x16xf32> -> vector<8x16xf32>
    %c0_17 = arith.constant 0 : index
    %c0_18 = arith.constant 0 : index
    %c0_19 = arith.constant 0 : index
    %16 = vector.load %arg7[%c0_17, %c0_18, %c0_19] : memref<2x1x16xf32, #tpu.memory_space<vmem>>, vector<1x1x16xf32>
    %17 = vector.shape_cast %16 : vector<1x1x16xf32> to vector<1x16xf32>
    %18 = vector.broadcast %17 : vector<1x16xf32> to vector<8x16xf32>
    %19 = arith.addf %15, %18 : vector<8x16xf32>
    %c0_20 = arith.constant 0 : index
    %c0_21 = arith.constant 0 : index
    %c0_22 = arith.constant 0 : index
    %20 = vector.load %arg8[%c0_20, %c0_21, %c0_22] : memref<2x32x16xbf16, #tpu.memory_space<vmem>>, vector<1x32x16xbf16>
    %21 = vector.shape_cast %20 : vector<1x32x16xbf16> to vector<32x16xbf16>
    %cst_23 = arith.constant dense<0.000000e+00> : vector<8x16xf32>
    %22 = tpu.matmul %2, %21, %cst_23 {dimension_numbers = #tpu.dot_dimension_numbers<[1], [0], [0], [1], [0, 0, 1, 1], [], []>} : vector<8x32xbf16>, vector<32x16xbf16>, vector<8x16xf32> -> vector<8x16xf32>
    %c0_24 = arith.constant 0 : index
    %c0_25 = arith.constant 0 : index
    %c0_26 = arith.constant 0 : index
    %23 = vector.load %arg9[%c0_24, %c0_25, %c0_26] : memref<2x1x16xf32, #tpu.memory_space<vmem>>, vector<1x1x16xf32>
    %24 = vector.shape_cast %23 : vector<1x1x16xf32> to vector<1x16xf32>
    %25 = vector.broadcast %24 : vector<1x16xf32> to vector<8x16xf32>
    %26 = arith.addf %22, %25 : vector<8x16xf32>
    %27 = arith.truncf %12 : vector<8x16xf32> to vector<8x16xbf16>
    %28 = arith.truncf %19 : vector<8x16xf32> to vector<8x16xbf16>
    %cst_27 = arith.constant dense<0.000000e+00> : vector<8x8xf32>
    %29 = tpu.matmul %27, %28, %cst_27 {dimension_numbers = #tpu.dot_dimension_numbers<[1], [1], [0], [0], [0, 0, 1, 0], [], []>} : vector<8x16xbf16>, vector<8x16xbf16>, vector<8x8xf32> -> vector<8x8xf32>
    %30 = vector.broadcast %4 : vector<1x8xf32> to vector<8x8xf32>
    %31 = arith.addf %29, %30 : vector<8x8xf32>
    %cst_28 = arith.constant dense<0xFF800000> : vector<8xf32>
    %32 = vector.multi_reduction <maximumf>, %31, %cst_28 [1] : vector<8x8xf32> to vector<8xf32>
    %33 = vector.shape_cast %32 : vector<8xf32> to vector<8x1xf32>
    %34 = vector.broadcast %33 : vector<8x1xf32> to vector<8x8xf32>
    %35 = arith.subf %31, %34 : vector<8x8xf32>
    %36 = math.exp %35 : vector<8x8xf32>
    %cst_29 = arith.constant dense<0.000000e+00> : vector<8xf32>
    %37 = vector.multi_reduction <add>, %36, %cst_29 [1] : vector<8x8xf32> to vector<8xf32>
    %38 = vector.shape_cast %37 : vector<8xf32> to vector<8x1xf32>
    %39 = tpu.reciprocal %38 {approx = true} : vector<8x1xf32> -> vector<8x1xf32>
    %40 = vector.broadcast %39 : vector<8x1xf32> to vector<8x8xf32>
    %41 = arith.mulf %36, %40 : vector<8x8xf32>
    %42 = arith.truncf %41 : vector<8x8xf32> to vector<8x8xbf16>
    %43 = arith.truncf %26 : vector<8x16xf32> to vector<8x16xbf16>
    %cst_30 = arith.constant dense<0.000000e+00> : vector<8x16xf32>
    %44 = tpu.matmul %42, %43, %cst_30 {dimension_numbers = #tpu.dot_dimension_numbers<[1], [0], [0], [1], [0, 0, 1, 1], [], []>} : vector<8x8xbf16>, vector<8x16xbf16>, vector<8x16xf32> -> vector<8x16xf32>
    %45 = arith.truncf %44 : vector<8x16xf32> to vector<8x16xbf16>
    %c0_31 = arith.constant 0 : index
    %c0_32 = arith.constant 0 : index
    %c0_33 = arith.constant 0 : index
    %46 = vector.load %arg10[%c0_31, %c0_32, %c0_33] : memref<2x16x32xbf16, #tpu.memory_space<vmem>>, vector<1x16x32xbf16>
    %47 = vector.shape_cast %46 : vector<1x16x32xbf16> to vector<16x32xbf16>
    %cst_34 = arith.constant dense<0.000000e+00> : vector<8x32xf32>
    %48 = tpu.matmul %45, %47, %cst_34 {dimension_numbers = #tpu.dot_dimension_numbers<[1], [0], [0], [1], [0, 0, 1, 1], [], []>} : vector<8x16xbf16>, vector<16x32xbf16>, vector<8x32xf32> -> vector<8x32xf32>
    %49 = arith.addf %5, %48 : vector<8x32xf32>
    %c1 = arith.constant 1 : index
    %c0_35 = arith.constant 0 : index
    %c0_36 = arith.constant 0 : index
    %50 = vector.load %arg4[%c1, %c0_35, %c0_36] : memref<2x32x16xbf16, #tpu.memory_space<vmem>>, vector<1x32x16xbf16>
    %51 = vector.shape_cast %50 : vector<1x32x16xbf16> to vector<32x16xbf16>
    %cst_37 = arith.constant dense<0.000000e+00> : vector<8x16xf32>
    %52 = tpu.matmul %2, %51, %cst_37 {dimension_numbers = #tpu.dot_dimension_numbers<[1], [0], [0], [1], [0, 0, 1, 1], [], []>} : vector<8x32xbf16>, vector<32x16xbf16>, vector<8x16xf32> -> vector<8x16xf32>
    %c1_38 = arith.constant 1 : index
    %c0_39 = arith.constant 0 : index
    %c0_40 = arith.constant 0 : index
    %53 = vector.load %arg5[%c1_38, %c0_39, %c0_40] : memref<2x1x16xf32, #tpu.memory_space<vmem>>, vector<1x1x16xf32>
    %54 = vector.shape_cast %53 : vector<1x1x16xf32> to vector<1x16xf32>
    %55 = vector.broadcast %54 : vector<1x16xf32> to vector<8x16xf32>
    %56 = arith.addf %52, %55 : vector<8x16xf32>
    %c1_41 = arith.constant 1 : index
    %c0_42 = arith.constant 0 : index
    %c0_43 = arith.constant 0 : index
    %57 = vector.load %arg6[%c1_41, %c0_42, %c0_43] : memref<2x32x16xbf16, #tpu.memory_space<vmem>>, vector<1x32x16xbf16>
    %58 = vector.shape_cast %57 : vector<1x32x16xbf16> to vector<32x16xbf16>
    %cst_44 = arith.constant dense<0.000000e+00> : vector<8x16xf32>
    %59 = tpu.matmul %2, %58, %cst_44 {dimension_numbers = #tpu.dot_dimension_numbers<[1], [0], [0], [1], [0, 0, 1, 1], [], []>} : vector<8x32xbf16>, vector<32x16xbf16>, vector<8x16xf32> -> vector<8x16xf32>
    %c1_45 = arith.constant 1 : index
    %c0_46 = arith.constant 0 : index
    %c0_47 = arith.constant 0 : index
    %60 = vector.load %arg7[%c1_45, %c0_46, %c0_47] : memref<2x1x16xf32, #tpu.memory_space<vmem>>, vector<1x1x16xf32>
    %61 = vector.shape_cast %60 : vector<1x1x16xf32> to vector<1x16xf32>
    %62 = vector.broadcast %61 : vector<1x16xf32> to vector<8x16xf32>
    %63 = arith.addf %59, %62 : vector<8x16xf32>
    %c1_48 = arith.constant 1 : index
    %c0_49 = arith.constant 0 : index
    %c0_50 = arith.constant 0 : index
    %64 = vector.load %arg8[%c1_48, %c0_49, %c0_50] : memref<2x32x16xbf16, #tpu.memory_space<vmem>>, vector<1x32x16xbf16>
    %65 = vector.shape_cast %64 : vector<1x32x16xbf16> to vector<32x16xbf16>
    %cst_51 = arith.constant dense<0.000000e+00> : vector<8x16xf32>
    %66 = tpu.matmul %2, %65, %cst_51 {dimension_numbers = #tpu.dot_dimension_numbers<[1], [0], [0], [1], [0, 0, 1, 1], [], []>} : vector<8x32xbf16>, vector<32x16xbf16>, vector<8x16xf32> -> vector<8x16xf32>
    %c1_52 = arith.constant 1 : index
    %c0_53 = arith.constant 0 : index
    %c0_54 = arith.constant 0 : index
    %67 = vector.load %arg9[%c1_52, %c0_53, %c0_54] : memref<2x1x16xf32, #tpu.memory_space<vmem>>, vector<1x1x16xf32>
    %68 = vector.shape_cast %67 : vector<1x1x16xf32> to vector<1x16xf32>
    %69 = vector.broadcast %68 : vector<1x16xf32> to vector<8x16xf32>
    %70 = arith.addf %66, %69 : vector<8x16xf32>
    %71 = arith.truncf %56 : vector<8x16xf32> to vector<8x16xbf16>
    %72 = arith.truncf %63 : vector<8x16xf32> to vector<8x16xbf16>
    %cst_55 = arith.constant dense<0.000000e+00> : vector<8x8xf32>
    %73 = tpu.matmul %71, %72, %cst_55 {dimension_numbers = #tpu.dot_dimension_numbers<[1], [1], [0], [0], [0, 0, 1, 0], [], []>} : vector<8x16xbf16>, vector<8x16xbf16>, vector<8x8xf32> -> vector<8x8xf32>
    %74 = vector.broadcast %4 : vector<1x8xf32> to vector<8x8xf32>
    %75 = arith.addf %73, %74 : vector<8x8xf32>
    %cst_56 = arith.constant dense<0xFF800000> : vector<8xf32>
    %76 = vector.multi_reduction <maximumf>, %75, %cst_56 [1] : vector<8x8xf32> to vector<8xf32>
    %77 = vector.shape_cast %76 : vector<8xf32> to vector<8x1xf32>
    %78 = vector.broadcast %77 : vector<8x1xf32> to vector<8x8xf32>
    %79 = arith.subf %75, %78 : vector<8x8xf32>
    %80 = math.exp %79 : vector<8x8xf32>
    %cst_57 = arith.constant dense<0.000000e+00> : vector<8xf32>
    %81 = vector.multi_reduction <add>, %80, %cst_57 [1] : vector<8x8xf32> to vector<8xf32>
    %82 = vector.shape_cast %81 : vector<8xf32> to vector<8x1xf32>
    %83 = tpu.reciprocal %82 {approx = true} : vector<8x1xf32> -> vector<8x1xf32>
    %84 = vector.broadcast %83 : vector<8x1xf32> to vector<8x8xf32>
    %85 = arith.mulf %80, %84 : vector<8x8xf32>
    %86 = arith.truncf %85 : vector<8x8xf32> to vector<8x8xbf16>
    %87 = arith.truncf %70 : vector<8x16xf32> to vector<8x16xbf16>
    %cst_58 = arith.constant dense<0.000000e+00> : vector<8x16xf32>
    %88 = tpu.matmul %86, %87, %cst_58 {dimension_numbers = #tpu.dot_dimension_numbers<[1], [0], [0], [1], [0, 0, 1, 1], [], []>} : vector<8x8xbf16>, vector<8x16xbf16>, vector<8x16xf32> -> vector<8x16xf32>
    %89 = arith.truncf %88 : vector<8x16xf32> to vector<8x16xbf16>
    %c1_59 = arith.constant 1 : index
    %c0_60 = arith.constant 0 : index
    %c0_61 = arith.constant 0 : index
    %90 = vector.load %arg10[%c1_59, %c0_60, %c0_61] : memref<2x16x32xbf16, #tpu.memory_space<vmem>>, vector<1x16x32xbf16>
    %91 = vector.shape_cast %90 : vector<1x16x32xbf16> to vector<16x32xbf16>
    %cst_62 = arith.constant dense<0.000000e+00> : vector<8x32xf32>
    %92 = tpu.matmul %89, %91, %cst_62 {dimension_numbers = #tpu.dot_dimension_numbers<[1], [0], [0], [1], [0, 0, 1, 1], [], []>} : vector<8x16xbf16>, vector<16x32xbf16>, vector<8x32xf32> -> vector<8x32xf32>
    %93 = arith.addf %49, %92 : vector<8x32xf32>
    %c0_63 = arith.constant 0 : index
    %c0_64 = arith.constant 0 : index
    %94 = vector.load %arg11[%c0_63, %c0_64] : memref<1x32xf32, #tpu.memory_space<vmem>>, vector<1x32xf32>
    %95 = vector.broadcast %94 : vector<1x32xf32> to vector<8x32xf32>
    %96 = arith.addf %93, %95 : vector<8x32xf32>
    %97 = arith.addf %96, %1 : vector<8x32xf32>
    %c0_65 = arith.constant 0 : index
    %c0_66 = arith.constant 0 : index
    %98 = vector.load %arg12[%c0_65, %c0_66] : memref<1x32xf32, #tpu.memory_space<vmem>>, vector<1x32xf32>
    %c0_67 = arith.constant 0 : index
    %c0_68 = arith.constant 0 : index
    %99 = vector.load %arg13[%c0_67, %c0_68] : memref<1x32xf32, #tpu.memory_space<vmem>>, vector<1x32xf32>
    %cst_69 = arith.constant dense<0.000000e+00> : vector<8xf32>
    %100 = vector.multi_reduction <add>, %97, %cst_69 [1] : vector<8x32xf32> to vector<8xf32>
    %101 = vector.shape_cast %100 : vector<8xf32> to vector<8x1xf32>
    %cst_70 = arith.constant 3.200000e+01 : f32
    %102 = vector.broadcast %cst_70 : f32 to vector<8x1xf32>
    %103 = arith.divf %101, %102 : vector<8x1xf32>
    %104 = vector.broadcast %103 : vector<8x1xf32> to vector<8x32xf32>
    %105 = arith.subf %97, %104 : vector<8x32xf32>
    %106 = vector.broadcast %103 : vector<8x1xf32> to vector<8x32xf32>
    %107 = arith.subf %97, %106 : vector<8x32xf32>
    %108 = arith.mulf %105, %107 : vector<8x32xf32>
    %cst_71 = arith.constant dense<0.000000e+00> : vector<8xf32>
    %109 = vector.multi_reduction <add>, %108, %cst_71 [1] : vector<8x32xf32> to vector<8xf32>
    %110 = vector.shape_cast %109 : vector<8xf32> to vector<8x1xf32>
    %cst_72 = arith.constant 3.200000e+01 : f32
    %111 = vector.broadcast %cst_72 : f32 to vector<8x1xf32>
    %112 = arith.divf %110, %111 : vector<8x1xf32>
    %113 = vector.broadcast %103 : vector<8x1xf32> to vector<8x32xf32>
    %114 = arith.subf %97, %113 : vector<8x32xf32>
    %cst_73 = arith.constant 9.99999974E-6 : f32
    %115 = vector.broadcast %cst_73 : f32 to vector<8x1xf32>
    %116 = arith.addf %112, %115 : vector<8x1xf32>
    %117 = math.rsqrt %116 : vector<8x1xf32>
    %118 = vector.broadcast %117 : vector<8x1xf32> to vector<8x32xf32>
    %119 = arith.mulf %114, %118 : vector<8x32xf32>
    %120 = vector.broadcast %98 : vector<1x32xf32> to vector<8x32xf32>
    %121 = arith.mulf %119, %120 : vector<8x32xf32>
    %122 = vector.broadcast %99 : vector<1x32xf32> to vector<8x32xf32>
    %123 = arith.addf %121, %122 : vector<8x32xf32>
    %124 = arith.truncf %123 : vector<8x32xf32> to vector<8x32xbf16>
    %c0_74 = arith.constant 0 : index
    %c0_75 = arith.constant 0 : index
    %125 = vector.load %arg14[%c0_74, %c0_75] : memref<32x64xbf16, #tpu.memory_space<vmem>>, vector<32x64xbf16>
    %cst_76 = arith.constant dense<0.000000e+00> : vector<8x64xf32>
    %126 = tpu.matmul %124, %125, %cst_76 {dimension_numbers = #tpu.dot_dimension_numbers<[1], [0], [0], [1], [0, 0, 1, 1], [], []>} : vector<8x32xbf16>, vector<32x64xbf16>, vector<8x64xf32> -> vector<8x64xf32>
    %c0_77 = arith.constant 0 : index
    %c0_78 = arith.constant 0 : index
    %127 = vector.load %arg15[%c0_77, %c0_78] : memref<1x64xf32, #tpu.memory_space<vmem>>, vector<1x64xf32>
    %128 = vector.broadcast %127 : vector<1x64xf32> to vector<8x64xf32>
    %129 = arith.addf %126, %128 : vector<8x64xf32>
    %cst_79 = arith.constant 5.000000e-01 : f32
    %130 = vector.broadcast %cst_79 : f32 to vector<8x64xf32>
    %131 = arith.mulf %130, %129 : vector<8x64xf32>
    %cst_80 = arith.constant 4.471500e-02 : f32
    %132 = vector.broadcast %cst_80 : f32 to vector<8x64xf32>
    %133 = arith.mulf %132, %129 : vector<8x64xf32>
    %134 = arith.mulf %133, %129 : vector<8x64xf32>
    %135 = arith.mulf %134, %129 : vector<8x64xf32>
    %136 = arith.addf %129, %135 : vector<8x64xf32>
    %cst_81 = arith.constant 0.797884583 : f32
    %137 = vector.broadcast %cst_81 : f32 to vector<8x64xf32>
    %138 = arith.mulf %137, %136 : vector<8x64xf32>
    %139 = math.tanh %138 : vector<8x64xf32>
    %cst_82 = arith.constant 1.000000e+00 : f32
    %140 = vector.broadcast %cst_82 : f32 to vector<8x64xf32>
    %141 = arith.addf %140, %139 : vector<8x64xf32>
    %142 = arith.mulf %131, %141 : vector<8x64xf32>
    %143 = arith.truncf %142 : vector<8x64xf32> to vector<8x64xbf16>
    %c0_83 = arith.constant 0 : index
    %c0_84 = arith.constant 0 : index
    %144 = vector.load %arg16[%c0_83, %c0_84] : memref<64x32xbf16, #tpu.memory_space<vmem>>, vector<64x32xbf16>
    %cst_85 = arith.constant dense<0.000000e+00> : vector<8x32xf32>
    %145 = tpu.matmul %143, %144, %cst_85 {dimension_numbers = #tpu.dot_dimension_numbers<[1], [0], [0], [1], [0, 0, 1, 1], [], []>} : vector<8x64xbf16>, vector<64x32xbf16>, vector<8x32xf32> -> vector<8x32xf32>
    %c0_86 = arith.constant 0 : index
    %c0_87 = arith.constant 0 : index
    %146 = vector.load %arg17[%c0_86, %c0_87] : memref<1x32xf32, #tpu.memory_space<vmem>>, vector<1x32xf32>
    %147 = vector.broadcast %146 : vector<1x32xf32> to vector<8x32xf32>
    %148 = arith.addf %145, %147 : vector<8x32xf32>
    %149 = arith.addf %148, %123 : vector<8x32xf32>
    %c0_88 = arith.constant 0 : index
    %c0_89 = arith.constant 0 : index
    %150 = vector.load %arg18[%c0_88, %c0_89] : memref<1x32xf32, #tpu.memory_space<vmem>>, vector<1x32xf32>
    %c0_90 = arith.constant 0 : index
    %c0_91 = arith.constant 0 : index
    %151 = vector.load %arg19[%c0_90, %c0_91] : memref<1x32xf32, #tpu.memory_space<vmem>>, vector<1x32xf32>
    %cst_92 = arith.constant dense<0.000000e+00> : vector<8xf32>
    %152 = vector.multi_reduction <add>, %149, %cst_92 [1] : vector<8x32xf32> to vector<8xf32>
    %153 = vector.shape_cast %152 : vector<8xf32> to vector<8x1xf32>
    %cst_93 = arith.constant 3.200000e+01 : f32
    %154 = vector.broadcast %cst_93 : f32 to vector<8x1xf32>
    %155 = arith.divf %153, %154 : vector<8x1xf32>
    %156 = vector.broadcast %155 : vector<8x1xf32> to vector<8x32xf32>
    %157 = arith.subf %149, %156 : vector<8x32xf32>
    %158 = vector.broadcast %155 : vector<8x1xf32> to vector<8x32xf32>
    %159 = arith.subf %149, %158 : vector<8x32xf32>
    %160 = arith.mulf %157, %159 : vector<8x32xf32>
    %cst_94 = arith.constant dense<0.000000e+00> : vector<8xf32>
    %161 = vector.multi_reduction <add>, %160, %cst_94 [1] : vector<8x32xf32> to vector<8xf32>
    %162 = vector.shape_cast %161 : vector<8xf32> to vector<8x1xf32>
    %cst_95 = arith.constant 3.200000e+01 : f32
    %163 = vector.broadcast %cst_95 : f32 to vector<8x1xf32>
    %164 = arith.divf %162, %163 : vector<8x1xf32>
    %165 = vector.broadcast %155 : vector<8x1xf32> to vector<8x32xf32>
    %166 = arith.subf %149, %165 : vector<8x32xf32>
    %cst_96 = arith.constant 9.99999974E-6 : f32
    %167 = vector.broadcast %cst_96 : f32 to vector<8x1xf32>
    %168 = arith.addf %164, %167 : vector<8x1xf32>
    %169 = math.rsqrt %168 : vector<8x1xf32>
    %170 = vector.broadcast %169 : vector<8x1xf32> to vector<8x32xf32>
    %171 = arith.mulf %166, %170 : vector<8x32xf32>
    %172 = vector.broadcast %150 : vector<1x32xf32> to vector<8x32xf32>
    %173 = arith.mulf %171, %172 : vector<8x32xf32>
    %174 = vector.broadcast %151 : vector<1x32xf32> to vector<8x32xf32>
    %175 = arith.addf %173, %174 : vector<8x32xf32>
    %c0_97 = arith.constant 0 : index
    %c0_98 = arith.constant 0 : index
    %c0_99 = arith.constant 0 : index
    %176 = vector.load %arg20[%c0_97, %c0_98, %c0_99] : memref<1x8x32xf32, #tpu.memory_space<vmem>>, vector<1x8x32xf32>
    %177 = vector.shape_cast %176 : vector<1x8x32xf32> to vector<8x32xf32>
    %178 = vector.shape_cast %175 : vector<8x32xf32> to vector<1x8x32xf32>
    tpu.vector_store %arg20[%c0_97, %c0_98, %c0_99], %178 {strides = array<i32>} : memref<1x8x32xf32, #tpu.memory_space<vmem>>, vector<1x8x32xf32>,
    return
  }
  func.func @transform_0(%arg0: i32, %arg1: i32) -> (i32, i32, i32) {
    %c0_i32 = arith.constant 0 : i32
    %c0_i32_0 = arith.constant 0 : i32
    return %arg0, %arg1, %c0_i32 : i32, i32, i32
  }
  func.func @transform_1(%arg0: i32, %arg1: i32) -> (i32, i32, i32, i32) {
    %c0_i32 = arith.constant 0 : i32
    %c0_i32_0 = arith.constant 0 : i32
    %c0_i32_1 = arith.constant 0 : i32
    %c0_i32_2 = arith.constant 0 : i32
    return %arg0, %c0_i32, %c0_i32_0, %c0_i32_1 : i32, i32, i32, i32
  }
  func.func @transform_2(%arg0: i32, %arg1: i32) -> (i32, i32, i32) {
    %c0_i32 = arith.constant 0 : i32
    %c0_i32_0 = arith.constant 0 : i32
    %c0_i32_1 = arith.constant 0 : i32
    %c0_i32_2 = arith.constant 0 : i32
    return %c0_i32, %c0_i32_0, %c0_i32_1 : i32, i32, i32
  }
  func.func @transform_3(%arg0: i32, %arg1: i32) -> (i32, i32, i32) {
    %c0_i32 = arith.constant 0 : i32
    %c0_i32_0 = arith.constant 0 : i32
    %c0_i32_1 = arith.constant 0 : i32
    %c0_i32_2 = arith.constant 0 : i32
    return %c0_i32, %c0_i32_0, %c0_i32_1 : i32, i32, i32
  }
  func.func @transform_4(%arg0: i32, %arg1: i32) -> (i32, i32, i32) {
    %c0_i32 = arith.constant 0 : i32
    %c0_i32_0 = arith.constant 0 : i32
    %c0_i32_1 = arith.constant 0 : i32
    %c0_i32_2 = arith.constant 0 : i32
    return %c0_i32, %c0_i32_0, %c0_i32_1 : i32, i32, i32
  }
  func.func @transform_5(%arg0: i32, %arg1: i32) -> (i32, i32, i32) {
    %c0_i32 = arith.constant 0 : i32
    %c0_i32_0 = arith.constant 0 : i32
    %c0_i32_1 = arith.constant 0 : i32
    %c0_i32_2 = arith.constant 0 : i32
    return %c0_i32, %c0_i32_0, %c0_i32_1 : i32, i32, i32
  }
  func.func @transform_6(%arg0: i32, %arg1: i32) -> (i32, i32, i32) {
    %c0_i32 = arith.constant 0 : i32
    %c0_i32_0 = arith.constant 0 : i32
    %c0_i32_1 = arith.constant 0 : i32
    %c0_i32_2 = arith.constant 0 : i32
    return %c0_i32, %c0_i32_0, %c0_i32_1 : i32, i32, i32
  }
  func.func @transform_7(%arg0: i32, %arg1: i32) -> (i32, i32, i32) {
    %c0_i32 = arith.constant 0 : i32
    %c0_i32_0 = arith.constant 0 : i32
    %c0_i32_1 = arith.constant 0 : i32
    %c0_i32_2 = arith.constant 0 : i32
    return %c0_i32, %c0_i32_0, %c0_i32_1 : i32, i32, i32
  }
  func.func @transform_8(%arg0: i32, %arg1: i32) -> (i32, i32, i32) {
    %c0_i32 = arith.constant 0 : i32
    %c0_i32_0 = arith.constant 0 : i32
    %c0_i32_1 = arith.constant 0 : i32
    %c0_i32_2 = arith.constant 0 : i32
    return %c0_i32, %c0_i32_0, %c0_i32_1 : i32, i32, i32
  }
  func.func @transform_9(%arg0: i32, %arg1: i32) -> (i32, i32) {
    %c0_i32 = arith.constant 0 : i32
    %c0_i32_0 = arith.constant 0 : i32
    %c0_i32_1 = arith.constant 0 : i32
    return %c0_i32, %c0_i32_0 : i32, i32
  }
  func.func @transform_10(%arg0: i32, %arg1: i32) -> (i32, i32) {
    %c0_i32 = arith.constant 0 : i32
    %c0_i32_0 = arith.constant 0 : i32
    %c0_i32_1 = arith.constant 0 : i32
    return %c0_i32, %c0_i32_0 : i32, i32
  }
  func.func @transform_11(%arg0: i32, %arg1: i32) -> (i32, i32) {
    %c0_i32 = arith.constant 0 : i32
    %c0_i32_0 = arith.constant 0 : i32
    %c0_i32_1 = arith.constant 0 : i32
    return %c0_i32, %c0_i32_0 : i32, i32
  }
  func.func @transform_12(%arg0: i32, %arg1: i32) -> (i32, i32) {
    %c0_i32 = arith.constant 0 : i32
    %c0_i32_0 = arith.constant 0 : i32
    %c0_i32_1 = arith.constant 0 : i32
    return %c0_i32, %c0_i32_0 : i32, i32
  }
  func.func @transform_13(%arg0: i32, %arg1: i32) -> (i32, i32) {
    %c0_i32 = arith.constant 0 : i32
    %c0_i32_0 = arith.constant 0 : i32
    %c0_i32_1 = arith.constant 0 : i32
    return %c0_i32, %c0_i32_0 : i32, i32
  }
  func.func @transform_14(%arg0: i32, %arg1: i32) -> (i32, i32) {
    %c0_i32 = arith.constant 0 : i32
    %c0_i32_0 = arith.constant 0 : i32
    %c0_i32_1 = arith.constant 0 : i32
    return %c0_i32, %c0_i32_0 : i32, i32
  }
  func.func @transform_15(%arg0: i32, %arg1: i32) -> (i32, i32) {
    %c0_i32 = arith.constant 0 : i32
    %c0_i32_0 = arith.constant 0 : i32
    %c0_i32_1 = arith.constant 0 : i32
    return %c0_i32, %c0_i32_0 : i32, i32
  }
  func.func @transform_16(%arg0: i32, %arg1: i32) -> (i32, i32) {
    %c0_i32 = arith.constant 0 : i32
    %c0_i32_0 = arith.constant 0 : i32
    %c0_i32_1 = arith.constant 0 : i32
    return %c0_i32, %c0_i32_0 : i32, i32
  }
  func.func @transform_17(%arg0: i32, %arg1: i32) -> (i32, i32) {
    %c0_i32 = arith.constant 0 : i32
    %c0_i32_0 = arith.constant 0 : i32
    %c0_i32_1 = arith.constant 0 : i32
    return %c0_i32, %c0_i32_0 : i32, i32
  }
  func.func @transform_18(%arg0: i32, %arg1: i32) -> (i32, i32, i32) {
    %c0_i32 = arith.constant 0 : i32
    %c0_i32_0 = arith.constant 0 : i32
    return %arg0, %arg1, %c0_i32 : i32, i32, i32
  }
}

</mosaic_0001>

<llo_original>
// kernel: tpu_custom_call.1
$region0: #{tpu_custom_call.1}
  #allocation0 [shape = 'u32[]', space=smem, size = 0x4, offset = 0x4, fixed_abs, tag = 'smem constant byte address 0x4 - core index']
  #allocation1 [shape = 'u32[144,128]{1,0:T(1,128)}', space=vmem, size = 0x12000, scoped, tag = 'internal scratch']
  %s0 = inlined_call_operand.vmem [shape: f32[2,8,32], index: 0, kind: input, shape index: {}]
  %s1 = inlined_call_operand.vmem [shape: f32[2,1,1,8], index: 1, kind: input, shape index: {}]
  %s2 = inlined_call_operand.vmem [shape: bf16[2,32,16], index: 2, kind: input, shape index: {}]
  %s3 = inlined_call_operand.vmem [shape: f32[2,1,16], index: 3, kind: input, shape index: {}]
  %s4 = inlined_call_operand.vmem [shape: bf16[2,32,16], index: 4, kind: input, shape index: {}]
  %s5 = inlined_call_operand.vmem [shape: f32[2,1,16], index: 5, kind: input, shape index: {}]
  %s6 = inlined_call_operand.vmem [shape: bf16[2,32,16], index: 6, kind: input, shape index: {}]
  %s7 = inlined_call_operand.vmem [shape: f32[2,1,16], index: 7, kind: input, shape index: {}]
  %s8 = inlined_call_operand.vmem [shape: bf16[2,16,32], index: 8, kind: input, shape index: {}]
  %s9 = inlined_call_operand.vmem [shape: f32[1,32], index: 9, kind: input, shape index: {}]
  %s10 = inlined_call_operand.vmem [shape: f32[1,32], index: 10, kind: input, shape index: {}]
  %s11 = inlined_call_operand.vmem [shape: f32[1,32], index: 11, kind: input, shape index: {}]
  %s12 = inlined_call_operand.vmem [shape: bf16[32,64], index: 12, kind: input, shape index: {}]
  %s13 = inlined_call_operand.vmem [shape: f32[1,64], index: 13, kind: input, shape index: {}]
  %s14 = inlined_call_operand.vmem [shape: bf16[64,32], index: 14, kind: input, shape index: {}]
  %s15 = inlined_call_operand.vmem [shape: f32[1,32], index: 15, kind: input, shape index: {}]
  %s16 = inlined_call_operand.vmem [shape: f32[1,32], index: 16, kind: input, shape index: {}]
  %s17 = inlined_call_operand.vmem [shape: f32[1,32], index: 17, kind: input, shape index: {}]
  %s18 = inlined_call_operand.hbm [shape: f32[2,8,32], index: 18, kind: output, shape index: {}]
  %s19 = sld [smem:[#allocation0]]
  $region105: #{tpu_custom_call.1} parent=0
    _
  %s21 = ssub.s32 1, %s19
  %s22 = scalar_select 0, %s21, %s19
  $region1: #{tpu_custom_call.1} parent=0
    #allocation2 [shape = 'u8[8192]{0}', space=vmem, size = 0x2000, scoped, tag = 'output window, operand 0']
    #allocation3 [shape = 's32[2]{0}', space=sflag, size = 0x8, scoped, tag = 'scoped memory for tpu_custom_call.1']
    %23 = vsyncpa [#allocation3], 0
    %s24 = scalar_lea.sflag [#allocation3], 1
    %25 = vsyncpa %s24, 0
    loop: start=0, step=1, limit=4
    $region2: #{tpu_custom_call.1} parent=1 // loop_pre_header
      _
    $region3: #{tpu_custom_call.1} parent=1 // loop_header
      %s27 = sphi 0, %s31
      %p28 = scmp.ge.s32.totalorder %s27, 4
      %s34 = sphi 0, %s46
      %s35 = sphi 0, %s42
      %s36 = sphi 0, %s34
      %s37 = sphi 0, %s35
      %s38 = sphi 0, %s36
      %s39 = sphi 0, %s37
      %s51 = sphi 0, %s53
      %s54 = sphi 0, %s51
      %s55 = sphi 0, %s54
      %s71 = sphi 0, %s55
      %s77 = sphi 0, %s79
      %s80 = sphi 0, %s77
      %s81 = sphi 0, %s80
      %s97 = sphi 0, %s81
      %s101 = sphi 0, %s101
      %s103 = sphi 0, %s101
      %s104 = sphi 0, %s103
      %s118 = sphi 0, %s104
      %s122 = sphi 0, %s122
      %s124 = sphi 0, %s122
      %s125 = sphi 0, %s124
      %s139 = sphi 0, %s125
      %s143 = sphi 0, %s143
      %s145 = sphi 0, %s143
      %s146 = sphi 0, %s145
      %s160 = sphi 0, %s146
      %s164 = sphi 0, %s164
      %s166 = sphi 0, %s164
      %s167 = sphi 0, %s166
      %s181 = sphi 0, %s167
      %s185 = sphi 0, %s185
      %s187 = sphi 0, %s185
      %s188 = sphi 0, %s187
      %s202 = sphi 0, %s188
      %s206 = sphi 0, %s206
      %s208 = sphi 0, %s206
      %s209 = sphi 0, %s208
      %s223 = sphi 0, %s209
      %s227 = sphi 0, %s227
      %s229 = sphi 0, %s227
      %s230 = sphi 0, %s229
      %s244 = sphi 0, %s230
      %s248 = sphi 0, %s248
      %s250 = sphi 0, %s248
      %s251 = sphi 0, %s250
      %s265 = sphi 0, %s251
      %s269 = sphi 0, %s269
      %s271 = sphi 0, %s269
      %s272 = sphi 0, %s271
      %s286 = sphi 0, %s272
      %s290 = sphi 0, %s290
      %s292 = sphi 0, %s290
      %s293 = sphi 0, %s292
      %s307 = sphi 0, %s293
      %s311 = sphi 0, %s311
      %s313 = sphi 0, %s311
      %s314 = sphi 0, %s313
      %s328 = sphi 0, %s314
      %s332 = sphi 0, %s332
      %s334 = sphi 0, %s332
      %s335 = sphi 0, %s334
      %s349 = sphi 0, %s335
      %s353 = sphi 0, %s353
      %s355 = sphi 0, %s353
      %s356 = sphi 0, %s355
      %s370 = sphi 0, %s356
      %s374 = sphi 0, %s374
      %s376 = sphi 0, %s374
      %s377 = sphi 0, %s376
      %s391 = sphi 0, %s377
      %s395 = sphi 0, %s395
      %s397 = sphi 0, %s395
      %s398 = sphi 0, %s397
      %s412 = sphi 0, %s398
      %s416 = sphi 0, %s416
      %s418 = sphi 0, %s416
      %s419 = sphi 0, %s418
      %s433 = sphi 0, %s419
      %s441 = sphi 0, %s443
      %s444 = sphi 0, %s441
      %s445 = sphi 0, %s444
      %s461 = sphi 0, %s445
    $region4: #{tpu_custom_call.1} parent=1 // loop_header_branch
      %30 = sbr.rel (%p28) target = $region8
    $region5: #{tpu_custom_call.1} parent=1 // loop_body
      %s32 = ssub.s32 %s27, 1
      %s33 = ssub.s32 %s27, 2
      %s40 = sadd.s32 1, %s35
      %p41 = scmp.ge.s32.totalorder %s40, 1
      %s42 = scalar_select %p41, 0, %s40
      %s43 = sadd.s32 1, %s34
      %s44 = scalar_select %p41, %s43, %s34
      %p45 = scmp.ge.s32.totalorder %s44, 2
      %s46 = scalar_select %p45, 0, %s44
      %s47 = ssub.s32 %s34, %s46
      %s48 = ssub.s32 %s35, %s42
      %s49 = sor.u32 %s47, %s48
      %p50 = scmp.eq.s32.totalorder %s49, 0
      %s52 = sadd.s32 %s51, 1
      %s53 = scalar_select %p50, %s51, %s52
      %p56 = pneg %p50
      %p57 = scmp.eq.s32.totalorder %s27, 1
      %p58 = por %p56, %p57
      %p59 = scmp.ne.s32.totalorder %s51, %s54
      %p60 = scmp.eq.s32.totalorder %s27, 0
      %p61 = por %p59, %p60
      %p62 = scmp.ne.s32.totalorder %s51, %s54
      %p63 = scmp.eq.s32.totalorder %s32, 1
      %p64 = por %p62, %p63
      %p65 = scmp.ne.s32.totalorder %s54, %s55
      %p66 = scmp.eq.s32.totalorder %s32, 0
      %p67 = por %p65, %p66
      %p68 = scmp.ne.s32.totalorder %s54, %s55
      %p69 = scmp.eq.s32.totalorder %s33, 1
      %p70 = por %p68, %p69
      %p72 = scmp.ne.s32.totalorder %s55, %s71
      %p73 = scmp.eq.s32.totalorder %s33, 0
      %p74 = por %p72, %p73
      %s75 = ssub.s32 %s34, %s46
      %p76 = scmp.eq.s32.totalorder %s75, 0
      %s78 = sadd.s32 %s77, 1
      %s79 = scalar_select %p76, %s77, %s78
      %p82 = pneg %p76
      %p83 = scmp.eq.s32.totalorder %s27, 1
      %p84 = por %p82, %p83
      %p85 = scmp.ne.s32.totalorder %s77, %s80
      %p86 = scmp.eq.s32.totalorder %s27, 0
      %p87 = por %p85, %p86
      %p88 = scmp.ne.s32.totalorder %s77, %s80
      %p89 = scmp.eq.s32.totalorder %s32, 1
      %p90 = por %p88, %p89
      %p91 = scmp.ne.s32.totalorder %s80, %s81
      %p92 = scmp.eq.s32.totalorder %s32, 0
      %p93 = por %p91, %p92
      %p94 = scmp.ne.s32.totalorder %s80, %s81
      %p95 = scmp.eq.s32.totalorder %s33, 1
      %p96 = por %p94, %p95
      %p98 = scmp.ne.s32.totalorder %s81, %s97
      %p99 = scmp.eq.s32.totalorder %s33, 0
      %p100 = por %p98, %p99
      %s102 = sadd.s32 %s101, 1
      %p105 = scmp.eq.s32.totalorder %s27, 1
      %p106 = scmp.ne.s32.totalorder %s101, %s103
      %p107 = scmp.eq.s32.totalorder %s27, 0
      %p108 = por %p106, %p107
      %p109 = scmp.ne.s32.totalorder %s101, %s103
      %p110 = scmp.eq.s32.totalorder %s32, 1
      %p111 = por %p109, %p110
      %p112 = scmp.ne.s32.totalorder %s103, %s104
      %p113 = scmp.eq.s32.totalorder %s32, 0
      %p114 = por %p112, %p113
      %p115 = scmp.ne.s32.totalorder %s103, %s104
      %p116 = scmp.eq.s32.totalorder %s33, 1
      %p117 = por %p115, %p116
      %p119 = scmp.ne.s32.totalorder %s104, %s118
      %p120 = scmp.eq.s32.totalorder %s33, 0
      %p121 = por %p119, %p120
      %s123 = sadd.s32 %s122, 1
      %p126 = scmp.eq.s32.totalorder %s27, 1
      %p127 = scmp.ne.s32.totalorder %s122, %s124
      %p128 = scmp.eq.s32.totalorder %s27, 0
      %p129 = por %p127, %p128
      %p130 = scmp.ne.s32.totalorder %s122, %s124
      %p131 = scmp.eq.s32.totalorder %s32, 1
      %p132 = por %p130, %p131
      %p133 = scmp.ne.s32.totalorder %s124, %s125
      %p134 = scmp.eq.s32.totalorder %s32, 0
      %p135 = por %p133, %p134
      %p136 = scmp.ne.s32.totalorder %s124, %s125
      %p137 = scmp.eq.s32.totalorder %s33, 1
      %p138 = por %p136, %p137
      %p140 = scmp.ne.s32.totalorder %s125, %s139
      %p141 = scmp.eq.s32.totalorder %s33, 0
      %p142 = por %p140, %p141
      %s144 = sadd.s32 %s143, 1
      %p147 = scmp.eq.s32.totalorder %s27, 1
      %p148 = scmp.ne.s32.totalorder %s143, %s145
      %p149 = scmp.eq.s32.totalorder %s27, 0
      %p150 = por %p148, %p149
      %p151 = scmp.ne.s32.totalorder %s143, %s145
      %p152 = scmp.eq.s32.totalorder %s32, 1
      %p153 = por %p151, %p152
      %p154 = scmp.ne.s32.totalorder %s145, %s146
      %p155 = scmp.eq.s32.totalorder %s32, 0
      %p156 = por %p154, %p155
      %p157 = scmp.ne.s32.totalorder %s145, %s146
      %p158 = scmp.eq.s32.totalorder %s33, 1
      %p159 = por %p157, %p158
      %p161 = scmp.ne.s32.totalorder %s146, %s160
      %p162 = scmp.eq.s32.totalorder %s33, 0
      %p163 = por %p161, %p162
      %s165 = sadd.s32 %s164, 1
      %p168 = scmp.eq.s32.totalorder %s27, 1
      %p169 = scmp.ne.s32.totalorder %s164, %s166
      %p170 = scmp.eq.s32.totalorder %s27, 0
      %p171 = por %p169, %p170
      %p172 = scmp.ne.s32.totalorder %s164, %s166
      %p173 = scmp.eq.s32.totalorder %s32, 1
      %p174 = por %p172, %p173
      %p175 = scmp.ne.s32.totalorder %s166, %s167
      %p176 = scmp.eq.s32.totalorder %s32, 0
      %p177 = por %p175, %p176
      %p178 = scmp.ne.s32.totalorder %s166, %s167
      %p179 = scmp.eq.s32.totalorder %s33, 1
      %p180 = por %p178, %p179
      %p182 = scmp.ne.s32.totalorder %s167, %s181
      %p183 = scmp.eq.s32.totalorder %s33, 0
      %p184 = por %p182, %p183
      %s186 = sadd.s32 %s185, 1
      %p189 = scmp.eq.s32.totalorder %s27, 1
      %p190 = scmp.ne.s32.totalorder %s185, %s187
      %p191 = scmp.eq.s32.totalorder %s27, 0
      %p192 = por %p190, %p191
      %p193 = scmp.ne.s32.totalorder %s185, %s187
      %p194 = scmp.eq.s32.totalorder %s32, 1
      %p195 = por %p193, %p194
      %p196 = scmp.ne.s32.totalorder %s187, %s188
      %p197 = scmp.eq.s32.totalorder %s32, 0
      %p198 = por %p196, %p197
      %p199 = scmp.ne.s32.totalorder %s187, %s188
      %p200 = scmp.eq.s32.totalorder %s33, 1
      %p201 = por %p199, %p200
      %p203 = scmp.ne.s32.totalorder %s188, %s202
      %p204 = scmp.eq.s32.totalorder %s33, 0
      %p205 = por %p203, %p204
      %s207 = sadd.s32 %s206, 1
      %p210 = scmp.eq.s32.totalorder %s27, 1
      %p211 = scmp.ne.s32.totalorder %s206, %s208
      %p212 = scmp.eq.s32.totalorder %s27, 0
      %p213 = por %p211, %p212
      %p214 = scmp.ne.s32.totalorder %s206, %s208
      %p215 = scmp.eq.s32.totalorder %s32, 1
      %p216 = por %p214, %p215
      %p217 = scmp.ne.s32.totalorder %s208, %s209
      %p218 = scmp.eq.s32.totalorder %s32, 0
      %p219 = por %p217, %p218
      %p220 = scmp.ne.s32.totalorder %s208, %s209
      %p221 = scmp.eq.s32.totalorder %s33, 1
      %p222 = por %p220, %p221
      %p224 = scmp.ne.s32.totalorder %s209, %s223
      %p225 = scmp.eq.s32.totalorder %s33, 0
      %p226 = por %p224, %p225
      %s228 = sadd.s32 %s227, 1
      %p231 = scmp.eq.s32.totalorder %s27, 1
      %p232 = scmp.ne.s32.totalorder %s227, %s229
      %p233 = scmp.eq.s32.totalorder %s27, 0
      %p234 = por %p232, %p233
      %p235 = scmp.ne.s32.totalorder %s227, %s229
      %p236 = scmp.eq.s32.totalorder %s32, 1
      %p237 = por %p235, %p236
      %p238 = scmp.ne.s32.totalorder %s229, %s230
      %p239 = scmp.eq.s32.totalorder %s32, 0
      %p240 = por %p238, %p239
      %p241 = scmp.ne.s32.totalorder %s229, %s230
      %p242 = scmp.eq.s32.totalorder %s33, 1
      %p243 = por %p241, %p242
      %p245 = scmp.ne.s32.totalorder %s230, %s244
      %p246 = scmp.eq.s32.totalorder %s33, 0
      %p247 = por %p245, %p246
      %s249 = sadd.s32 %s248, 1
      %p252 = scmp.eq.s32.totalorder %s27, 1
      %p253 = scmp.ne.s32.totalorder %s248, %s250
      %p254 = scmp.eq.s32.totalorder %s27, 0
      %p255 = por %p253, %p254
      %p256 = scmp.ne.s32.totalorder %s248, %s250
      %p257 = scmp.eq.s32.totalorder %s32, 1
      %p258 = por %p256, %p257
      %p259 = scmp.ne.s32.totalorder %s250, %s251
      %p260 = scmp.eq.s32.totalorder %s32, 0
      %p261 = por %p259, %p260
      %p262 = scmp.ne.s32.totalorder %s250, %s251
      %p263 = scmp.eq.s32.totalorder %s33, 1
      %p264 = por %p262, %p263
      %p266 = scmp.ne.s32.totalorder %s251, %s265
      %p267 = scmp.eq.s32.totalorder %s33, 0
      %p268 = por %p266, %p267
      %s270 = sadd.s32 %s269, 1
      %p273 = scmp.eq.s32.totalorder %s27, 1
      %p274 = scmp.ne.s32.totalorder %s269, %s271
      %p275 = scmp.eq.s32.totalorder %s27, 0
      %p276 = por %p274, %p275
      %p277 = scmp.ne.s32.totalorder %s269, %s271
      %p278 = scmp.eq.s32.totalorder %s32, 1
      %p279 = por %p277, %p278
      %p280 = scmp.ne.s32.totalorder %s271, %s272
      %p281 = scmp.eq.s32.totalorder %s32, 0
      %p282 = por %p280, %p281
      %p283 = scmp.ne.s32.totalorder %s271, %s272
      %p284 = scmp.eq.s32.totalorder %s33, 1
      %p285 = por %p283, %p284
      %p287 = scmp.ne.s32.totalorder %s272, %s286
      %p288 = scmp.eq.s32.totalorder %s33, 0
      %p289 = por %p287, %p288
      %s291 = sadd.s32 %s290, 1
      %p294 = scmp.eq.s32.totalorder %s27, 1
      %p295 = scmp.ne.s32.totalorder %s290, %s292
      %p296 = scmp.eq.s32.totalorder %s27, 0
      %p297 = por %p295, %p296
      %p298 = scmp.ne.s32.totalorder %s290, %s292
      %p299 = scmp.eq.s32.totalorder %s32, 1
      %p300 = por %p298, %p299
      %p301 = scmp.ne.s32.totalorder %s292, %s293
      %p302 = scmp.eq.s32.totalorder %s32, 0
      %p303 = por %p301, %p302
      %p304 = scmp.ne.s32.totalorder %s292, %s293
      %p305 = scmp.eq.s32.totalorder %s33, 1
      %p306 = por %p304, %p305
      %p308 = scmp.ne.s32.totalorder %s293, %s307
      %p309 = scmp.eq.s32.totalorder %s33, 0
      %p310 = por %p308, %p309
      %s312 = sadd.s32 %s311, 1
      %p315 = scmp.eq.s32.totalorder %s27, 1
      %p316 = scmp.ne.s32.totalorder %s311, %s313
      %p317 = scmp.eq.s32.totalorder %s27, 0
      %p318 = por %p316, %p317
      %p319 = scmp.ne.s32.totalorder %s311, %s313
      %p320 = scmp.eq.s32.totalorder %s32, 1
      %p321 = por %p319, %p320
      %p322 = scmp.ne.s32.totalorder %s313, %s314
      %p323 = scmp.eq.s32.totalorder %s32, 0
      %p324 = por %p322, %p323
      %p325 = scmp.ne.s32.totalorder %s313, %s314
      %p326 = scmp.eq.s32.totalorder %s33, 1
      %p327 = por %p325, %p326
      %p329 = scmp.ne.s32.totalorder %s314, %s328
      %p330 = scmp.eq.s32.totalorder %s33, 0
      %p331 = por %p329, %p330
      %s333 = sadd.s32 %s332, 1
      %p336 = scmp.eq.s32.totalorder %s27, 1
      %p337 = scmp.ne.s32.totalorder %s332, %s334
      %p338 = scmp.eq.s32.totalorder %s27, 0
      %p339 = por %p337, %p338
      %p340 = scmp.ne.s32.totalorder %s332, %s334
      %p341 = scmp.eq.s32.totalorder %s32, 1
      %p342 = por %p340, %p341
      %p343 = scmp.ne.s32.totalorder %s334, %s335
      %p344 = scmp.eq.s32.totalorder %s32, 0
      %p345 = por %p343, %p344
      %p346 = scmp.ne.s32.totalorder %s334, %s335
      %p347 = scmp.eq.s32.totalorder %s33, 1
      %p348 = por %p346, %p347
      %p350 = scmp.ne.s32.totalorder %s335, %s349
      %p351 = scmp.eq.s32.totalorder %s33, 0
      %p352 = por %p350, %p351
      %s354 = sadd.s32 %s353, 1
      %p357 = scmp.eq.s32.totalorder %s27, 1
      %p358 = scmp.ne.s32.totalorder %s353, %s355
      %p359 = scmp.eq.s32.totalorder %s27, 0
      %p360 = por %p358, %p359
      %p361 = scmp.ne.s32.totalorder %s353, %s355
      %p362 = scmp.eq.s32.totalorder %s32, 1
      %p363 = por %p361, %p362
      %p364 = scmp.ne.s32.totalorder %s355, %s356
      %p365 = scmp.eq.s32.totalorder %s32, 0
      %p366 = por %p364, %p365
      %p367 = scmp.ne.s32.totalorder %s355, %s356
      %p368 = scmp.eq.s32.totalorder %s33, 1
      %p369 = por %p367, %p368
      %p371 = scmp.ne.s32.totalorder %s356, %s370
      %p372 = scmp.eq.s32.totalorder %s33, 0
      %p373 = por %p371, %p372
      %s375 = sadd.s32 %s374, 1
      %p378 = scmp.eq.s32.totalorder %s27, 1
      %p379 = scmp.ne.s32.totalorder %s374, %s376
      %p380 = scmp.eq.s32.totalorder %s27, 0
      %p381 = por %p379, %p380
      %p382 = scmp.ne.s32.totalorder %s374, %s376
      %p383 = scmp.eq.s32.totalorder %s32, 1
      %p384 = por %p382, %p383
      %p385 = scmp.ne.s32.totalorder %s376, %s377
      %p386 = scmp.eq.s32.totalorder %s32, 0
      %p387 = por %p385, %p386
      %p388 = scmp.ne.s32.totalorder %s376, %s377
      %p389 = scmp.eq.s32.totalorder %s33, 1
      %p390 = por %p388, %p389
      %p392 = scmp.ne.s32.totalorder %s377, %s391
      %p393 = scmp.eq.s32.totalorder %s33, 0
      %p394 = por %p392, %p393
      %s396 = sadd.s32 %s395, 1
      %p399 = scmp.eq.s32.totalorder %s27, 1
      %p400 = scmp.ne.s32.totalorder %s395, %s397
      %p401 = scmp.eq.s32.totalorder %s27, 0
      %p402 = por %p400, %p401
      %p403 = scmp.ne.s32.totalorder %s395, %s397
      %p404 = scmp.eq.s32.totalorder %s32, 1
      %p405 = por %p403, %p404
      %p406 = scmp.ne.s32.totalorder %s397, %s398
      %p407 = scmp.eq.s32.totalorder %s32, 0
      %p408 = por %p406, %p407
      %p409 = scmp.ne.s32.totalorder %s397, %s398
      %p410 = scmp.eq.s32.totalorder %s33, 1
      %p411 = por %p409, %p410
      %p413 = scmp.ne.s32.totalorder %s398, %s412
      %p414 = scmp.eq.s32.totalorder %s33, 0
      %p415 = por %p413, %p414
      %s417 = sadd.s32 %s416, 1
      %p420 = scmp.eq.s32.totalorder %s27, 1
      %p421 = scmp.ne.s32.totalorder %s416, %s418
      %p422 = scmp.eq.s32.totalorder %s27, 0
      %p423 = por %p421, %p422
      %p424 = scmp.ne.s32.totalorder %s416, %s418
      %p425 = scmp.eq.s32.totalorder %s32, 1
      %p426 = por %p424, %p425
      %p427 = scmp.ne.s32.totalorder %s418, %s419
      %p428 = scmp.eq.s32.totalorder %s32, 0
      %p429 = por %p427, %p428
      %p430 = scmp.ne.s32.totalorder %s418, %s419
      %p431 = scmp.eq.s32.totalorder %s33, 1
      %p432 = por %p430, %p431
      %p434 = scmp.ne.s32.totalorder %s419, %s433
      %p435 = scmp.eq.s32.totalorder %s33, 0
      %p436 = por %p434, %p435
      %s437 = ssub.s32 %s34, %s46
      %s438 = ssub.s32 %s35, %s42
      %s439 = sor.u32 %s437, %s438
      %p440 = scmp.eq.s32.totalorder %s439, 0
      %s442 = sadd.s32 %s441, 1
      %s443 = scalar_select %p440, %s441, %s442
      %p446 = pneg %p440
      %p447 = scmp.eq.s32.totalorder %s27, 1
      %p448 = por %p446, %p447
      %p449 = scmp.ne.s32.totalorder %s441, %s444
      %p450 = scmp.eq.s32.totalorder %s27, 0
      %p451 = por %p449, %p450
      %p452 = scmp.ne.s32.totalorder %s441, %s444
      %p453 = scmp.eq.s32.totalorder %s32, 1
      %p454 = por %p452, %p453
      %p455 = scmp.ne.s32.totalorder %s444, %s445
      %p456 = scmp.eq.s32.totalorder %s32, 0
      %p457 = por %p455, %p456
      %p458 = scmp.ne.s32.totalorder %s444, %s445
      %p459 = scmp.eq.s32.totalorder %s33, 1
      %p460 = por %p458, %p459
      %p462 = scmp.ne.s32.totalorder %s445, %s461
      %p463 = scmp.eq.s32.totalorder %s33, 0
      %p464 = por %p462, %p463
      %p465 = scmp.le.s32.totalorder 1, %s27
      %p466 = scmp.lt.s32.totalorder %s27, 3
      %p467 = pnand %p465, %p466
      %p468 = pneg %p467
      // Predicated region
      $region9: #{tpu_custom_call.1} parent=5 // pred_check
        _
      $region10: #{tpu_custom_call.1} parent=5 // pred_check_branch
        %470 = sbr.rel (%p467) target = $region12
      $region11: #{tpu_custom_call.1} parent=5 // pred_region
        %s471 = ssub.s32 %s27, 1
        // Predicated region
        $region13: #{tpu_custom_call.1} parent=11 // pred_check
          %p472 = pneg %p114
        $region14: #{tpu_custom_call.1} parent=11 // pred_check_branch
          %474 = sbr.rel (%p472) target = $region16
        $region15: #{tpu_custom_call.1} parent=11 // pred_region
          _
        $region16: #{tpu_custom_call.1} parent=11 // pred_fallthru
          _
        // Predicated region
        $region17: #{tpu_custom_call.1} parent=11 // pred_check
          %p475 = pneg %p135
        $region18: #{tpu_custom_call.1} parent=11 // pred_check_branch
          %477 = sbr.rel (%p475) target = $region20
        $region19: #{tpu_custom_call.1} parent=11 // pred_region
          _
        $region20: #{tpu_custom_call.1} parent=11 // pred_fallthru
          _
        // Predicated region
        $region21: #{tpu_custom_call.1} parent=11 // pred_check
          %p478 = pneg %p156
        $region22: #{tpu_custom_call.1} parent=11 // pred_check_branch
          %480 = sbr.rel (%p478) target = $region24
        $region23: #{tpu_custom_call.1} parent=11 // pred_region
          _
        $region24: #{tpu_custom_call.1} parent=11 // pred_fallthru
          _
        // Predicated region
        $region25: #{tpu_custom_call.1} parent=11 // pred_check
          %p481 = pneg %p177
        $region26: #{tpu_custom_call.1} parent=11 // pred_check_branch
          %483 = sbr.rel (%p481) target = $region28
        $region27: #{tpu_custom_call.1} parent=11 // pred_region
          _
        $region28: #{tpu_custom_call.1} parent=11 // pred_fallthru
          _
        // Predicated region
        $region29: #{tpu_custom_call.1} parent=11 // pred_check
          %p484 = pneg %p198
        $region30: #{tpu_custom_call.1} parent=11 // pred_check_branch
          %486 = sbr.rel (%p484) target = $region32
        $region31: #{tpu_custom_call.1} parent=11 // pred_region
          _
        $region32: #{tpu_custom_call.1} parent=11 // pred_fallthru
          _
        // Predicated region
        $region33: #{tpu_custom_call.1} parent=11 // pred_check
          %p487 = pneg %p219
        $region34: #{tpu_custom_call.1} parent=11 // pred_check_branch
          %489 = sbr.rel (%p487) target = $region36
        $region35: #{tpu_custom_call.1} parent=11 // pred_region
          _
        $region36: #{tpu_custom_call.1} parent=11 // pred_fallthru
          _
        // Predicated region
        $region37: #{tpu_custom_call.1} parent=11 // pred_check
          %p490 = pneg %p240
        $region38: #{tpu_custom_call.1} parent=11 // pred_check_branch
          %492 = sbr.rel (%p490) target = $region40
        $region39: #{tpu_custom_call.1} parent=11 // pred_region
          _
        $region40: #{tpu_custom_call.1} parent=11 // pred_fallthru
          _
        // Predicated region
        $region41: #{tpu_custom_call.1} parent=11 // pred_check
          %p493 = pneg %p261
        $region42: #{tpu_custom_call.1} parent=11 // pred_check_branch
          %495 = sbr.rel (%p493) target = $region44
        $region43: #{tpu_custom_call.1} parent=11 // pred_region
          _
        $region44: #{tpu_custom_call.1} parent=11 // pred_fallthru
          _
        // Predicated region
        $region45: #{tpu_custom_call.1} parent=11 // pred_check
          %p496 = pneg %p282
        $region46: #{tpu_custom_call.1} parent=11 // pred_check_branch
          %498 = sbr.rel (%p496) target = $region48
        $region47: #{tpu_custom_call.1} parent=11 // pred_region
          _
        $region48: #{tpu_custom_call.1} parent=11 // pred_fallthru
          _
        // Predicated region
        $region49: #{tpu_custom_call.1} parent=11 // pred_check
          %p499 = pneg %p303
        $region50: #{tpu_custom_call.1} parent=11 // pred_check_branch
          %501 = sbr.rel (%p499) target = $region52
        $region51: #{tpu_custom_call.1} parent=11 // pred_region
          _
        $region52: #{tpu_custom_call.1} parent=11 // pred_fallthru
          _
        // Predicated region
        $region53: #{tpu_custom_call.1} parent=11 // pred_check
          %p502 = pneg %p324
        $region54: #{tpu_custom_call.1} parent=11 // pred_check_branch
          %504 = sbr.rel (%p502) target = $region56
        $region55: #{tpu_custom_call.1} parent=11 // pred_region
          _
        $region56: #{tpu_custom_call.1} parent=11 // pred_fallthru
          _
        // Predicated region
        $region57: #{tpu_custom_call.1} parent=11 // pred_check
          %p505 = pneg %p345
        $region58: #{tpu_custom_call.1} parent=11 // pred_check_branch
          %507 = sbr.rel (%p505) target = $region60
        $region59: #{tpu_custom_call.1} parent=11 // pred_region
          _
        $region60: #{tpu_custom_call.1} parent=11 // pred_fallthru
          _
        // Predicated region
        $region61: #{tpu_custom_call.1} parent=11 // pred_check
          %p508 = pneg %p366
        $region62: #{tpu_custom_call.1} parent=11 // pred_check_branch
          %510 = sbr.rel (%p508) target = $region64
        $region63: #{tpu_custom_call.1} parent=11 // pred_region
          _
        $region64: #{tpu_custom_call.1} parent=11 // pred_fallthru
          _
        // Predicated region
        $region65: #{tpu_custom_call.1} parent=11 // pred_check
          %p511 = pneg %p387
        $region66: #{tpu_custom_call.1} parent=11 // pred_check_branch
          %513 = sbr.rel (%p511) target = $region68
        $region67: #{tpu_custom_call.1} parent=11 // pred_region
          _
        $region68: #{tpu_custom_call.1} parent=11 // pred_fallthru
          _
        // Predicated region
        $region69: #{tpu_custom_call.1} parent=11 // pred_check
          %p514 = pneg %p408
        $region70: #{tpu_custom_call.1} parent=11 // pred_check_branch
          %516 = sbr.rel (%p514) target = $region72
        $region71: #{tpu_custom_call.1} parent=11 // pred_region
          _
        $region72: #{tpu_custom_call.1} parent=11 // pred_fallthru
          _
        // Predicated region
        $region73: #{tpu_custom_call.1} parent=11 // pred_check
          %p517 = pneg %p429
        $region74: #{tpu_custom_call.1} parent=11 // pred_check_branch
          %519 = sbr.rel (%p517) target = $region76
        $region75: #{tpu_custom_call.1} parent=11 // pred_region
          _
        $region76: #{tpu_custom_call.1} parent=11 // pred_fallthru
          _
      $region12: #{tpu_custom_call.1} parent=5 // pred_fallthru
        _
      %p520 = scmp.lt.s32.totalorder %s27, 2
      // Predicated region
      $region77: #{tpu_custom_call.1} parent=5 // pred_check
        %p521 = pneg %p520
      $region78: #{tpu_custom_call.1} parent=5 // pred_check_branch
        %523 = sbr.rel (%p521) target = $region80
      $region79: #{tpu_custom_call.1} parent=5 // pred_region
        // Predicated region
        $region81: #{tpu_custom_call.1} parent=79 // pred_check
          %p524 = pneg %p61
        $region82: #{tpu_custom_call.1} parent=79 // pred_check_branch
          %526 = sbr.rel (%p524) target = $region84
        $region83: #{tpu_custom_call.1} parent=79 // pred_region
          %p527 = scmp.lt.s32.totalorder %s34, 1
          %s528 = scalar_select %p527, %s34, 1
          %p529 = scmp.lt.s32.totalorder %s35, 0
          %s530 = scalar_select %p529, %s35, 0
          %s531 = sadd.s32 %s530, %s528
          %s532 = smul.addr %s531, 8
          %s533 = scalar_lea.vmem %s0, %s532
        $region84: #{tpu_custom_call.1} parent=79 // pred_fallthru
          _
        // Predicated region
        $region85: #{tpu_custom_call.1} parent=79 // pred_check
          %p534 = pneg %p87
        $region86: #{tpu_custom_call.1} parent=79 // pred_check_branch
          %536 = sbr.rel (%p534) target = $region88
        $region87: #{tpu_custom_call.1} parent=79 // pred_region
          %p537 = scmp.lt.s32.totalorder %s34, 1
          %s538 = scalar_select %p537, %s34, 1
          %s539 = scalar_lea.vmem %s1, %s538
        $region88: #{tpu_custom_call.1} parent=79 // pred_fallthru
          _
      $region80: #{tpu_custom_call.1} parent=5 // pred_fallthru
        _
      %p540 = scmp.le.s32.totalorder 1, %s27
      %p541 = scmp.lt.s32.totalorder %s27, 3
      %p542 = pnand %p540, %p541
      %p543 = pneg %p542
      // Predicated region
      $region89: #{tpu_custom_call.1} parent=5 // pred_check
        _
      $region90: #{tpu_custom_call.1} parent=5 // pred_check_branch
        %545 = sbr.rel (%p542) target = $region92
      $region91: #{tpu_custom_call.1} parent=5 // pred_region
        %s546 = ssub.s32 %s27, 1
        %p547 = scmp.lt.s32.totalorder %s36, 1
        %s548 = scalar_select %p547, %s36, 1
        %p549 = scmp.lt.s32.totalorder %s37, 0
        %s550 = scalar_select %p549, %s37, 0
        %s551 = sadd.s32 %s550, %s548
        %s552 = smul.addr %s551, 8
        %s553 = scalar_lea.vmem %s0, %s552
        %p554 = pneg %p67
        %p555 = pneg %p64
        %p556 = scmp.lt.s32.totalorder %s36, 1
        %s557 = scalar_select %p556, %s36, 1
        %s558 = scalar_lea.vmem %s1, %s557
        %p559 = pneg %p93
        %p560 = pneg %p90
        %p561 = pneg %p114
        %p562 = pneg %p111
        %p563 = pneg %p135
        %p564 = pneg %p132
        %p565 = pneg %p156
        %p566 = pneg %p153
        %p567 = pneg %p177
        %p568 = pneg %p174
        %p569 = pneg %p198
        %p570 = pneg %p195
        %p571 = pneg %p219
        %p572 = pneg %p216
        %p573 = pneg %p240
        %p574 = pneg %p237
        %p575 = pneg %p261
        %p576 = pneg %p258
        %p577 = pneg %p282
        %p578 = pneg %p279
        %p579 = pneg %p303
        %p580 = pneg %p300
        %p581 = pneg %p324
        %p582 = pneg %p321
        %p583 = pneg %p345
        %p584 = pneg %p342
        %p585 = pneg %p366
        %p586 = pneg %p363
        %p587 = pneg %p387
        %p588 = pneg %p384
        %p589 = pneg %p408
        %p590 = pneg %p405
        %p591 = pneg %p429
        %p592 = pneg %p426
        %p593 = pneg %p457
        %p594 = pneg %p454
        %s595 = sand.u32 %s444, 1
        %s596 = scalar_lea.sflag [#allocation3], %s595
        %s597 = sand.u32 %s444, 1
        %s598 = smul.addr %s597, 8
        %s599 = scalar_lea.vmem [#allocation2], %s598
        %p600 = scmp.lt.s32.totalorder %s36, 1
        %s601 = scalar_select %p600, %s36, 1
        %p602 = scmp.lt.s32.totalorder %s37, 0
        %s603 = scalar_select %p602, %s37, 0
        %s604 = sadd.s32 %s603, %s601
        %s605 = smul.addr %s604, 8
        %s606 = scalar_lea.vmem %s0, %s605
        %p607 = scmp.lt.s32.totalorder %s36, 1
        %s608 = scalar_select %p607, %s36, 1
        %s609 = scalar_lea.vmem %s1, %s608
        %v611 = vld [vmem:[%s606] sm:$0xff]
        %v612 = vpack.c.bf16 %v611, %v611
        %v613 = vld [vmem:[%s609] sm:$0x1]
        %v614 = vld [vmem:[%s2] sm:$0xf]
        %v615 = vld [vmem:[%s2 + $0x4] sm:$0xf]
        %v616 = vld [vmem:[%s2 + $0x8] sm:$0xf]
        %v617 = vld [vmem:[%s2 + $0xc] sm:$0xf]
        %v618 = vld [vmem:[%s3] sm:$0x1]
        %v620 = vlaneseq
        %v621 = vshrl.u32 %v620, 7
        %v622 = vsub.s32 0, %v621
        %v623 = vrot.slane %v618, %v622
        %v629 = vunpack.c.l.b16 %v614
        %v630 = vunpack.c.l.b16 %v615
        %v631 = vunpack.c.l.b16 %v616
        %v632 = vunpack.c.l.b16 %v617
        %v633 = vpack.c.b16 %v630, %v629
        %v634 = vpack.c.b16 %v632, %v631
        %vm637 = vcmask 261120
        %v639 = vsel %vm637, %v612, 0
        %641 = vmatprep.subr.bf16.mxu0 0
        %642 = vmatpush1.bf16.msra.mxu0 0
        %643 = vmatprep.subr.bf16.mxu0 0
        %644 = vmatpush1.bf16.msra.mxu0 0
        %645 = vmatprep.subr.bf16.mxu0 0
        %646 = vmatpush1.bf16.msra.mxu0 0
        %647 = vmatprep.subr.bf16.mxu0 0
        %648 = vmatpush1.bf16.msra.mxu0 0
        %649 = vmatprep.subr.bf16.mxu0 0
        %650 = vmatpush1.bf16.msra.mxu0 0
        %651 = vmatprep.subr.bf16.mxu0 0
        %652 = vmatpush1.bf16.msra.mxu0 0
        %653 = vmatprep.subr.bf16.mxu0 0
        %654 = vmatpush1.bf16.msra.mxu0 %v634
        %655 = vmatprep.subr.bf16.mxu0 0
        %656 = vmatpush1.bf16.msra.mxu0 %v633
        %657 = vmatprep.subr.bf16.mxu0 0
        %658 = vmatpush2.bf16.msra.mxu0 0
        %659 = vmatprep.subr.bf16.mxu0 0
        %660 = vmatpush2.bf16.msra.mxu0 0
        %661 = vmatprep.subr.bf16.mxu0 0
        %662 = vmatpush2.bf16.msra.mxu0 0
        %663 = vmatprep.subr.bf16.mxu0 0
        %664 = vmatpush2.bf16.msra.mxu0 0
        %665 = vmatprep.subr.bf16.mxu0 0
        %666 = vmatpush2.bf16.msra.mxu0 0
        %667 = vmatprep.subr.bf16.mxu0 0
        %668 = vmatpush2.bf16.msra.mxu0 0
        %669 = vmatprep.subr.bf16.mxu0 0
        %670 = vmatpush2.bf16.msra.mxu0 0
        %671 = vmatprep.subr.bf16.mxu0 0
        %672 = vmatpush2.bf16.msra.mxu0 0
        %673 = vmatprep.mubr.bf16.mxu0 0
        %674 = vmatmul.mubr.bf16.gmra.mxu0 %v639
        %v675 = vpop.f32.mrf.mxu0
        %v676 = vadd.f32 %v623, %v675
        %v677 = vpop.f32.mrf.mxu0
        %v678 = vpop.f32.mrf.mxu0
        %v679 = vpop.f32.mrf.mxu0
        %680 = vdwg.mxu0
        %v681 = vld [vmem:[%s4] sm:$0xf]
        %v682 = vld [vmem:[%s4 + $0x4] sm:$0xf]
        %v683 = vld [vmem:[%s4 + $0x8] sm:$0xf]
        %v684 = vld [vmem:[%s4 + $0xc] sm:$0xf]
        %v685 = vld [vmem:[%s5] sm:$0x1]
        %v687 = vlaneseq
        %v688 = vshrl.u32 %v687, 7
        %v689 = vsub.s32 0, %v688
        %v690 = vrot.slane %v685, %v689
        %v696 = vunpack.c.l.b16 %v681
        %v697 = vunpack.c.l.b16 %v682
        %v698 = vunpack.c.l.b16 %v683
        %v699 = vunpack.c.l.b16 %v684
        %v700 = vpack.c.b16 %v697, %v696
        %v701 = vpack.c.b16 %v699, %v698
        %704 = vmatprep.subr.bf16.mxu0 0
        %705 = vmatpush1.bf16.msra.mxu0 0
        %706 = vmatprep.subr.bf16.mxu0 0
        %707 = vmatpush1.bf16.msra.mxu0 0
        %708 = vmatprep.subr.bf16.mxu0 0
        %709 = vmatpush1.bf16.msra.mxu0 0
        %710 = vmatprep.subr.bf16.mxu0 0
        %711 = vmatpush1.bf16.msra.mxu0 0
        %712 = vmatprep.subr.bf16.mxu0 0
        %713 = vmatpush1.bf16.msra.mxu0 0
        %714 = vmatprep.subr.bf16.mxu0 0
        %715 = vmatpush1.bf16.msra.mxu0 0
        %716 = vmatprep.subr.bf16.mxu0 0
        %717 = vmatpush1.bf16.msra.mxu0 %v701
        %718 = vmatprep.subr.bf16.mxu0 0
        %719 = vmatpush1.bf16.msra.mxu0 %v700
        %720 = vmatprep.subr.bf16.mxu0 0
        %721 = vmatpush2.bf16.msra.mxu0 0
        %722 = vmatprep.subr.bf16.mxu0 0
        %723 = vmatpush2.bf16.msra.mxu0 0
        %724 = vmatprep.subr.bf16.mxu0 0
        %725 = vmatpush2.bf16.msra.mxu0 0
        %726 = vmatprep.subr.bf16.mxu0 0
        %727 = vmatpush2.bf16.msra.mxu0 0
        %728 = vmatprep.subr.bf16.mxu0 0
        %729 = vmatpush2.bf16.msra.mxu0 0
        %730 = vmatprep.subr.bf16.mxu0 0
        %731 = vmatpush2.bf16.msra.mxu0 0
        %732 = vmatprep.subr.bf16.mxu0 0
        %733 = vmatpush2.bf16.msra.mxu0 0
        %734 = vmatprep.subr.bf16.mxu0 0
        %735 = vmatpush2.bf16.msra.mxu0 0
        %736 = vmatprep.mubr.bf16.mxu0 0
        %737 = vmatmul.mubr.bf16.gmra.mxu0 %v639
        %v738 = vpop.f32.mrf.mxu0
        %v739 = vadd.f32 %v690, %v738
        %v740 = vpop.f32.mrf.mxu0
        %v741 = vpop.f32.mrf.mxu0
        %v742 = vpop.f32.mrf.mxu0
        %743 = vdwg.mxu0
        %v744 = vld [vmem:[%s6] sm:$0xf]
        %v745 = vld [vmem:[%s6 + $0x4] sm:$0xf]
        %v746 = vld [vmem:[%s6 + $0x8] sm:$0xf]
        %v747 = vld [vmem:[%s6 + $0xc] sm:$0xf]
        %v748 = vld [vmem:[%s7] sm:$0x1]
        %v750 = vlaneseq
        %v751 = vshrl.u32 %v750, 7
        %v752 = vsub.s32 0, %v751
        %v753 = vrot.slane %v748, %v752
        %v759 = vunpack.c.l.b16 %v744
        %v760 = vunpack.c.l.b16 %v745
        %v761 = vunpack.c.l.b16 %v746
        %v762 = vunpack.c.l.b16 %v747
        %v763 = vpack.c.b16 %v760, %v759
        %v764 = vpack.c.b16 %v762, %v761
        %767 = vmatprep.subr.bf16.mxu0 0
        %768 = vmatpush1.bf16.msra.mxu0 0
        %769 = vmatprep.subr.bf16.mxu0 0
        %770 = vmatpush1.bf16.msra.mxu0 0
        %771 = vmatprep.subr.bf16.mxu0 0
        %772 = vmatpush1.bf16.msra.mxu0 0
        %773 = vmatprep.subr.bf16.mxu0 0
        %774 = vmatpush1.bf16.msra.mxu0 0
        %775 = vmatprep.subr.bf16.mxu0 0
        %776 = vmatpush1.bf16.msra.mxu0 0
        %777 = vmatprep.subr.bf16.mxu0 0
        %778 = vmatpush1.bf16.msra.mxu0 0
        %779 = vmatprep.subr.bf16.mxu0 0
        %780 = vmatpush1.bf16.msra.mxu0 %v764
        %781 = vmatprep.subr.bf16.mxu0 0
        %782 = vmatpush1.bf16.msra.mxu0 %v763
        %783 = vmatprep.subr.bf16.mxu0 0
        %784 = vmatpush2.bf16.msra.mxu0 0
        %785 = vmatprep.subr.bf16.mxu0 0
        %786 = vmatpush2.bf16.msra.mxu0 0
        %787 = vmatprep.subr.bf16.mxu0 0
        %788 = vmatpush2.bf16.msra.mxu0 0
        %789 = vmatprep.subr.bf16.mxu0 0
        %790 = vmatpush2.bf16.msra.mxu0 0
        %791 = vmatprep.subr.bf16.mxu0 0
        %792 = vmatpush2.bf16.msra.mxu0 0
        %793 = vmatprep.subr.bf16.mxu0 0
        %794 = vmatpush2.bf16.msra.mxu0 0
        %795 = vmatprep.subr.bf16.mxu0 0
        %796 = vmatpush2.bf16.msra.mxu0 0
        %797 = vmatprep.subr.bf16.mxu0 0
        %798 = vmatpush2.bf16.msra.mxu0 0
        %799 = vmatprep.mubr.bf16.mxu0 0
        %800 = vmatmul.mubr.bf16.gmra.mxu0 %v639
        %v801 = vpop.f32.mrf.mxu0
        %v802 = vadd.f32 %v753, %v801
        %v803 = vpop.f32.mrf.mxu0
        %v804 = vpop.f32.mrf.mxu0
        %v805 = vpop.f32.mrf.mxu0
        %806 = vdwg.mxu0
        %v807 = vpack.c.bf16 %v676, %v676
        %v808 = vpack.c.bf16 %v739, %v739
        %v810 = vlaneseq
        %v811 = vshrl.u32 %v810, 7
        %v812 = vsub.s32 0, %v811
        %v813 = vrot.slane %v613, %v812
        %vm815 = vcmask 130048
        %v817 = vsel %vm815, %v807, 0
        %v820 = vsel %vm815, %v808, 0
        %822 = vmatprep.subr.bf16.mxu0 0
        %823 = vmatpush1.bf16.xpose.msra.mxu0 0
        %824 = vmatprep.subr.bf16.mxu0 0
        %825 = vmatpush1.bf16.xpose.msra.mxu0 0
        %826 = vmatprep.subr.bf16.mxu0 0
        %827 = vmatpush1.bf16.xpose.msra.mxu0 0
        %828 = vmatprep.subr.bf16.mxu0 0
        %829 = vmatpush1.bf16.xpose.msra.mxu0 0
        %830 = vmatprep.subr.bf16.mxu0 0
        %831 = vmatpush1.bf16.xpose.msra.mxu0 0
        %832 = vmatprep.subr.bf16.mxu0 0
        %833 = vmatpush1.bf16.xpose.msra.mxu0 0
        %834 = vmatprep.subr.bf16.mxu0 0
        %835 = vmatpush1.bf16.xpose.msra.mxu0 0
        %836 = vmatprep.subr.bf16.mxu0 0
        %837 = vmatpush1.bf16.xpose.msra.mxu0 %v820
        %838 = vmatprep.subr.bf16.mxu0 0
        %839 = vmatpush2.bf16.xpose.msra.mxu0 0
        %840 = vmatprep.subr.bf16.mxu0 0
        %841 = vmatpush2.bf16.xpose.msra.mxu0 0
        %842 = vmatprep.subr.bf16.mxu0 0
        %843 = vmatpush2.bf16.xpose.msra.mxu0 0
        %844 = vmatprep.subr.bf16.mxu0 0
        %845 = vmatpush2.bf16.xpose.msra.mxu0 0
        %846 = vmatprep.subr.bf16.mxu0 0
        %847 = vmatpush2.bf16.xpose.msra.mxu0 0
        %848 = vmatprep.subr.bf16.mxu0 0
        %849 = vmatpush2.bf16.xpose.msra.mxu0 0
        %850 = vmatprep.subr.bf16.mxu0 0
        %851 = vmatpush2.bf16.xpose.msra.mxu0 0
        %852 = vmatprep.subr.bf16.mxu0 0
        %853 = vmatpush2.bf16.xpose.msra.mxu0 0
        %854 = vmatprep.mubr.bf16.mxu0 0
        %855 = vmatmul.mubr.bf16.gmra.mxu0 %v817
        %v856 = vpop.f32.mrf.mxu0
        %v857 = vadd.f32 %v813, %v856
        %v858 = vpop.f32.mrf.mxu0
        %v859 = vpop.f32.mrf.mxu0
        %v860 = vpop.f32.mrf.mxu0
        %861 = vdwg.mxu0
        %vm862 = vcmask 64512
        %v863 = vsel %vm862, %v857, -inf
        %864 = vmax.xlane.f32.xlu0 %v863
        %v865 = vpop.xlane.xlu0 %864
        %v866 = vsub.f32 %v857, %v865
        %v867 = vmul.f32 %v866, 1.442695
        %v868 = vpow.pop %v867
        %v869 = vsel %vm862, %v868, 0.0
        %870 = vadd.xlane.f32.xlu0 %v869
        %v871 = vpop.xlane.xlu0 %870
        %v872 = vrcp.pop %v871
        %v873 = vmul.f32 %v868, %v872
        %v874 = vpack.c.bf16 %v873, %v873
        %v875 = vpack.c.bf16 %v802, %v802
        %v877 = vsel %vm862, %v874, 0
        %vm879 = vcmask 1043456
        %v881 = vsel %vm879, %v875, 0
        %883 = vmatprep.subr.bf16.mxu0 0
        %884 = vmatpush1.bf16.msra.mxu0 0
        %885 = vmatprep.subr.bf16.mxu0 0
        %886 = vmatpush1.bf16.msra.mxu0 0
        %887 = vmatprep.subr.bf16.mxu0 0
        %888 = vmatpush1.bf16.msra.mxu0 0
        %889 = vmatprep.subr.bf16.mxu0 0
        %890 = vmatpush1.bf16.msra.mxu0 0
        %891 = vmatprep.subr.bf16.mxu0 0
        %892 = vmatpush1.bf16.msra.mxu0 0
        %893 = vmatprep.subr.bf16.mxu0 0
        %894 = vmatpush1.bf16.msra.mxu0 0
        %895 = vmatprep.subr.bf16.mxu0 0
        %896 = vmatpush1.bf16.msra.mxu0 0
        %897 = vmatprep.subr.bf16.mxu0 0
        %898 = vmatpush1.bf16.msra.mxu0 %v881
        %899 = vmatprep.subr.bf16.mxu0 0
        %900 = vmatpush2.bf16.msra.mxu0 0
        %901 = vmatprep.subr.bf16.mxu0 0
        %902 = vmatpush2.bf16.msra.mxu0 0
        %903 = vmatprep.subr.bf16.mxu0 0
        %904 = vmatpush2.bf16.msra.mxu0 0
        %905 = vmatprep.subr.bf16.mxu0 0
        %906 = vmatpush2.bf16.msra.mxu0 0
        %907 = vmatprep.subr.bf16.mxu0 0
        %908 = vmatpush2.bf16.msra.mxu0 0
        %909 = vmatprep.subr.bf16.mxu0 0
        %910 = vmatpush2.bf16.msra.mxu0 0
        %911 = vmatprep.subr.bf16.mxu0 0
        %912 = vmatpush2.bf16.msra.mxu0 0
        %913 = vmatprep.subr.bf16.mxu0 0
        %914 = vmatpush2.bf16.msra.mxu0 0
        %915 = vmatprep.mubr.bf16.mxu0 0
        %916 = vmatmul.mubr.bf16.gmra.mxu0 %v877
        %v917 = vpop.f32.mrf.mxu0
        %v918 = vadd.f32 0.0, %v917
        %v919 = vpop.f32.mrf.mxu0
        %v920 = vpop.f32.mrf.mxu0
        %v921 = vpop.f32.mrf.mxu0
        %922 = vdwg.mxu0
        %v923 = vpack.c.bf16 %v918, %v918
        %v924 = vld [vmem:[%s8] sm:$0xf]
        %v925 = vld [vmem:[%s8 + $0x4] sm:$0xf]
        %s926 = scalar_lea.vmem %s2, 16
        %v927 = vld [vmem:[%s926] sm:$0xf]
        %v928 = vld [vmem:[%s926 + $0x4] sm:$0xf]
        %v929 = vld [vmem:[%s926 + $0x8] sm:$0xf]
        %v930 = vld [vmem:[%s926 + $0xc] sm:$0xf]
        %s931 = scalar_lea.vmem %s3, 1
        %v932 = vld [vmem:[%s931] sm:$0x1]
        %v934 = vlaneseq
        %v935 = vshrl.u32 %v934, 7
        %v936 = vsub.s32 0, %v935
        %v937 = vrot.slane %v932, %v936
        %v943 = vunpack.c.l.b16 %v927
        %v944 = vunpack.c.l.b16 %v928
        %v945 = vunpack.c.l.b16 %v929
        %v946 = vunpack.c.l.b16 %v930
        %v947 = vpack.c.b16 %v944, %v943
        %v948 = vpack.c.b16 %v946, %v945
        %951 = vmatprep.subr.bf16.mxu0 0
        %952 = vmatpush1.bf16.msra.mxu0 0
        %953 = vmatprep.subr.bf16.mxu0 0
        %954 = vmatpush1.bf16.msra.mxu0 0
        %955 = vmatprep.subr.bf16.mxu0 0
        %956 = vmatpush1.bf16.msra.mxu0 0
        %957 = vmatprep.subr.bf16.mxu0 0
        %958 = vmatpush1.bf16.msra.mxu0 0
        %959 = vmatprep.subr.bf16.mxu0 0
        %960 = vmatpush1.bf16.msra.mxu0 0
        %961 = vmatprep.subr.bf16.mxu0 0
        %962 = vmatpush1.bf16.msra.mxu0 0
        %963 = vmatprep.subr.bf16.mxu0 0
        %964 = vmatpush1.bf16.msra.mxu0 %v948
        %965 = vmatprep.subr.bf16.mxu0 0
        %966 = vmatpush1.bf16.msra.mxu0 %v947
        %967 = vmatprep.subr.bf16.mxu0 0
        %968 = vmatpush2.bf16.msra.mxu0 0
        %969 = vmatprep.subr.bf16.mxu0 0
        %970 = vmatpush2.bf16.msra.mxu0 0
        %971 = vmatprep.subr.bf16.mxu0 0
        %972 = vmatpush2.bf16.msra.mxu0 0
        %973 = vmatprep.subr.bf16.mxu0 0
        %974 = vmatpush2.bf16.msra.mxu0 0
        %975 = vmatprep.subr.bf16.mxu0 0
        %976 = vmatpush2.bf16.msra.mxu0 0
        %977 = vmatprep.subr.bf16.mxu0 0
        %978 = vmatpush2.bf16.msra.mxu0 0
        %979 = vmatprep.subr.bf16.mxu0 0
        %980 = vmatpush2.bf16.msra.mxu0 0
        %981 = vmatprep.subr.bf16.mxu0 0
        %982 = vmatpush2.bf16.msra.mxu0 0
        %983 = vmatprep.mubr.bf16.mxu0 0
        %984 = vmatmul.mubr.bf16.gmra.mxu0 %v639
        %v985 = vpop.f32.mrf.mxu0
        %v986 = vadd.f32 %v937, %v985
        %v987 = vpop.f32.mrf.mxu0
        %v988 = vpop.f32.mrf.mxu0
        %v989 = vpop.f32.mrf.mxu0
        %990 = vdwg.mxu0
        %s991 = scalar_lea.vmem %s4, 16
        %v992 = vld [vmem:[%s991] sm:$0xf]
        %v993 = vld [vmem:[%s991 + $0x4] sm:$0xf]
        %v994 = vld [vmem:[%s991 + $0x8] sm:$0xf]
        %v995 = vld [vmem:[%s991 + $0xc] sm:$0xf]
        %s996 = scalar_lea.vmem %s5, 1
        %v997 = vld [vmem:[%s996] sm:$0x1]
        %v999 = vlaneseq
        %v1000 = vshrl.u32 %v999, 7
        %v1001 = vsub.s32 0, %v1000
        %v1002 = vrot.slane %v997, %v1001
        %v1008 = vunpack.c.l.b16 %v992
        %v1009 = vunpack.c.l.b16 %v993
        %v1010 = vunpack.c.l.b16 %v994
        %v1011 = vunpack.c.l.b16 %v995
        %v1012 = vpack.c.b16 %v1009, %v1008
        %v1013 = vpack.c.b16 %v1011, %v1010
        %1016 = vmatprep.subr.bf16.mxu0 0
        %1017 = vmatpush1.bf16.msra.mxu0 0
        %1018 = vmatprep.subr.bf16.mxu0 0
        %1019 = vmatpush1.bf16.msra.mxu0 0
        %1020 = vmatprep.subr.bf16.mxu0 0
        %1021 = vmatpush1.bf16.msra.mxu0 0
        %1022 = vmatprep.subr.bf16.mxu0 0
        %1023 = vmatpush1.bf16.msra.mxu0 0
        %1024 = vmatprep.subr.bf16.mxu0 0
        %1025 = vmatpush1.bf16.msra.mxu0 0
        %1026 = vmatprep.subr.bf16.mxu0 0
        %1027 = vmatpush1.bf16.msra.mxu0 0
        %1028 = vmatprep.subr.bf16.mxu0 0
        %1029 = vmatpush1.bf16.msra.mxu0 %v1013
        %1030 = vmatprep.subr.bf16.mxu0 0
        %1031 = vmatpush1.bf16.msra.mxu0 %v1012
        %1032 = vmatprep.subr.bf16.mxu0 0
        %1033 = vmatpush2.bf16.msra.mxu0 0
        %1034 = vmatprep.subr.bf16.mxu0 0
        %1035 = vmatpush2.bf16.msra.mxu0 0
        %1036 = vmatprep.subr.bf16.mxu0 0
        %1037 = vmatpush2.bf16.msra.mxu0 0
        %1038 = vmatprep.subr.bf16.mxu0 0
        %1039 = vmatpush2.bf16.msra.mxu0 0
        %1040 = vmatprep.subr.bf16.mxu0 0
        %1041 = vmatpush2.bf16.msra.mxu0 0
        %1042 = vmatprep.subr.bf16.mxu0 0
        %1043 = vmatpush2.bf16.msra.mxu0 0
        %1044 = vmatprep.subr.bf16.mxu0 0
        %1045 = vmatpush2.bf16.msra.mxu0 0
        %1046 = vmatprep.subr.bf16.mxu0 0
        %1047 = vmatpush2.bf16.msra.mxu0 0
        %1048 = vmatprep.mubr.bf16.mxu0 0
        %1049 = vmatmul.mubr.bf16.gmra.mxu0 %v639
        %v1050 = vpop.f32.mrf.mxu0
        %v1051 = vadd.f32 %v1002, %v1050
        %v1052 = vpop.f32.mrf.mxu0
        %v1053 = vpop.f32.mrf.mxu0
        %v1054 = vpop.f32.mrf.mxu0
        %1055 = vdwg.mxu0
        %s1056 = scalar_lea.vmem %s6, 16
        %v1057 = vld [vmem:[%s1056] sm:$0xf]
        %v1058 = vld [vmem:[%s1056 + $0x4] sm:$0xf]
        %v1059 = vld [vmem:[%s1056 + $0x8] sm:$0xf]
        %v1060 = vld [vmem:[%s1056 + $0xc] sm:$0xf]
        %s1061 = scalar_lea.vmem %s7, 1
        %v1062 = vld [vmem:[%s1061] sm:$0x1]
        %v1064 = vlaneseq
        %v1065 = vshrl.u32 %v1064, 7
        %v1066 = vsub.s32 0, %v1065
        %v1067 = vrot.slane %v1062, %v1066
        %v1073 = vunpack.c.l.b16 %v1057
        %v1074 = vunpack.c.l.b16 %v1058
        %v1075 = vunpack.c.l.b16 %v1059
        %v1076 = vunpack.c.l.b16 %v1060
        %v1077 = vpack.c.b16 %v1074, %v1073
        %v1078 = vpack.c.b16 %v1076, %v1075
        %1081 = vmatprep.subr.bf16.mxu0 0
        %1082 = vmatpush1.bf16.msra.mxu0 0
        %1083 = vmatprep.subr.bf16.mxu0 0
        %1084 = vmatpush1.bf16.msra.mxu0 0
        %1085 = vmatprep.subr.bf16.mxu0 0
        %1086 = vmatpush1.bf16.msra.mxu0 0
        %1087 = vmatprep.subr.bf16.mxu0 0
        %1088 = vmatpush1.bf16.msra.mxu0 0
        %1089 = vmatprep.subr.bf16.mxu0 0
        %1090 = vmatpush1.bf16.msra.mxu0 0
        %1091 = vmatprep.subr.bf16.mxu0 0
        %1092 = vmatpush1.bf16.msra.mxu0 0
        %1093 = vmatprep.subr.bf16.mxu0 0
        %1094 = vmatpush1.bf16.msra.mxu0 %v1078
        %1095 = vmatprep.subr.bf16.mxu0 0
        %1096 = vmatpush1.bf16.msra.mxu0 %v1077
        %1097 = vmatprep.subr.bf16.mxu0 0
        %1098 = vmatpush2.bf16.msra.mxu0 0
        %1099 = vmatprep.subr.bf16.mxu0 0
        %1100 = vmatpush2.bf16.msra.mxu0 0
        %1101 = vmatprep.subr.bf16.mxu0 0
        %1102 = vmatpush2.bf16.msra.mxu0 0
        %1103 = vmatprep.subr.bf16.mxu0 0
        %1104 = vmatpush2.bf16.msra.mxu0 0
        %1105 = vmatprep.subr.bf16.mxu0 0
        %1106 = vmatpush2.bf16.msra.mxu0 0
        %1107 = vmatprep.subr.bf16.mxu0 0
        %1108 = vmatpush2.bf16.msra.mxu0 0
        %1109 = vmatprep.subr.bf16.mxu0 0
        %1110 = vmatpush2.bf16.msra.mxu0 0
        %1111 = vmatprep.subr.bf16.mxu0 0
        %1112 = vmatpush2.bf16.msra.mxu0 0
        %1113 = vmatprep.mubr.bf16.mxu0 0
        %1114 = vmatmul.mubr.bf16.gmra.mxu0 %v639
        %v1115 = vpop.f32.mrf.mxu0
        %v1116 = vadd.f32 %v1067, %v1115
        %v1117 = vpop.f32.mrf.mxu0
        %v1118 = vpop.f32.mrf.mxu0
        %v1119 = vpop.f32.mrf.mxu0
        %1120 = vdwg.mxu0
        %v1121 = vpack.c.bf16 %v986, %v986
        %v1122 = vpack.c.bf16 %v1051, %v1051
        %v1124 = vsel %vm815, %v1121, 0
        %v1127 = vsel %vm815, %v1122, 0
        %1129 = vmatprep.subr.bf16.mxu0 0
        %1130 = vmatpush1.bf16.xpose.msra.mxu0 0
        %1131 = vmatprep.subr.bf16.mxu0 0
        %1132 = vmatpush1.bf16.xpose.msra.mxu0 0
        %1133 = vmatprep.subr.bf16.mxu0 0
        %1134 = vmatpush1.bf16.xpose.msra.mxu0 0
        %1135 = vmatprep.subr.bf16.mxu0 0
        %1136 = vmatpush1.bf16.xpose.msra.mxu0 0
        %1137 = vmatprep.subr.bf16.mxu0 0
        %1138 = vmatpush1.bf16.xpose.msra.mxu0 0
        %1139 = vmatprep.subr.bf16.mxu0 0
        %1140 = vmatpush1.bf16.xpose.msra.mxu0 0
        %1141 = vmatprep.subr.bf16.mxu0 0
        %1142 = vmatpush1.bf16.xpose.msra.mxu0 0
        %1143 = vmatprep.subr.bf16.mxu0 0
        %1144 = vmatpush1.bf16.xpose.msra.mxu0 %v1127
        %1145 = vmatprep.subr.bf16.mxu0 0
        %1146 = vmatpush2.bf16.xpose.msra.mxu0 0
        %1147 = vmatprep.subr.bf16.mxu0 0
        %1148 = vmatpush2.bf16.xpose.msra.mxu0 0
        %1149 = vmatprep.subr.bf16.mxu0 0
        %1150 = vmatpush2.bf16.xpose.msra.mxu0 0
        %1151 = vmatprep.subr.bf16.mxu0 0
        %1152 = vmatpush2.bf16.xpose.msra.mxu0 0
        %1153 = vmatprep.subr.bf16.mxu0 0
        %1154 = vmatpush2.bf16.xpose.msra.mxu0 0
        %1155 = vmatprep.subr.bf16.mxu0 0
        %1156 = vmatpush2.bf16.xpose.msra.mxu0 0
        %1157 = vmatprep.subr.bf16.mxu0 0
        %1158 = vmatpush2.bf16.xpose.msra.mxu0 0
        %1159 = vmatprep.subr.bf16.mxu0 0
        %1160 = vmatpush2.bf16.xpose.msra.mxu0 0
        %1161 = vmatprep.mubr.bf16.mxu0 0
        %1162 = vmatmul.mubr.bf16.gmra.mxu0 %v1124
        %v1163 = vpop.f32.mrf.mxu0
        %v1164 = vadd.f32 %v813, %v1163
        %v1165 = vpop.f32.mrf.mxu0
        %v1166 = vpop.f32.mrf.mxu0
        %v1167 = vpop.f32.mrf.mxu0
        %1168 = vdwg.mxu0
        %v1169 = vsel %vm862, %v1164, -inf
        %1170 = vmax.xlane.f32.xlu0 %v1169
        %v1171 = vpop.xlane.xlu0 %1170
        %v1172 = vsub.f32 %v1164, %v1171
        %v1173 = vmul.f32 %v1172, 1.442695
        %v1174 = vpow.pop %v1173
        %v1175 = vsel %vm862, %v1174, 0.0
        %1176 = vadd.xlane.f32.xlu0 %v1175
        %v1177 = vpop.xlane.xlu0 %1176
        %v1178 = vrcp.pop %v1177
        %v1179 = vmul.f32 %v1174, %v1178
        %v1180 = vpack.c.bf16 %v1179, %v1179
        %v1181 = vpack.c.bf16 %v1116, %v1116
        %v1183 = vsel %vm862, %v1180, 0
        %v1186 = vsel %vm879, %v1181, 0
        %1188 = vmatprep.subr.bf16.mxu0 0
        %1189 = vmatpush1.bf16.msra.mxu0 0
        %1190 = vmatprep.subr.bf16.mxu0 0
        %1191 = vmatpush1.bf16.msra.mxu0 0
        %1192 = vmatprep.subr.bf16.mxu0 0
        %1193 = vmatpush1.bf16.msra.mxu0 0
        %1194 = vmatprep.subr.bf16.mxu0 0
        %1195 = vmatpush1.bf16.msra.mxu0 0
        %1196 = vmatprep.subr.bf16.mxu0 0
        %1197 = vmatpush1.bf16.msra.mxu0 0
        %1198 = vmatprep.subr.bf16.mxu0 0
        %1199 = vmatpush1.bf16.msra.mxu0 0
        %1200 = vmatprep.subr.bf16.mxu0 0
        %1201 = vmatpush1.bf16.msra.mxu0 0
        %1202 = vmatprep.subr.bf16.mxu0 0
        %1203 = vmatpush1.bf16.msra.mxu0 %v1186
        %1204 = vmatprep.subr.bf16.mxu0 0
        %1205 = vmatpush2.bf16.msra.mxu0 0
        %1206 = vmatprep.subr.bf16.mxu0 0
        %1207 = vmatpush2.bf16.msra.mxu0 0
        %1208 = vmatprep.subr.bf16.mxu0 0
        %1209 = vmatpush2.bf16.msra.mxu0 0
        %1210 = vmatprep.subr.bf16.mxu0 0
        %1211 = vmatpush2.bf16.msra.mxu0 0
        %1212 = vmatprep.subr.bf16.mxu0 0
        %1213 = vmatpush2.bf16.msra.mxu0 0
        %1214 = vmatprep.subr.bf16.mxu0 0
        %1215 = vmatpush2.bf16.msra.mxu0 0
        %1216 = vmatprep.subr.bf16.mxu0 0
        %1217 = vmatpush2.bf16.msra.mxu0 0
        %1218 = vmatprep.subr.bf16.mxu0 0
        %1219 = vmatpush2.bf16.msra.mxu0 0
        %1220 = vmatprep.mubr.bf16.mxu0 0
        %1221 = vmatmul.mubr.bf16.gmra.mxu0 %v1183
        %v1222 = vpop.f32.mrf.mxu0
        %v1223 = vadd.f32 0.0, %v1222
        %v1224 = vpop.f32.mrf.mxu0
        %v1225 = vpop.f32.mrf.mxu0
        %v1226 = vpop.f32.mrf.mxu0
        %1227 = vdwg.mxu0
        %v1228 = vpack.c.bf16 %v1223, %v1223
        %s1229 = scalar_lea.vmem %s8, 8
        %v1230 = vld [vmem:[%s1229] sm:$0xf]
        %v1231 = vld [vmem:[%s1229 + $0x4] sm:$0xf]
        %v1234 = vunpack.c.l.b16 %v1230
        %v1235 = vunpack.c.l.b16 %v1231
        %v1236 = vpack.c.b16 %v1235, %v1234
        %v1239 = vsel %vm815, %v1228, 0
        %1241 = vmatprep.subr.bf16.mxu0 0
        %1242 = vmatpush1.bf16.msra.mxu0 0
        %1243 = vmatprep.subr.bf16.mxu0 0
        %1244 = vmatpush1.bf16.msra.mxu0 0
        %1245 = vmatprep.subr.bf16.mxu0 0
        %1246 = vmatpush1.bf16.msra.mxu0 0
        %1247 = vmatprep.subr.bf16.mxu0 0
        %1248 = vmatpush1.bf16.msra.mxu0 0
        %1249 = vmatprep.subr.bf16.mxu0 0
        %1250 = vmatpush1.bf16.msra.mxu0 0
        %1251 = vmatprep.subr.bf16.mxu0 0
        %1252 = vmatpush1.bf16.msra.mxu0 0
        %1253 = vmatprep.subr.bf16.mxu0 0
        %1254 = vmatpush1.bf16.msra.mxu0 0
        %1255 = vmatprep.subr.bf16.mxu0 0
        %1256 = vmatpush1.bf16.msra.mxu0 %v1236
        %1257 = vmatprep.subr.bf16.mxu0 0
        %1258 = vmatpush2.bf16.msra.mxu0 0
        %1259 = vmatprep.subr.bf16.mxu0 0
        %1260 = vmatpush2.bf16.msra.mxu0 0
        %1261 = vmatprep.subr.bf16.mxu0 0
        %1262 = vmatpush2.bf16.msra.mxu0 0
        %1263 = vmatprep.subr.bf16.mxu0 0
        %1264 = vmatpush2.bf16.msra.mxu0 0
        %1265 = vmatprep.subr.bf16.mxu0 0
        %1266 = vmatpush2.bf16.msra.mxu0 0
        %1267 = vmatprep.subr.bf16.mxu0 0
        %1268 = vmatpush2.bf16.msra.mxu0 0
        %1269 = vmatprep.subr.bf16.mxu0 0
        %1270 = vmatpush2.bf16.msra.mxu0 0
        %1271 = vmatprep.subr.bf16.mxu0 0
        %1272 = vmatpush2.bf16.msra.mxu0 0
        %1273 = vmatprep.mubr.bf16.mxu0 0
        %1274 = vmatmul.mubr.bf16.gmra.mxu0 %v1239
        %v1275 = vpop.f32.mrf.mxu0
        %v1276 = vadd.f32 0.0, %v1275
        %v1277 = vpop.f32.mrf.mxu0
        %v1278 = vpop.f32.mrf.mxu0
        %v1279 = vpop.f32.mrf.mxu0
        %1280 = vdwg.mxu0
        %v1283 = vunpack.c.l.b16 %v924
        %v1284 = vunpack.c.l.b16 %v925
        %v1285 = vpack.c.b16 %v1284, %v1283
        %v1288 = vsel %vm815, %v923, 0
        %1290 = vmatprep.subr.bf16.mxu0 0
        %1291 = vmatpush1.bf16.msra.mxu0 0
        %1292 = vmatprep.subr.bf16.mxu0 0
        %1293 = vmatpush1.bf16.msra.mxu0 0
        %1294 = vmatprep.subr.bf16.mxu0 0
        %1295 = vmatpush1.bf16.msra.mxu0 0
        %1296 = vmatprep.subr.bf16.mxu0 0
        %1297 = vmatpush1.bf16.msra.mxu0 0
        %1298 = vmatprep.subr.bf16.mxu0 0
        %1299 = vmatpush1.bf16.msra.mxu0 0
        %1300 = vmatprep.subr.bf16.mxu0 0
        %1301 = vmatpush1.bf16.msra.mxu0 0
        %1302 = vmatprep.subr.bf16.mxu0 0
        %1303 = vmatpush1.bf16.msra.mxu0 0
        %1304 = vmatprep.subr.bf16.mxu0 0
        %1305 = vmatpush1.bf16.msra.mxu0 %v1285
        %1306 = vmatprep.subr.bf16.mxu0 0
        %1307 = vmatpush2.bf16.msra.mxu0 0
        %1308 = vmatprep.subr.bf16.mxu0 0
        %1309 = vmatpush2.bf16.msra.mxu0 0
        %1310 = vmatprep.subr.bf16.mxu0 0
        %1311 = vmatpush2.bf16.msra.mxu0 0
        %1312 = vmatprep.subr.bf16.mxu0 0
        %1313 = vmatpush2.bf16.msra.mxu0 0
        %1314 = vmatprep.subr.bf16.mxu0 0
        %1315 = vmatpush2.bf16.msra.mxu0 0
        %1316 = vmatprep.subr.bf16.mxu0 0
        %1317 = vmatpush2.bf16.msra.mxu0 0
        %1318 = vmatprep.subr.bf16.mxu0 0
        %1319 = vmatpush2.bf16.msra.mxu0 0
        %1320 = vmatprep.subr.bf16.mxu0 0
        %1321 = vmatpush2.bf16.msra.mxu0 0
        %1322 = vmatprep.mubr.bf16.mxu0 0
        %1323 = vmatmul.mubr.bf16.gmra.mxu0 %v1288
        %v1324 = vpop.f32.mrf.mxu0
        %v1325 = vadd.f32 %v1276, %v1324
        %v1326 = vpop.f32.mrf.mxu0
        %v1327 = vpop.f32.mrf.mxu0
        %v1328 = vpop.f32.mrf.mxu0
        %1329 = vdwg.mxu0
        %v1330 = vld [vmem:[%s9] sm:$0x1]
        %v1332 = vlaneseq
        %v1333 = vshrl.u32 %v1332, 7
        %v1334 = vsub.s32 0, %v1333
        %v1335 = vrot.slane %v1330, %v1334
        %v1337 = vadd.f32 %v1325, %v1335
        %v1338 = vadd.f32 %v1337, %v611
        %v1339 = vld [vmem:[%s10] sm:$0x1]
        %v1340 = vld [vmem:[%s11] sm:$0x1]
        %v1341 = vsel %vm637, %v1338, 0.0
        %1342 = vadd.xlane.f32.xlu0 %v1341
        %v1343 = vpop.xlane.xlu0 %1342
        %v1344 = vrcp.pop 32.0
        %v1345 = vmul.f32 %v1343, %v1344
        %v1346 = vsub.f32 %v1338, %v1345
        %v1347 = vmul.f32 %v1346, %v1346
        %v1348 = vsel %vm637, %v1347, 0.0
        %1349 = vadd.xlane.f32.xlu0 %v1348
        %v1350 = vpop.xlane.xlu0 %1349
        %v1351 = vmul.f32 %v1350, %v1344
        %v1352 = vadd.f32 %v1351, 1e-05
        %v1353 = vrsqrt.pop %v1352
        %v1354 = vmul.f32 %v1346, %v1353
        %v1356 = vlaneseq
        %v1357 = vshrl.u32 %v1356, 7
        %v1358 = vsub.s32 0, %v1357
        %v1359 = vrot.slane %v1339, %v1358
        %v1361 = vmul.f32 %v1354, %v1359
        %v1363 = vlaneseq
        %v1364 = vshrl.u32 %v1363, 7
        %v1365 = vsub.s32 0, %v1364
        %v1366 = vrot.slane %v1340, %v1365
        %v1368 = vadd.f32 %v1361, %v1366
        %v1369 = vpack.c.bf16 %v1368, %v1368
        %v1370 = vld [vmem:[%s12] sm:$0xf]
        %v1371 = vld [vmem:[%s12 + $0x4] sm:$0xf]
        %v1372 = vld [vmem:[%s12 + $0x8] sm:$0xf]
        %v1373 = vld [vmem:[%s12 + $0xc] sm:$0xf]
        %v1374 = vld [vmem:[%s13] sm:$0x1]
        %v1376 = vlaneseq
        %v1377 = vshrl.u32 %v1376, 7
        %v1378 = vsub.s32 0, %v1377
        %v1379 = vrot.slane %v1374, %v1378
        %v1385 = vunpack.c.l.b16 %v1370
        %v1386 = vunpack.c.l.b16 %v1371
        %v1387 = vunpack.c.l.b16 %v1372
        %v1388 = vunpack.c.l.b16 %v1373
        %v1389 = vpack.c.b16 %v1386, %v1385
        %v1390 = vpack.c.b16 %v1388, %v1387
        %v1394 = vsel %vm637, %v1369, 0
        %1396 = vmatprep.subr.bf16.mxu0 0
        %1397 = vmatpush1.bf16.msra.mxu0 0
        %1398 = vmatprep.subr.bf16.mxu0 0
        %1399 = vmatpush1.bf16.msra.mxu0 0
        %1400 = vmatprep.subr.bf16.mxu0 0
        %1401 = vmatpush1.bf16.msra.mxu0 0
        %1402 = vmatprep.subr.bf16.mxu0 0
        %1403 = vmatpush1.bf16.msra.mxu0 0
        %1404 = vmatprep.subr.bf16.mxu0 0
        %1405 = vmatpush1.bf16.msra.mxu0 0
        %1406 = vmatprep.subr.bf16.mxu0 0
        %1407 = vmatpush1.bf16.msra.mxu0 0
        %1408 = vmatprep.subr.bf16.mxu0 0
        %1409 = vmatpush1.bf16.msra.mxu0 %v1390
        %1410 = vmatprep.subr.bf16.mxu0 0
        %1411 = vmatpush1.bf16.msra.mxu0 %v1389
        %1412 = vmatprep.subr.bf16.mxu0 0
        %1413 = vmatpush2.bf16.msra.mxu0 0
        %1414 = vmatprep.subr.bf16.mxu0 0
        %1415 = vmatpush2.bf16.msra.mxu0 0
        %1416 = vmatprep.subr.bf16.mxu0 0
        %1417 = vmatpush2.bf16.msra.mxu0 0
        %1418 = vmatprep.subr.bf16.mxu0 0
        %1419 = vmatpush2.bf16.msra.mxu0 0
        %1420 = vmatprep.subr.bf16.mxu0 0
        %1421 = vmatpush2.bf16.msra.mxu0 0
        %1422 = vmatprep.subr.bf16.mxu0 0
        %1423 = vmatpush2.bf16.msra.mxu0 0
        %1424 = vmatprep.subr.bf16.mxu0 0
        %1425 = vmatpush2.bf16.msra.mxu0 0
        %1426 = vmatprep.subr.bf16.mxu0 0
        %1427 = vmatpush2.bf16.msra.mxu0 0
        %1428 = vmatprep.mubr.bf16.mxu0 0
        %1429 = vmatmul.mubr.bf16.gmra.mxu0 %v1394
        %v1430 = vpop.f32.mrf.mxu0
        %v1431 = vadd.f32 %v1379, %v1430
        %v1432 = vpop.f32.mrf.mxu0
        %v1433 = vpop.f32.mrf.mxu0
        %v1434 = vpop.f32.mrf.mxu0
        %1435 = vdwg.mxu0
        %v1436 = vmul.f32 %v1431, 0.5
        %v1437 = vmul.f32 %v1431, 0.044715
        %v1438 = vmul.f32 %v1437, %v1431
        %v1439 = vmul.f32 %v1438, %v1431
        %v1440 = vadd.f32 %v1431, %v1439
        %v1441 = vmul.f32 %v1440, 0.7978846
        %v1442 = vtanh.pop %v1441
        %v1443 = vadd.f32 %v1442, 1.0
        %v1444 = vmul.f32 %v1436, %v1443
        %v1445 = vpack.c.bf16 %v1444, %v1444
        %v1446 = vld [vmem:[%s14] sm:$0xf]
        %v1447 = vld [vmem:[%s14 + $0x4] sm:$0xf]
        %v1448 = vld [vmem:[%s14 + $0x8] sm:$0xf]
        %v1449 = vld [vmem:[%s14 + $0xc] sm:$0xf]
        %v1450 = vld [vmem:[%s14 + $0x10] sm:$0xf]
        %v1451 = vld [vmem:[%s14 + $0x14] sm:$0xf]
        %v1452 = vld [vmem:[%s14 + $0x18] sm:$0xf]
        %v1453 = vld [vmem:[%s14 + $0x1c] sm:$0xf]
        %v1454 = vld [vmem:[%s15] sm:$0x1]
        %v1456 = vlaneseq
        %v1457 = vshrl.u32 %v1456, 7
        %v1458 = vsub.s32 0, %v1457
        %v1459 = vrot.slane %v1454, %v1458
        %v1469 = vunpack.c.l.b16 %v1446
        %v1470 = vunpack.c.l.b16 %v1447
        %v1471 = vunpack.c.l.b16 %v1448
        %v1472 = vunpack.c.l.b16 %v1449
        %v1473 = vunpack.c.l.b16 %v1450
        %v1474 = vunpack.c.l.b16 %v1451
        %v1475 = vunpack.c.l.b16 %v1452
        %v1476 = vunpack.c.l.b16 %v1453
        %v1477 = vpack.c.b16 %v1470, %v1469
        %v1478 = vpack.c.b16 %v1472, %v1471
        %v1479 = vpack.c.b16 %v1474, %v1473
        %v1480 = vpack.c.b16 %v1476, %v1475
        %vm1485 = vcmask 523264
        %v1487 = vsel %vm1485, %v1445, 0
        %1489 = vmatprep.subr.bf16.mxu0 0
        %1490 = vmatpush1.bf16.msra.mxu0 0
        %1491 = vmatprep.subr.bf16.mxu0 0
        %1492 = vmatpush1.bf16.msra.mxu0 0
        %1493 = vmatprep.subr.bf16.mxu0 0
        %1494 = vmatpush1.bf16.msra.mxu0 0
        %1495 = vmatprep.subr.bf16.mxu0 0
        %1496 = vmatpush1.bf16.msra.mxu0 0
        %1497 = vmatprep.subr.bf16.mxu0 0
        %1498 = vmatpush1.bf16.msra.mxu0 %v1480
        %1499 = vmatprep.subr.bf16.mxu0 0
        %1500 = vmatpush1.bf16.msra.mxu0 %v1479
        %1501 = vmatprep.subr.bf16.mxu0 0
        %1502 = vmatpush1.bf16.msra.mxu0 %v1478
        %1503 = vmatprep.subr.bf16.mxu0 0
        %1504 = vmatpush1.bf16.msra.mxu0 %v1477
        %1505 = vmatprep.subr.bf16.mxu0 0
        %1506 = vmatpush2.bf16.msra.mxu0 0
        %1507 = vmatprep.subr.bf16.mxu0 0
        %1508 = vmatpush2.bf16.msra.mxu0 0
        %1509 = vmatprep.subr.bf16.mxu0 0
        %1510 = vmatpush2.bf16.msra.mxu0 0
        %1511 = vmatprep.subr.bf16.mxu0 0
        %1512 = vmatpush2.bf16.msra.mxu0 0
        %1513 = vmatprep.subr.bf16.mxu0 0
        %1514 = vmatpush2.bf16.msra.mxu0 0
        %1515 = vmatprep.subr.bf16.mxu0 0
        %1516 = vmatpush2.bf16.msra.mxu0 0
        %1517 = vmatprep.subr.bf16.mxu0 0
        %1518 = vmatpush2.bf16.msra.mxu0 0
        %1519 = vmatprep.subr.bf16.mxu0 0
        %1520 = vmatpush2.bf16.msra.mxu0 0
        %1521 = vmatprep.mubr.bf16.mxu0 0
        %1522 = vmatmul.mubr.bf16.gmra.mxu0 %v1487
        %v1523 = vpop.f32.mrf.mxu0
        %v1524 = vadd.f32 %v1459, %v1523
        %v1525 = vpop.f32.mrf.mxu0
        %v1526 = vpop.f32.mrf.mxu0
        %v1527 = vpop.f32.mrf.mxu0
        %1528 = vdwg.mxu0
        %v1529 = vadd.f32 %v1524, %v1368
        %v1530 = vld [vmem:[%s16] sm:$0x1]
        %v1531 = vld [vmem:[%s17] sm:$0x1]
        %v1532 = vsel %vm637, %v1529, 0.0
        %1533 = vadd.xlane.f32.xlu0 %v1532
        %v1534 = vpop.xlane.xlu0 %1533
        %v1535 = vmul.f32 %v1534, %v1344
        %v1536 = vsub.f32 %v1529, %v1535
        %v1537 = vmul.f32 %v1536, %v1536
        %v1538 = vsel %vm637, %v1537, 0.0
        %1539 = vadd.xlane.f32.xlu0 %v1538
        %v1540 = vpop.xlane.xlu0 %1539
        %v1541 = vmul.f32 %v1540, %v1344
        %v1542 = vadd.f32 %v1541, 1e-05
        %v1543 = vrsqrt.pop %v1542
        %v1544 = vmul.f32 %v1536, %v1543
        %v1546 = vlaneseq
        %v1547 = vshrl.u32 %v1546, 7
        %v1548 = vsub.s32 0, %v1547
        %v1549 = vrot.slane %v1530, %v1548
        %v1551 = vmul.f32 %v1544, %v1549
        %v1553 = vlaneseq
        %v1554 = vshrl.u32 %v1553, 7
        %v1555 = vsub.s32 0, %v1554
        %v1556 = vrot.slane %v1531, %v1555
        %v1558 = vadd.f32 %v1551, %v1556
        %1559 = vst.msk [vmem:[%s599] sm:$0xff] %vm637, %v1558
        %s1560 = sand.u32 %s444, 1
        %s1561 = scalar_lea.sflag [#allocation3], %s1560
        %s1562 = sand.u32 %s444, 1
        %s1563 = smul.addr %s1562, 8
        %s1564 = scalar_lea.vmem [#allocation2], %s1563
        // Predicated region
        $region93: #{tpu_custom_call.1} parent=91 // pred_check
          %p1565 = pneg %p454
        $region94: #{tpu_custom_call.1} parent=91 // pred_check_branch
          %1567 = sbr.rel (%p1565) target = $region96
        $region95: #{tpu_custom_call.1} parent=91 // pred_region
          %s1569 = ssub.s32 128, 128
          %1570 = vsyncadd %s1561, %s1569
          %s1571 = sadd.s32 %s37, %s36
          %s1572 = smul.addr %s1571, 128
          %s1573 = scalar_lea.hbm %s18, %s1572
          %s1575 = sshll.u32 %s1564, 4
          %s1576 = int_to_ptr.vmem [resolvable:$true] %s1575
          %1578 = dma.vmem_to_hbm [thread:$0]  %s1576, 128, %s1573, %s1561
        $region96: #{tpu_custom_call.1} parent=91 // pred_fallthru
          _
      $region92: #{tpu_custom_call.1} parent=5 // pred_fallthru
        _
      %p1579 = scmp.le.s32.totalorder 2, %s27
      // Predicated region
      $region97: #{tpu_custom_call.1} parent=5 // pred_check
        %p1580 = pneg %p1579
      $region98: #{tpu_custom_call.1} parent=5 // pred_check_branch
        %1582 = sbr.rel (%p1580) target = $region100
      $region99: #{tpu_custom_call.1} parent=5 // pred_region
        %s1583 = ssub.s32 %s27, 2
        // Predicated region
        $region101: #{tpu_custom_call.1} parent=99 // pred_check
          %p1584 = pneg %p460
        $region102: #{tpu_custom_call.1} parent=99 // pred_check_branch
          %1586 = sbr.rel (%p1584) target = $region104
        $region103: #{tpu_custom_call.1} parent=99 // pred_region
          %s1587 = sand.u32 %s445, 1
          %s1588 = scalar_lea.sflag [#allocation3], %s1587
          %s1589 = sand.u32 %s445, 1
          %s1590 = smul.addr %s1589, 8
          %s1591 = scalar_lea.vmem [#allocation2], %s1590
          %1592 = dma.done %s1588, 128
        $region104: #{tpu_custom_call.1} parent=99 // pred_fallthru
          _
      $region100: #{tpu_custom_call.1} parent=5 // pred_fallthru
        _
    $region6: #{tpu_custom_call.1} parent=1 // loop_footer
      %s31 = sadd.s32 1, %s27
    $region7: #{tpu_custom_call.1} parent=1 // loop_footer_branch
      %26 = sbr.rel target = $region3
    $region8: #{tpu_custom_call.1} parent=1 // loop_exit
      _
    %1593 = vsyncpa [#allocation3], 1
    %s1594 = scalar_lea.sflag [#allocation3], 1
    %1595 = vsyncpa %s1594, 1

// kernel: tpu_custom_call.1
$region0: #{tpu_custom_call.1}
  #allocation0 [shape = 'u32[]', space=smem, size = 0x4, offset = 0x4, fixed_abs, tag = 'smem constant byte address 0x4 - core index']
  #allocation1 [shape = 'u32[144,128]{1,0:T(1,128)}', space=vmem, size = 0x12000, scoped, tag = 'internal scratch']
  %s0 = inlined_call_operand.vmem [shape: f32[2,8,32], index: 0, kind: input, shape index: {}]
  %s1 = inlined_call_operand.vmem [shape: f32[2,1,1,8], index: 1, kind: input, shape index: {}]
  %s2 = inlined_call_operand.vmem [shape: bf16[2,32,16], index: 2, kind: input, shape index: {}]
  %s3 = inlined_call_operand.vmem [shape: f32[2,1,16], index: 3, kind: input, shape index: {}]
  %s4 = inlined_call_operand.vmem [shape: bf16[2,32,16], index: 4, kind: input, shape index: {}]
  %s5 = inlined_call_operand.vmem [shape: f32[2,1,16], index: 5, kind: input, shape index: {}]
  %s6 = inlined_call_operand.vmem [shape: bf16[2,32,16], index: 6, kind: input, shape index: {}]
  %s7 = inlined_call_operand.vmem [shape: f32[2,1,16], index: 7, kind: input, shape index: {}]
  %s8 = inlined_call_operand.vmem [shape: bf16[2,16,32], index: 8, kind: input, shape index: {}]
  %s9 = inlined_call_operand.vmem [shape: f32[1,32], index: 9, kind: input, shape index: {}]
  %s10 = inlined_call_operand.vmem [shape: f32[1,32], index: 10, kind: input, shape index: {}]
  %s11 = inlined_call_operand.vmem [shape: f32[1,32], index: 11, kind: input, shape index: {}]
  %s12 = inlined_call_operand.vmem [shape: bf16[32,64], index: 12, kind: input, shape index: {}]
  %s13 = inlined_call_operand.vmem [shape: f32[1,64], index: 13, kind: input, shape index: {}]
  %s14 = inlined_call_operand.vmem [shape: bf16[64,32], index: 14, kind: input, shape index: {}]
  %s15 = inlined_call_operand.vmem [shape: f32[1,32], index: 15, kind: input, shape index: {}]
  %s16 = inlined_call_operand.vmem [shape: f32[1,32], index: 16, kind: input, shape index: {}]
  %s17 = inlined_call_operand.vmem [shape: f32[1,32], index: 17, kind: input, shape index: {}]
  %s18 = inlined_call_operand.hbm [shape: f32[2,8,32], index: 18, kind: output, shape index: {}]
  %s19 = sld [smem:[#allocation0]]
  $region105: #{tpu_custom_call.1} parent=0
    _
  %s21 = ssub.s32 1, %s19
  %s22 = scalar_select 0, %s21, %s19
  $region1: #{tpu_custom_call.1} parent=0
    #allocation2 [shape = 'u8[8192]{0}', space=vmem, size = 0x2000, scoped, tag = 'output window, operand 0']
    #allocation3 [shape = 's32[2]{0}', space=sflag, size = 0x8, scoped, tag = 'scoped memory for tpu_custom_call.1']
    %23 = vsyncpa [#allocation3], 0
    %s24 = scalar_lea.sflag [#allocation3], 1
    %25 = vsyncpa %s24, 0
    loop: start=0, step=1, limit=4
    $region2: #{tpu_custom_call.1} parent=1 // loop_pre_header
      _
    $region3: #{tpu_custom_call.1} parent=1 // loop_header
      %s27 = sphi 0, %s31
      %p28 = scmp.ge.s32.totalorder %s27, 4
      %s34 = sphi 0, %s46
      %s35 = sphi 0, %s42
      %s36 = sphi 0, %s34
      %s37 = sphi 0, %s35
      %s38 = sphi 0, %s36
      %s39 = sphi 0, %s37
      %s51 = sphi 0, %s53
      %s54 = sphi 0, %s51
      %s55 = sphi 0, %s54
      %s71 = sphi 0, %s55
      %s77 = sphi 0, %s79
      %s80 = sphi 0, %s77
      %s81 = sphi 0, %s80
      %s97 = sphi 0, %s81
      %s101 = sphi 0, %s101
      %s103 = sphi 0, %s101
      %s104 = sphi 0, %s103
      %s118 = sphi 0, %s104
      %s122 = sphi 0, %s122
      %s124 = sphi 0, %s122
      %s125 = sphi 0, %s124
      %s139 = sphi 0, %s125
      %s143 = sphi 0, %s143
      %s145 = sphi 0, %s143
      %s146 = sphi 0, %s145
      %s160 = sphi 0, %s146
      %s164 = sphi 0, %s164
      %s166 = sphi 0, %s164
      %s167 = sphi 0, %s166
      %s181 = sphi 0, %s167
      %s185 = sphi 0, %s185
      %s187 = sphi 0, %s185
      %s188 = sphi 0, %s187
      %s202 = sphi 0, %s188
      %s206 = sphi 0, %s206
      %s208 = sphi 0, %s206
      %s209 = sphi 0, %s208
      %s223 = sphi 0, %s209
      %s227 = sphi 0, %s227
      %s229 = sphi 0, %s227
      %s230 = sphi 0, %s229
      %s244 = sphi 0, %s230
      %s248 = sphi 0, %s248
      %s250 = sphi 0, %s248
      %s251 = sphi 0, %s250
      %s265 = sphi 0, %s251
      %s269 = sphi 0, %s269
      %s271 = sphi 0, %s269
      %s272 = sphi 0, %s271
      %s286 = sphi 0, %s272
      %s290 = sphi 0, %s290
      %s292 = sphi 0, %s290
      %s293 = sphi 0, %s292
      %s307 = sphi 0, %s293
      %s311 = sphi 0, %s311
      %s313 = sphi 0, %s311
      %s314 = sphi 0, %s313
      %s328 = sphi 0, %s314
      %s332 = sphi 0, %s332
      %s334 = sphi 0, %s332
      %s335 = sphi 0, %s334
      %s349 = sphi 0, %s335
      %s353 = sphi 0, %s353
      %s355 = sphi 0, %s353
      %s356 = sphi 0, %s355
      %s370 = sphi 0, %s356
      %s374 = sphi 0, %s374
      %s376 = sphi 0, %s374
      %s377 = sphi 0, %s376
      %s391 = sphi 0, %s377
      %s395 = sphi 0, %s395
      %s397 = sphi 0, %s395
      %s398 = sphi 0, %s397
      %s412 = sphi 0, %s398
      %s416 = sphi 0, %s416
      %s418 = sphi 0, %s416
      %s419 = sphi 0, %s418
      %s433 = sphi 0, %s419
      %s441 = sphi 0, %s443
      %s444 = sphi 0, %s441
      %s445 = sphi 0, %s444
      %s461 = sphi 0, %s445
    $region4: #{tpu_custom_call.1} parent=1 // loop_header_branch
      %30 = sbr.rel (%p28) target = $region8
    $region5: #{tpu_custom_call.1} parent=1 // loop_body
      %s32 = ssub.s32 %s27, 1
      %s33 = ssub.s32 %s27, 2
      %s40 = sadd.s32 1, %s35
      %p41 = scmp.ge.s32.totalorder %s40, 1
      %s42 = scalar_select %p41, 0, %s40
      %s43 = sadd.s32 1, %s34
      %s44 = scalar_select %p41, %s43, %s34
      %p45 = scmp.ge.s32.totalorder %s44, 2
      %s46 = scalar_select %p45, 0, %s44
      %s47 = ssub.s32 %s34, %s46
      %s48 = ssub.s32 %s35, %s42
      %s49 = sor.u32 %s47, %s48
      %p50 = scmp.eq.s32.totalorder %s49, 0
      %s52 = sadd.s32 %s51, 1
      %s53 = scalar_select %p50, %s51, %s52
      %p56 = pneg %p50
      %p57 = scmp.eq.s32.totalorder %s27, 1
      %p58 = por %p56, %p57
      %p59 = scmp.ne.s32.totalorder %s51, %s54
      %p60 = scmp.eq.s32.totalorder %s27, 0
      %p61 = por %p59, %p60
      %p62 = scmp.ne.s32.totalorder %s51, %s54
      %p63 = scmp.eq.s32.totalorder %s32, 1
      %p64 = por %p62, %p63
      %p65 = scmp.ne.s32.totalorder %s54, %s55
      %p66 = scmp.eq.s32.totalorder %s32, 0
      %p67 = por %p65, %p66
      %p68 = scmp.ne.s32.totalorder %s54, %s55
      %p69 = scmp.eq.s32.totalorder %s33, 1
      %p70 = por %p68, %p69
      %p72 = scmp.ne.s32.totalorder %s55, %s71
      %p73 = scmp.eq.s32.totalorder %s33, 0
      %p74 = por %p72, %p73
      %s75 = ssub.s32 %s34, %s46
      %p76 = scmp.eq.s32.totalorder %s75, 0
      %s78 = sadd.s32 %s77, 1
      %s79 = scalar_select %p76, %s77, %s78
      %p82 = pneg %p76
      %p83 = scmp.eq.s32.totalorder %s27, 1
      %p84 = por %p82, %p83
      %p85 = scmp.ne.s32.totalorder %s77, %s80
      %p86 = scmp.eq.s32.totalorder %s27, 0
      %p87 = por %p85, %p86
      %p88 = scmp.ne.s32.totalorder %s77, %s80
      %p89 = scmp.eq.s32.totalorder %s32, 1
      %p90 = por %p88, %p89
      %p91 = scmp.ne.s32.totalorder %s80, %s81
      %p92 = scmp.eq.s32.totalorder %s32, 0
      %p93 = por %p91, %p92
      %p94 = scmp.ne.s32.totalorder %s80, %s81
      %p95 = scmp.eq.s32.totalorder %s33, 1
      %p96 = por %p94, %p95
      %p98 = scmp.ne.s32.totalorder %s81, %s97
      %p99 = scmp.eq.s32.totalorder %s33, 0
      %p100 = por %p98, %p99
      %s102 = sadd.s32 %s101, 1
      %p105 = scmp.eq.s32.totalorder %s27, 1
      %p106 = scmp.ne.s32.totalorder %s101, %s103
      %p107 = scmp.eq.s32.totalorder %s27, 0
      %p108 = por %p106, %p107
      %p109 = scmp.ne.s32.totalorder %s101, %s103
      %p110 = scmp.eq.s32.totalorder %s32, 1
      %p111 = por %p109, %p110
      %p112 = scmp.ne.s32.totalorder %s103, %s104
      %p113 = scmp.eq.s32.totalorder %s32, 0
      %p114 = por %p112, %p113
      %p115 = scmp.ne.s32.totalorder %s103, %s104
      %p116 = scmp.eq.s32.totalorder %s33, 1
      %p117 = por %p115, %p116
      %p119 = scmp.ne.s32.totalorder %s104, %s118
      %p120 = scmp.eq.s32.totalorder %s33, 0
      %p121 = por %p119, %p120
      %s123 = sadd.s32 %s122, 1
      %p126 = scmp.eq.s32.totalorder %s27, 1
      %p127 = scmp.ne.s32.totalorder %s122, %s124
      %p128 = scmp.eq.s32.totalorder %s27, 0
      %p129 = por %p127, %p128
      %p130 = scmp.ne.s32.totalorder %s122, %s124
      %p131 = scmp.eq.s32.totalorder %s32, 1
      %p132 = por %p130, %p131
      %p133 = scmp.ne.s32.totalorder %s124, %s125
      %p134 = scmp.eq.s32.totalorder %s32, 0
      %p135 = por %p133, %p134
      %p136 = scmp.ne.s32.totalorder %s124, %s125
      %p137 = scmp.eq.s32.totalorder %s33, 1
      %p138 = por %p136, %p137
      %p140 = scmp.ne.s32.totalorder %s125, %s139
      %p141 = scmp.eq.s32.totalorder %s33, 0
      %p142 = por %p140, %p141
      %s144 = sadd.s32 %s143, 1
      %p147 = scmp.eq.s32.totalorder %s27, 1
      %p148 = scmp.ne.s32.totalorder %s143, %s145
      %p149 = scmp.eq.s32.totalorder %s27, 0
      %p150 = por %p148, %p149
      %p151 = scmp.ne.s32.totalorder %s143, %s145
      %p152 = scmp.eq.s32.totalorder %s32, 1
      %p153 = por %p151, %p152
      %p154 = scmp.ne.s32.totalorder %s145, %s146
      %p155 = scmp.eq.s32.totalorder %s32, 0
      %p156 = por %p154, %p155
      %p157 = scmp.ne.s32.totalorder %s145, %s146
      %p158 = scmp.eq.s32.totalorder %s33, 1
      %p159 = por %p157, %p158
      %p161 = scmp.ne.s32.totalorder %s146, %s160
      %p162 = scmp.eq.s32.totalorder %s33, 0
      %p163 = por %p161, %p162
      %s165 = sadd.s32 %s164, 1
      %p168 = scmp.eq.s32.totalorder %s27, 1
      %p169 = scmp.ne.s32.totalorder %s164, %s166
      %p170 = scmp.eq.s32.totalorder %s27, 0
      %p171 = por %p169, %p170
      %p172 = scmp.ne.s32.totalorder %s164, %s166
      %p173 = scmp.eq.s32.totalorder %s32, 1
      %p174 = por %p172, %p173
      %p175 = scmp.ne.s32.totalorder %s166, %s167
      %p176 = scmp.eq.s32.totalorder %s32, 0
      %p177 = por %p175, %p176
      %p178 = scmp.ne.s32.totalorder %s166, %s167
      %p179 = scmp.eq.s32.totalorder %s33, 1
      %p180 = por %p178, %p179
      %p182 = scmp.ne.s32.totalorder %s167, %s181
      %p183 = scmp.eq.s32.totalorder %s33, 0
      %p184 = por %p182, %p183
      %s186 = sadd.s32 %s185, 1
      %p189 = scmp.eq.s32.totalorder %s27, 1
      %p190 = scmp.ne.s32.totalorder %s185, %s187
      %p191 = scmp.eq.s32.totalorder %s27, 0
      %p192 = por %p190, %p191
      %p193 = scmp.ne.s32.totalorder %s185, %s187
      %p194 = scmp.eq.s32.totalorder %s32, 1
      %p195 = por %p193, %p194
      %p196 = scmp.ne.s32.totalorder %s187, %s188
      %p197 = scmp.eq.s32.totalorder %s32, 0
      %p198 = por %p196, %p197
      %p199 = scmp.ne.s32.totalorder %s187, %s188
      %p200 = scmp.eq.s32.totalorder %s33, 1
      %p201 = por %p199, %p200
      %p203 = scmp.ne.s32.totalorder %s188, %s202
      %p204 = scmp.eq.s32.totalorder %s33, 0
      %p205 = por %p203, %p204
      %s207 = sadd.s32 %s206, 1
      %p210 = scmp.eq.s32.totalorder %s27, 1
      %p211 = scmp.ne.s32.totalorder %s206, %s208
      %p212 = scmp.eq.s32.totalorder %s27, 0
      %p213 = por %p211, %p212
      %p214 = scmp.ne.s32.totalorder %s206, %s208
      %p215 = scmp.eq.s32.totalorder %s32, 1
      %p216 = por %p214, %p215
      %p217 = scmp.ne.s32.totalorder %s208, %s209
      %p218 = scmp.eq.s32.totalorder %s32, 0
      %p219 = por %p217, %p218
      %p220 = scmp.ne.s32.totalorder %s208, %s209
      %p221 = scmp.eq.s32.totalorder %s33, 1
      %p222 = por %p220, %p221
      %p224 = scmp.ne.s32.totalorder %s209, %s223
      %p225 = scmp.eq.s32.totalorder %s33, 0
      %p226 = por %p224, %p225
      %s228 = sadd.s32 %s227, 1
      %p231 = scmp.eq.s32.totalorder %s27, 1
      %p232 = scmp.ne.s32.totalorder %s227, %s229
      %p233 = scmp.eq.s32.totalorder %s27, 0
      %p234 = por %p232, %p233
      %p235 = scmp.ne.s32.totalorder %s227, %s229
      %p236 = scmp.eq.s32.totalorder %s32, 1
      %p237 = por %p235, %p236
      %p238 = scmp.ne.s32.totalorder %s229, %s230
      %p239 = scmp.eq.s32.totalorder %s32, 0
      %p240 = por %p238, %p239
      %p241 = scmp.ne.s32.totalorder %s229, %s230
      %p242 = scmp.eq.s32.totalorder %s33, 1
      %p243 = por %p241, %p242
      %p245 = scmp.ne.s32.totalorder %s230, %s244
      %p246 = scmp.eq.s32.totalorder %s33, 0
      %p247 = por %p245, %p246
      %s249 = sadd.s32 %s248, 1
      %p252 = scmp.eq.s32.totalorder %s27, 1
      %p253 = scmp.ne.s32.totalorder %s248, %s250
      %p254 = scmp.eq.s32.totalorder %s27, 0
      %p255 = por %p253, %p254
      %p256 = scmp.ne.s32.totalorder %s248, %s250
      %p257 = scmp.eq.s32.totalorder %s32, 1
      %p258 = por %p256, %p257
      %p259 = scmp.ne.s32.totalorder %s250, %s251
      %p260 = scmp.eq.s32.totalorder %s32, 0
      %p261 = por %p259, %p260
      %p262 = scmp.ne.s32.totalorder %s250, %s251
      %p263 = scmp.eq.s32.totalorder %s33, 1
      %p264 = por %p262, %p263
      %p266 = scmp.ne.s32.totalorder %s251, %s265
      %p267 = scmp.eq.s32.totalorder %s33, 0
      %p268 = por %p266, %p267
      %s270 = sadd.s32 %s269, 1
      %p273 = scmp.eq.s32.totalorder %s27, 1
      %p274 = scmp.ne.s32.totalorder %s269, %s271
      %p275 = scmp.eq.s32.totalorder %s27, 0
      %p276 = por %p274, %p275
      %p277 = scmp.ne.s32.totalorder %s269, %s271
      %p278 = scmp.eq.s32.totalorder %s32, 1
      %p279 = por %p277, %p278
      %p280 = scmp.ne.s32.totalorder %s271, %s272
      %p281 = scmp.eq.s32.totalorder %s32, 0
      %p282 = por %p280, %p281
      %p283 = scmp.ne.s32.totalorder %s271, %s272
      %p284 = scmp.eq.s32.totalorder %s33, 1
      %p285 = por %p283, %p284
      %p287 = scmp.ne.s32.totalorder %s272, %s286
      %p288 = scmp.eq.s32.totalorder %s33, 0
      %p289 = por %p287, %p288
      %s291 = sadd.s32 %s290, 1
      %p294 = scmp.eq.s32.totalorder %s27, 1
      %p295 = scmp.ne.s32.totalorder %s290, %s292
      %p296 = scmp.eq.s32.totalorder %s27, 0
      %p297 = por %p295, %p296
      %p298 = scmp.ne.s32.totalorder %s290, %s292
      %p299 = scmp.eq.s32.totalorder %s32, 1
      %p300 = por %p298, %p299
      %p301 = scmp.ne.s32.totalorder %s292, %s293
      %p302 = scmp.eq.s32.totalorder %s32, 0
      %p303 = por %p301, %p302
      %p304 = scmp.ne.s32.totalorder %s292, %s293
      %p305 = scmp.eq.s32.totalorder %s33, 1
      %p306 = por %p304, %p305
      %p308 = scmp.ne.s32.totalorder %s293, %s307
      %p309 = scmp.eq.s32.totalorder %s33, 0
      %p310 = por %p308, %p309
      %s312 = sadd.s32 %s311, 1
      %p315 = scmp.eq.s32.totalorder %s27, 1
      %p316 = scmp.ne.s32.totalorder %s311, %s313
      %p317 = scmp.eq.s32.totalorder %s27, 0
      %p318 = por %p316, %p317
      %p319 = scmp.ne.s32.totalorder %s311, %s313
      %p320 = scmp.eq.s32.totalorder %s32, 1
      %p321 = por %p319, %p320
      %p322 = scmp.ne.s32.totalorder %s313, %s314
      %p323 = scmp.eq.s32.totalorder %s32, 0
      %p324 = por %p322, %p323
      %p325 = scmp.ne.s32.totalorder %s313, %s314
      %p326 = scmp.eq.s32.totalorder %s33, 1
      %p327 = por %p325, %p326
      %p329 = scmp.ne.s32.totalorder %s314, %s328
      %p330 = scmp.eq.s32.totalorder %s33, 0
      %p331 = por %p329, %p330
      %s333 = sadd.s32 %s332, 1
      %p336 = scmp.eq.s32.totalorder %s27, 1
      %p337 = scmp.ne.s32.totalorder %s332, %s334
      %p338 = scmp.eq.s32.totalorder %s27, 0
      %p339 = por %p337, %p338
      %p340 = scmp.ne.s32.totalorder %s332, %s334
      %p341 = scmp.eq.s32.totalorder %s32, 1
      %p342 = por %p340, %p341
      %p343 = scmp.ne.s32.totalorder %s334, %s335
      %p344 = scmp.eq.s32.totalorder %s32, 0
      %p345 = por %p343, %p344
      %p346 = scmp.ne.s32.totalorder %s334, %s335
      %p347 = scmp.eq.s32.totalorder %s33, 1
      %p348 = por %p346, %p347
      %p350 = scmp.ne.s32.totalorder %s335, %s349
      %p351 = scmp.eq.s32.totalorder %s33, 0
      %p352 = por %p350, %p351
      %s354 = sadd.s32 %s353, 1
      %p357 = scmp.eq.s32.totalorder %s27, 1
      %p358 = scmp.ne.s32.totalorder %s353, %s355
      %p359 = scmp.eq.s32.totalorder %s27, 0
      %p360 = por %p358, %p359
      %p361 = scmp.ne.s32.totalorder %s353, %s355
      %p362 = scmp.eq.s32.totalorder %s32, 1
      %p363 = por %p361, %p362
      %p364 = scmp.ne.s32.totalorder %s355, %s356
      %p365 = scmp.eq.s32.totalorder %s32, 0
      %p366 = por %p364, %p365
      %p367 = scmp.ne.s32.totalorder %s355, %s356
      %p368 = scmp.eq.s32.totalorder %s33, 1
      %p369 = por %p367, %p368
      %p371 = scmp.ne.s32.totalorder %s356, %s370
      %p372 = scmp.eq.s32.totalorder %s33, 0
      %p373 = por %p371, %p372
      %s375 = sadd.s32 %s374, 1
      %p378 = scmp.eq.s32.totalorder %s27, 1
      %p379 = scmp.ne.s32.totalorder %s374, %s376
      %p380 = scmp.eq.s32.totalorder %s27, 0
      %p381 = por %p379, %p380
      %p382 = scmp.ne.s32.totalorder %s374, %s376
      %p383 = scmp.eq.s32.totalorder %s32, 1
      %p384 = por %p382, %p383
      %p385 = scmp.ne.s32.totalorder %s376, %s377
      %p386 = scmp.eq.s32.totalorder %s32, 0
      %p387 = por %p385, %p386
      %p388 = scmp.ne.s32.totalorder %s376, %s377
      %p389 = scmp.eq.s32.totalorder %s33, 1
      %p390 = por %p388, %p389
      %p392 = scmp.ne.s32.totalorder %s377, %s391
      %p393 = scmp.eq.s32.totalorder %s33, 0
      %p394 = por %p392, %p393
      %s396 = sadd.s32 %s395, 1
      %p399 = scmp.eq.s32.totalorder %s27, 1
      %p400 = scmp.ne.s32.totalorder %s395, %s397
      %p401 = scmp.eq.s32.totalorder %s27, 0
      %p402 = por %p400, %p401
      %p403 = scmp.ne.s32.totalorder %s395, %s397
      %p404 = scmp.eq.s32.totalorder %s32, 1
      %p405 = por %p403, %p404
      %p406 = scmp.ne.s32.totalorder %s397, %s398
      %p407 = scmp.eq.s32.totalorder %s32, 0
      %p408 = por %p406, %p407
      %p409 = scmp.ne.s32.totalorder %s397, %s398
      %p410 = scmp.eq.s32.totalorder %s33, 1
      %p411 = por %p409, %p410
      %p413 = scmp.ne.s32.totalorder %s398, %s412
      %p414 = scmp.eq.s32.totalorder %s33, 0
      %p415 = por %p413, %p414
      %s417 = sadd.s32 %s416, 1
      %p420 = scmp.eq.s32.totalorder %s27, 1
      %p421 = scmp.ne.s32.totalorder %s416, %s418
      %p422 = scmp.eq.s32.totalorder %s27, 0
      %p423 = por %p421, %p422
      %p424 = scmp.ne.s32.totalorder %s416, %s418
      %p425 = scmp.eq.s32.totalorder %s32, 1
      %p426 = por %p424, %p425
      %p427 = scmp.ne.s32.totalorder %s418, %s419
      %p428 = scmp.eq.s32.totalorder %s32, 0
      %p429 = por %p427, %p428
      %p430 = scmp.ne.s32.totalorder %s418, %s419
      %p431 = scmp.eq.s32.totalorder %s33, 1
      %p432 = por %p430, %p431
      %p434 = scmp.ne.s32.totalorder %s419, %s433
      %p435 = scmp.eq.s32.totalorder %s33, 0
      %p436 = por %p434, %p435
      %s437 = ssub.s32 %s34, %s46
      %s438 = ssub.s32 %s35, %s42
      %s439 = sor.u32 %s437, %s438
      %p440 = scmp.eq.s32.totalorder %s439, 0
      %s442 = sadd.s32 %s441, 1
      %s443 = scalar_select %p440, %s441, %s442
      %p446 = pneg %p440
      %p447 = scmp.eq.s32.totalorder %s27, 1
      %p448 = por %p446, %p447
      %p449 = scmp.ne.s32.totalorder %s441, %s444
      %p450 = scmp.eq.s32.totalorder %s27, 0
      %p451 = por %p449, %p450
      %p452 = scmp.ne.s32.totalorder %s441, %s444
      %p453 = scmp.eq.s32.totalorder %s32, 1
      %p454 = por %p452, %p453
      %p455 = scmp.ne.s32.totalorder %s444, %s445
      %p456 = scmp.eq.s32.totalorder %s32, 0
      %p457 = por %p455, %p456
      %p458 = scmp.ne.s32.totalorder %s444, %s445
      %p459 = scmp.eq.s32.totalorder %s33, 1
      %p460 = por %p458, %p459
      %p462 = scmp.ne.s32.totalorder %s445, %s461
      %p463 = scmp.eq.s32.totalorder %s33, 0
      %p464 = por %p462, %p463
      %p465 = scmp.le.s32.totalorder 1, %s27
      %p466 = scmp.lt.s32.totalorder %s27, 3
      %p467 = pnand %p465, %p466
      %p468 = pneg %p467
      // Predicated region
      $region9: #{tpu_custom_call.1} parent=5 // pred_check
        _
      $region10: #{tpu_custom_call.1} parent=5 // pred_check_branch
        %470 = sbr.rel (%p467) target = $region12
      $region11: #{tpu_custom_call.1} parent=5 // pred_region
        %s471 = ssub.s32 %s27, 1
        // Predicated region
        $region13: #{tpu_custom_call.1} parent=11 // pred_check
          %p472 = pneg %p114
        $region14: #{tpu_custom_call.1} parent=11 // pred_check_branch
          %474 = sbr.rel (%p472) target = $region16
        $region15: #{tpu_custom_call.1} parent=11 // pred_region
          _
        $region16: #{tpu_custom_call.1} parent=11 // pred_fallthru
          _
        // Predicated region
        $region17: #{tpu_custom_call.1} parent=11 // pred_check
          %p475 = pneg %p135
        $region18: #{tpu_custom_call.1} parent=11 // pred_check_branch
          %477 = sbr.rel (%p475) target = $region20
        $region19: #{tpu_custom_call.1} parent=11 // pred_region
          _
        $region20: #{tpu_custom_call.1} parent=11 // pred_fallthru
          _
        // Predicated region
        $region21: #{tpu_custom_call.1} parent=11 // pred_check
          %p478 = pneg %p156
        $region22: #{tpu_custom_call.1} parent=11 // pred_check_branch
          %480 = sbr.rel (%p478) target = $region24
        $region23: #{tpu_custom_call.1} parent=11 // pred_region
          _
        $region24: #{tpu_custom_call.1} parent=11 // pred_fallthru
          _
        // Predicated region
        $region25: #{tpu_custom_call.1} parent=11 // pred_check
          %p481 = pneg %p177
        $region26: #{tpu_custom_call.1} parent=11 // pred_check_branch
          %483 = sbr.rel (%p481) target = $region28
        $region27: #{tpu_custom_call.1} parent=11 // pred_region
          _
        $region28: #{tpu_custom_call.1} parent=11 // pred_fallthru
          _
        // Predicated region
        $region29: #{tpu_custom_call.1} parent=11 // pred_check
          %p484 = pneg %p198
        $region30: #{tpu_custom_call.1} parent=11 // pred_check_branch
          %486 = sbr.rel (%p484) target = $region32
        $region31: #{tpu_custom_call.1} parent=11 // pred_region
          _
        $region32: #{tpu_custom_call.1} parent=11 // pred_fallthru
          _
        // Predicated region
        $region33: #{tpu_custom_call.1} parent=11 // pred_check
          %p487 = pneg %p219
        $region34: #{tpu_custom_call.1} parent=11 // pred_check_branch
          %489 = sbr.rel (%p487) target = $region36
        $region35: #{tpu_custom_call.1} parent=11 // pred_region
          _
        $region36: #{tpu_custom_call.1} parent=11 // pred_fallthru
          _
        // Predicated region
        $region37: #{tpu_custom_call.1} parent=11 // pred_check
          %p490 = pneg %p240
        $region38: #{tpu_custom_call.1} parent=11 // pred_check_branch
          %492 = sbr.rel (%p490) target = $region40
        $region39: #{tpu_custom_call.1} parent=11 // pred_region
          _
        $region40: #{tpu_custom_call.1} parent=11 // pred_fallthru
          _
        // Predicated region
        $region41: #{tpu_custom_call.1} parent=11 // pred_check
          %p493 = pneg %p261
        $region42: #{tpu_custom_call.1} parent=11 // pred_check_branch
          %495 = sbr.rel (%p493) target = $region44
        $region43: #{tpu_custom_call.1} parent=11 // pred_region
          _
        $region44: #{tpu_custom_call.1} parent=11 // pred_fallthru
          _
        // Predicated region
        $region45: #{tpu_custom_call.1} parent=11 // pred_check
          %p496 = pneg %p282
        $region46: #{tpu_custom_call.1} parent=11 // pred_check_branch
          %498 = sbr.rel (%p496) target = $region48
        $region47: #{tpu_custom_call.1} parent=11 // pred_region
          _
        $region48: #{tpu_custom_call.1} parent=11 // pred_fallthru
          _
        // Predicated region
        $region49: #{tpu_custom_call.1} parent=11 // pred_check
          %p499 = pneg %p303
        $region50: #{tpu_custom_call.1} parent=11 // pred_check_branch
          %501 = sbr.rel (%p499) target = $region52
        $region51: #{tpu_custom_call.1} parent=11 // pred_region
          _
        $region52: #{tpu_custom_call.1} parent=11 // pred_fallthru
          _
        // Predicated region
        $region53: #{tpu_custom_call.1} parent=11 // pred_check
          %p502 = pneg %p324
        $region54: #{tpu_custom_call.1} parent=11 // pred_check_branch
          %504 = sbr.rel (%p502) target = $region56
        $region55: #{tpu_custom_call.1} parent=11 // pred_region
          _
        $region56: #{tpu_custom_call.1} parent=11 // pred_fallthru
          _
        // Predicated region
        $region57: #{tpu_custom_call.1} parent=11 // pred_check
          %p505 = pneg %p345
        $region58: #{tpu_custom_call.1} parent=11 // pred_check_branch
          %507 = sbr.rel (%p505) target = $region60
        $region59: #{tpu_custom_call.1} parent=11 // pred_region
          _
        $region60: #{tpu_custom_call.1} parent=11 // pred_fallthru
          _
        // Predicated region
        $region61: #{tpu_custom_call.1} parent=11 // pred_check
          %p508 = pneg %p366
        $region62: #{tpu_custom_call.1} parent=11 // pred_check_branch
          %510 = sbr.rel (%p508) target = $region64
        $region63: #{tpu_custom_call.1} parent=11 // pred_region
          _
        $region64: #{tpu_custom_call.1} parent=11 // pred_fallthru
          _
        // Predicated region
        $region65: #{tpu_custom_call.1} parent=11 // pred_check
          %p511 = pneg %p387
        $region66: #{tpu_custom_call.1} parent=11 // pred_check_branch
          %513 = sbr.rel (%p511) target = $region68
        $region67: #{tpu_custom_call.1} parent=11 // pred_region
          _
        $region68: #{tpu_custom_call.1} parent=11 // pred_fallthru
          _
        // Predicated region
        $region69: #{tpu_custom_call.1} parent=11 // pred_check
          %p514 = pneg %p408
        $region70: #{tpu_custom_call.1} parent=11 // pred_check_branch
          %516 = sbr.rel (%p514) target = $region72
        $region71: #{tpu_custom_call.1} parent=11 // pred_region
          _
        $region72: #{tpu_custom_call.1} parent=11 // pred_fallthru
          _
        // Predicated region
        $region73: #{tpu_custom_call.1} parent=11 // pred_check
          %p517 = pneg %p429
        $region74: #{tpu_custom_call.1} parent=11 // pred_check_branch
          %519 = sbr.rel (%p517) target = $region76
        $region75: #{tpu_custom_call.1} parent=11 // pred_region
          _
        $region76: #{tpu_custom_call.1} parent=11 // pred_fallthru
          _
      $region12: #{tpu_custom_call.1} parent=5 // pred_fallthru
        _
      %p520 = scmp.lt.s32.totalorder %s27, 2
      // Predicated region
      $region77: #{tpu_custom_call.1} parent=5 // pred_check
        %p521 = pneg %p520
      $region78: #{tpu_custom_call.1} parent=5 // pred_check_branch
        %523 = sbr.rel (%p521) target = $region80
      $region79: #{tpu_custom_call.1} parent=5 // pred_region
        // Predicated region
        $region81: #{tpu_custom_call.1} parent=79 // pred_check
          %p524 = pneg %p61
        $region82: #{tpu_custom_call.1} parent=79 // pred_check_branch
          %526 = sbr.rel (%p524) target = $region84
        $region83: #{tpu_custom_call.1} parent=79 // pred_region
          %p527 = scmp.lt.s32.totalorder %s34, 1
          %s528 = scalar_select %p527, %s34, 1
          %p529 = scmp.lt.s32.totalorder %s35, 0
          %s530 = scalar_select %p529, %s35, 0
          %s531 = sadd.s32 %s530, %s528
          %s532 = smul.addr %s531, 8
          %s533 = scalar_lea.vmem %s0, %s532
        $region84: #{tpu_custom_call.1} parent=79 // pred_fallthru
          _
        // Predicated region
        $region85: #{tpu_custom_call.1} parent=79 // pred_check
          %p534 = pneg %p87
        $region86: #{tpu_custom_call.1} parent=79 // pred_check_branch
          %536 = sbr.rel (%p534) target = $region88
        $region87: #{tpu_custom_call.1} parent=79 // pred_region
          %p537 = scmp.lt.s32.totalorder %s34, 1
          %s538 = scalar_select %p537, %s34, 1
          %s539 = scalar_lea.vmem %s1, %s538
        $region88: #{tpu_custom_call.1} parent=79 // pred_fallthru
          _
      $region80: #{tpu_custom_call.1} parent=5 // pred_fallthru
        _
      %p540 = scmp.le.s32.totalorder 1, %s27
      %p541 = scmp.lt.s32.totalorder %s27, 3
      %p542 = pnand %p540, %p541
      %p543 = pneg %p542
      // Predicated region
      $region89: #{tpu_custom_call.1} parent=5 // pred_check
        _
      $region90: #{tpu_custom_call.1} parent=5 // pred_check_branch
        %545 = sbr.rel (%p542) target = $region92
      $region91: #{tpu_custom_call.1} parent=5 // pred_region
        %s546 = ssub.s32 %s27, 1
        %p547 = scmp.lt.s32.totalorder %s36, 1
        %s548 = scalar_select %p547, %s36, 1
        %p549 = scmp.lt.s32.totalorder %s37, 0
        %s550 = scalar_select %p549, %s37, 0
        %s551 = sadd.s32 %s550, %s548
        %s552 = smul.addr %s551, 8
        %s553 = scalar_lea.vmem %s0, %s552
        %p554 = pneg %p67
        %p555 = pneg %p64
        %p556 = scmp.lt.s32.totalorder %s36, 1
        %s557 = scalar_select %p556, %s36, 1
        %s558 = scalar_lea.vmem %s1, %s557
        %p559 = pneg %p93
        %p560 = pneg %p90
        %p561 = pneg %p114
        %p562 = pneg %p111
        %p563 = pneg %p135
        %p564 = pneg %p132
        %p565 = pneg %p156
        %p566 = pneg %p153
        %p567 = pneg %p177
        %p568 = pneg %p174
        %p569 = pneg %p198
        %p570 = pneg %p195
        %p571 = pneg %p219
        %p572 = pneg %p216
        %p573 = pneg %p240
        %p574 = pneg %p237
        %p575 = pneg %p261
        %p576 = pneg %p258
        %p577 = pneg %p282
        %p578 = pneg %p279
        %p579 = pneg %p303
        %p580 = pneg %p300
        %p581 = pneg %p324
        %p582 = pneg %p321
        %p583 = pneg %p345
        %p584 = pneg %p342
        %p585 = pneg %p366
        %p586 = pneg %p363
        %p587 = pneg %p387
        %p588 = pneg %p384
        %p589 = pneg %p408
        %p590 = pneg %p405
        %p591 = pneg %p429
        %p592 = pneg %p426
        %p593 = pneg %p457
        %p594 = pneg %p454
        %s595 = sand.u32 %s444, 1
        %s596 = scalar_lea.sflag [#allocation3], %s595
        %s597 = sand.u32 %s444, 1
        %s598 = smul.addr %s597, 8
        %s599 = scalar_lea.vmem [#allocation2], %s598
        %p600 = scmp.lt.s32.totalorder %s36, 1
        %s601 = scalar_select %p600, %s36, 1
        %p602 = scmp.lt.s32.totalorder %s37, 0
        %s603 = scalar_select %p602, %s37, 0
        %s604 = sadd.s32 %s603, %s601
        %s605 = smul.addr %s604, 8
        %s606 = scalar_lea.vmem %s0, %s605
        %p607 = scmp.lt.s32.totalorder %s36, 1
        %s608 = scalar_select %p607, %s36, 1
        %s609 = scalar_lea.vmem %s1, %s608
        %v611 = vld [vmem:[%s606] sm:$0xff]
        %v612 = vpack.c.bf16 %v611, %v611
        %v613 = vld [vmem:[%s609] sm:$0x1]
        %v614 = vld [vmem:[%s2] sm:$0xf]
        %v615 = vld [vmem:[%s2 + $0x4] sm:$0xf]
        %v616 = vld [vmem:[%s2 + $0x8] sm:$0xf]
        %v617 = vld [vmem:[%s2 + $0xc] sm:$0xf]
        %v618 = vld [vmem:[%s3] sm:$0x1]
        %v620 = vlaneseq
        %v621 = vshrl.u32 %v620, 7
        %v622 = vsub.s32 0, %v621
        %v623 = vrot.slane %v618, %v622
        %v629 = vunpack.c.l.b16 %v614
        %v630 = vunpack.c.l.b16 %v615
        %v631 = vunpack.c.l.b16 %v616
        %v632 = vunpack.c.l.b16 %v617
        %v633 = vpack.c.b16 %v630, %v629
        %v634 = vpack.c.b16 %v632, %v631
        %vm637 = vcmask 261120
        %v639 = vsel %vm637, %v612, 0
        %641 = vmatprep.subr.bf16.mxu0 0
        %642 = vmatpush1.bf16.msra.mxu0 0
        %643 = vmatprep.subr.bf16.mxu0 0
        %644 = vmatpush1.bf16.msra.mxu0 0
        %645 = vmatprep.subr.bf16.mxu0 0
        %646 = vmatpush1.bf16.msra.mxu0 0
        %647 = vmatprep.subr.bf16.mxu0 0
        %648 = vmatpush1.bf16.msra.mxu0 0
        %649 = vmatprep.subr.bf16.mxu0 0
        %650 = vmatpush1.bf16.msra.mxu0 0
        %651 = vmatprep.subr.bf16.mxu0 0
        %652 = vmatpush1.bf16.msra.mxu0 0
        %653 = vmatprep.subr.bf16.mxu0 0
        %654 = vmatpush1.bf16.msra.mxu0 %v634
        %655 = vmatprep.subr.bf16.mxu0 0
        %656 = vmatpush1.bf16.msra.mxu0 %v633
        %657 = vmatprep.subr.bf16.mxu0 0
        %658 = vmatpush2.bf16.msra.mxu0 0
        %659 = vmatprep.subr.bf16.mxu0 0
        %660 = vmatpush2.bf16.msra.mxu0 0
        %661 = vmatprep.subr.bf16.mxu0 0
        %662 = vmatpush2.bf16.msra.mxu0 0
        %663 = vmatprep.subr.bf16.mxu0 0
        %664 = vmatpush2.bf16.msra.mxu0 0
        %665 = vmatprep.subr.bf16.mxu0 0
        %666 = vmatpush2.bf16.msra.mxu0 0
        %667 = vmatprep.subr.bf16.mxu0 0
        %668 = vmatpush2.bf16.msra.mxu0 0
        %669 = vmatprep.subr.bf16.mxu0 0
        %670 = vmatpush2.bf16.msra.mxu0 0
        %671 = vmatprep.subr.bf16.mxu0 0
        %672 = vmatpush2.bf16.msra.mxu0 0
        %673 = vmatprep.mubr.bf16.mxu0 0
        %674 = vmatmul.mubr.bf16.gmra.mxu0 %v639
        %v675 = vpop.f32.mrf.mxu0
        %v676 = vadd.f32 %v623, %v675
        %v677 = vpop.f32.mrf.mxu0
        %v678 = vpop.f32.mrf.mxu0
        %v679 = vpop.f32.mrf.mxu0
        %680 = vdwg.mxu0
        %v681 = vld [vmem:[%s4] sm:$0xf]
        %v682 = vld [vmem:[%s4 + $0x4] sm:$0xf]
        %v683 = vld [vmem:[%s4 + $0x8] sm:$0xf]
        %v684 = vld [vmem:[%s4 + $0xc] sm:$0xf]
        %v685 = vld [vmem:[%s5] sm:$0x1]
        %v687 = vlaneseq
        %v688 = vshrl.u32 %v687, 7
        %v689 = vsub.s32 0, %v688
        %v690 = vrot.slane %v685, %v689
        %v696 = vunpack.c.l.b16 %v681
        %v697 = vunpack.c.l.b16 %v682
        %v698 = vunpack.c.l.b16 %v683
        %v699 = vunpack.c.l.b16 %v684
        %v700 = vpack.c.b16 %v697, %v696
        %v701 = vpack.c.b16 %v699, %v698
        %704 = vmatprep.subr.bf16.mxu0 0
        %705 = vmatpush1.bf16.msra.mxu0 0
        %706 = vmatprep.subr.bf16.mxu0 0
        %707 = vmatpush1.bf16.msra.mxu0 0
        %708 = vmatprep.subr.bf16.mxu0 0
        %709 = vmatpush1.bf16.msra.mxu0 0
        %710 = vmatprep.subr.bf16.mxu0 0
        %711 = vmatpush1.bf16.msra.mxu0 0
        %712 = vmatprep.subr.bf16.mxu0 0
        %713 = vmatpush1.bf16.msra.mxu0 0
        %714 = vmatprep.subr.bf16.mxu0 0
        %715 = vmatpush1.bf16.msra.mxu0 0
        %716 = vmatprep.subr.bf16.mxu0 0
        %717 = vmatpush1.bf16.msra.mxu0 %v701
        %718 = vmatprep.subr.bf16.mxu0 0
        %719 = vmatpush1.bf16.msra.mxu0 %v700
        %720 = vmatprep.subr.bf16.mxu0 0
        %721 = vmatpush2.bf16.msra.mxu0 0
        %722 = vmatprep.subr.bf16.mxu0 0
        %723 = vmatpush2.bf16.msra.mxu0 0
        %724 = vmatprep.subr.bf16.mxu0 0
        %725 = vmatpush2.bf16.msra.mxu0 0
        %726 = vmatprep.subr.bf16.mxu0 0
        %727 = vmatpush2.bf16.msra.mxu0 0
        %728 = vmatprep.subr.bf16.mxu0 0
        %729 = vmatpush2.bf16.msra.mxu0 0
        %730 = vmatprep.subr.bf16.mxu0 0
        %731 = vmatpush2.bf16.msra.mxu0 0
        %732 = vmatprep.subr.bf16.mxu0 0
        %733 = vmatpush2.bf16.msra.mxu0 0
        %734 = vmatprep.subr.bf16.mxu0 0
        %735 = vmatpush2.bf16.msra.mxu0 0
        %736 = vmatprep.mubr.bf16.mxu0 0
        %737 = vmatmul.mubr.bf16.gmra.mxu0 %v639
        %v738 = vpop.f32.mrf.mxu0
        %v739 = vadd.f32 %v690, %v738
        %v740 = vpop.f32.mrf.mxu0
        %v741 = vpop.f32.mrf.mxu0
        %v742 = vpop.f32.mrf.mxu0
        %743 = vdwg.mxu0
        %v744 = vld [vmem:[%s6] sm:$0xf]
        %v745 = vld [vmem:[%s6 + $0x4] sm:$0xf]
        %v746 = vld [vmem:[%s6 + $0x8] sm:$0xf]
        %v747 = vld [vmem:[%s6 + $0xc] sm:$0xf]
        %v748 = vld [vmem:[%s7] sm:$0x1]
        %v750 = vlaneseq
        %v751 = vshrl.u32 %v750, 7
        %v752 = vsub.s32 0, %v751
        %v753 = vrot.slane %v748, %v752
        %v759 = vunpack.c.l.b16 %v744
        %v760 = vunpack.c.l.b16 %v745
        %v761 = vunpack.c.l.b16 %v746
        %v762 = vunpack.c.l.b16 %v747
        %v763 = vpack.c.b16 %v760, %v759
        %v764 = vpack.c.b16 %v762, %v761
        %767 = vmatprep.subr.bf16.mxu0 0
        %768 = vmatpush1.bf16.msra.mxu0 0
        %769 = vmatprep.subr.bf16.mxu0 0
        %770 = vmatpush1.bf16.msra.mxu0 0
        %771 = vmatprep.subr.bf16.mxu0 0
        %772 = vmatpush1.bf16.msra.mxu0 0
        %773 = vmatprep.subr.bf16.mxu0 0
        %774 = vmatpush1.bf16.msra.mxu0 0
        %775 = vmatprep.subr.bf16.mxu0 0
        %776 = vmatpush1.bf16.msra.mxu0 0
        %777 = vmatprep.subr.bf16.mxu0 0
        %778 = vmatpush1.bf16.msra.mxu0 0
        %779 = vmatprep.subr.bf16.mxu0 0
        %780 = vmatpush1.bf16.msra.mxu0 %v764
        %781 = vmatprep.subr.bf16.mxu0 0
        %782 = vmatpush1.bf16.msra.mxu0 %v763
        %783 = vmatprep.subr.bf16.mxu0 0
        %784 = vmatpush2.bf16.msra.mxu0 0
        %785 = vmatprep.subr.bf16.mxu0 0
        %786 = vmatpush2.bf16.msra.mxu0 0
        %787 = vmatprep.subr.bf16.mxu0 0
        %788 = vmatpush2.bf16.msra.mxu0 0
        %789 = vmatprep.subr.bf16.mxu0 0
        %790 = vmatpush2.bf16.msra.mxu0 0
        %791 = vmatprep.subr.bf16.mxu0 0
        %792 = vmatpush2.bf16.msra.mxu0 0
        %793 = vmatprep.subr.bf16.mxu0 0
        %794 = vmatpush2.bf16.msra.mxu0 0
        %795 = vmatprep.subr.bf16.mxu0 0
        %796 = vmatpush2.bf16.msra.mxu0 0
        %797 = vmatprep.subr.bf16.mxu0 0
        %798 = vmatpush2.bf16.msra.mxu0 0
        %799 = vmatprep.mubr.bf16.mxu0 0
        %800 = vmatmul.mubr.bf16.gmra.mxu0 %v639
        %v801 = vpop.f32.mrf.mxu0
        %v802 = vadd.f32 %v753, %v801
        %v803 = vpop.f32.mrf.mxu0
        %v804 = vpop.f32.mrf.mxu0
        %v805 = vpop.f32.mrf.mxu0
        %806 = vdwg.mxu0
        %v807 = vpack.c.bf16 %v676, %v676
        %v808 = vpack.c.bf16 %v739, %v739
        %v810 = vlaneseq
        %v811 = vshrl.u32 %v810, 7
        %v812 = vsub.s32 0, %v811
        %v813 = vrot.slane %v613, %v812
        %vm815 = vcmask 130048
        %v817 = vsel %vm815, %v807, 0
        %v820 = vsel %vm815, %v808, 0
        %822 = vmatprep.subr.bf16.mxu0 0
        %823 = vmatpush1.bf16.xpose.msra.mxu0 0
        %824 = vmatprep.subr.bf16.mxu0 0
        %825 = vmatpush1.bf16.xpose.msra.mxu0 0
        %826 = vmatprep.subr.bf16.mxu0 0
        %827 = vmatpush1.bf16.xpose.msra.mxu0 0
        %828 = vmatprep.subr.bf16.mxu0 0
        %829 = vmatpush1.bf16.xpose.msra.mxu0 0
        %830 = vmatprep.subr.bf16.mxu0 0
        %831 = vmatpush1.bf16.xpose.msra.mxu0 0
        %832 = vmatprep.subr.bf16.mxu0 0
        %833 = vmatpush1.bf16.xpose.msra.mxu0 0
        %834 = vmatprep.subr.bf16.mxu0 0
        %835 = vmatpush1.bf16.xpose.msra.mxu0 0
        %836 = vmatprep.subr.bf16.mxu0 0
        %837 = vmatpush1.bf16.xpose.msra.mxu0 %v820
        %838 = vmatprep.subr.bf16.mxu0 0
        %839 = vmatpush2.bf16.xpose.msra.mxu0 0
        %840 = vmatprep.subr.bf16.mxu0 0
        %841 = vmatpush2.bf16.xpose.msra.mxu0 0
        %842 = vmatprep.subr.bf16.mxu0 0
        %843 = vmatpush2.bf16.xpose.msra.mxu0 0
        %844 = vmatprep.subr.bf16.mxu0 0
        %845 = vmatpush2.bf16.xpose.msra.mxu0 0
        %846 = vmatprep.subr.bf16.mxu0 0
        %847 = vmatpush2.bf16.xpose.msra.mxu0 0
        %848 = vmatprep.subr.bf16.mxu0 0
        %849 = vmatpush2.bf16.xpose.msra.mxu0 0
        %850 = vmatprep.subr.bf16.mxu0 0
        %851 = vmatpush2.bf16.xpose.msra.mxu0 0
        %852 = vmatprep.subr.bf16.mxu0 0
        %853 = vmatpush2.bf16.xpose.msra.mxu0 0
        %854 = vmatprep.mubr.bf16.mxu0 0
        %855 = vmatmul.mubr.bf16.gmra.mxu0 %v817
        %v856 = vpop.f32.mrf.mxu0
        %v857 = vadd.f32 %v813, %v856
        %v858 = vpop.f32.mrf.mxu0
        %v859 = vpop.f32.mrf.mxu0
        %v860 = vpop.f32.mrf.mxu0
        %861 = vdwg.mxu0
        %vm862 = vcmask 64512
        %v863 = vsel %vm862, %v857, -inf
        %864 = vmax.xlane.f32.xlu0 %v863
        %v865 = vpop.xlane.xlu0 %864
        %v866 = vsub.f32 %v857, %v865
        %v867 = vmul.f32 %v866, 1.442695
        %v868 = vpow.pop %v867
        %v869 = vsel %vm862, %v868, 0.0
        %870 = vadd.xlane.f32.xlu0 %v869
        %v871 = vpop.xlane.xlu0 %870
        %v872 = vrcp.pop %v871
        %v873 = vmul.f32 %v868, %v872
        %v874 = vpack.c.bf16 %v873, %v873
        %v875 = vpack.c.bf16 %v802, %v802
        %v877 = vsel %vm862, %v874, 0
        %vm879 = vcmask 1043456
        %v881 = vsel %vm879, %v875, 0
        %883 = vmatprep.subr.bf16.mxu0 0
        %884 = vmatpush1.bf16.msra.mxu0 0
        %885 = vmatprep.subr.bf16.mxu0 0
        %886 = vmatpush1.bf16.msra.mxu0 0
        %887 = vmatprep.subr.bf16.mxu0 0
        %888 = vmatpush1.bf16.msra.mxu0 0
        %889 = vmatprep.subr.bf16.mxu0 0
        %890 = vmatpush1.bf16.msra.mxu0 0
        %891 = vmatprep.subr.bf16.mxu0 0
        %892 = vmatpush1.bf16.msra.mxu0 0
        %893 = vmatprep.subr.bf16.mxu0 0
        %894 = vmatpush1.bf16.msra.mxu0 0
        %895 = vmatprep.subr.bf16.mxu0 0
        %896 = vmatpush1.bf16.msra.mxu0 0
        %897 = vmatprep.subr.bf16.mxu0 0
        %898 = vmatpush1.bf16.msra.mxu0 %v881
        %899 = vmatprep.subr.bf16.mxu0 0
        %900 = vmatpush2.bf16.msra.mxu0 0
        %901 = vmatprep.subr.bf16.mxu0 0
        %902 = vmatpush2.bf16.msra.mxu0 0
        %903 = vmatprep.subr.bf16.mxu0 0
        %904 = vmatpush2.bf16.msra.mxu0 0
        %905 = vmatprep.subr.bf16.mxu0 0
        %906 = vmatpush2.bf16.msra.mxu0 0
        %907 = vmatprep.subr.bf16.mxu0 0
        %908 = vmatpush2.bf16.msra.mxu0 0
        %909 = vmatprep.subr.bf16.mxu0 0
        %910 = vmatpush2.bf16.msra.mxu0 0
        %911 = vmatprep.subr.bf16.mxu0 0
        %912 = vmatpush2.bf16.msra.mxu0 0
        %913 = vmatprep.subr.bf16.mxu0 0
        %914 = vmatpush2.bf16.msra.mxu0 0
        %915 = vmatprep.mubr.bf16.mxu0 0
        %916 = vmatmul.mubr.bf16.gmra.mxu0 %v877
        %v917 = vpop.f32.mrf.mxu0
        %v918 = vadd.f32 0.0, %v917
        %v919 = vpop.f32.mrf.mxu0
        %v920 = vpop.f32.mrf.mxu0
        %v921 = vpop.f32.mrf.mxu0
        %922 = vdwg.mxu0
        %v923 = vpack.c.bf16 %v918, %v918
        %v924 = vld [vmem:[%s8] sm:$0xf]
        %v925 = vld [vmem:[%s8 + $0x4] sm:$0xf]
        %s926 = scalar_lea.vmem %s2, 16
        %v927 = vld [vmem:[%s926] sm:$0xf]
        %v928 = vld [vmem:[%s926 + $0x4] sm:$0xf]
        %v929 = vld [vmem:[%s926 + $0x8] sm:$0xf]
        %v930 = vld [vmem:[%s926 + $0xc] sm:$0xf]
        %s931 = scalar_lea.vmem %s3, 1
        %v932 = vld [vmem:[%s931] sm:$0x1]
        %v934 = vlaneseq
        %v935 = vshrl.u32 %v934, 7
        %v936 = vsub.s32 0, %v935
        %v937 = vrot.slane %v932, %v936
        %v943 = vunpack.c.l.b16 %v927
        %v944 = vunpack.c.l.b16 %v928
        %v945 = vunpack.c.l.b16 %v929
        %v946 = vunpack.c.l.b16 %v930
        %v947 = vpack.c.b16 %v944, %v943
        %v948 = vpack.c.b16 %v946, %v945
        %951 = vmatprep.subr.bf16.mxu0 0
        %952 = vmatpush1.bf16.msra.mxu0 0
        %953 = vmatprep.subr.bf16.mxu0 0
        %954 = vmatpush1.bf16.msra.mxu0 0
        %955 = vmatprep.subr.bf16.mxu0 0
        %956 = vmatpush1.bf16.msra.mxu0 0
        %957 = vmatprep.subr.bf16.mxu0 0
        %958 = vmatpush1.bf16.msra.mxu0 0
        %959 = vmatprep.subr.bf16.mxu0 0
        %960 = vmatpush1.bf16.msra.mxu0 0
        %961 = vmatprep.subr.bf16.mxu0 0
        %962 = vmatpush1.bf16.msra.mxu0 0
        %963 = vmatprep.subr.bf16.mxu0 0
        %964 = vmatpush1.bf16.msra.mxu0 %v948
        %965 = vmatprep.subr.bf16.mxu0 0
        %966 = vmatpush1.bf16.msra.mxu0 %v947
        %967 = vmatprep.subr.bf16.mxu0 0
        %968 = vmatpush2.bf16.msra.mxu0 0
        %969 = vmatprep.subr.bf16.mxu0 0
        %970 = vmatpush2.bf16.msra.mxu0 0
        %971 = vmatprep.subr.bf16.mxu0 0
        %972 = vmatpush2.bf16.msra.mxu0 0
        %973 = vmatprep.subr.bf16.mxu0 0
        %974 = vmatpush2.bf16.msra.mxu0 0
        %975 = vmatprep.subr.bf16.mxu0 0
        %976 = vmatpush2.bf16.msra.mxu0 0
        %977 = vmatprep.subr.bf16.mxu0 0
        %978 = vmatpush2.bf16.msra.mxu0 0
        %979 = vmatprep.subr.bf16.mxu0 0
        %980 = vmatpush2.bf16.msra.mxu0 0
        %981 = vmatprep.subr.bf16.mxu0 0
        %982 = vmatpush2.bf16.msra.mxu0 0
        %983 = vmatprep.mubr.bf16.mxu0 0
        %984 = vmatmul.mubr.bf16.gmra.mxu0 %v639
        %v985 = vpop.f32.mrf.mxu0
        %v986 = vadd.f32 %v937, %v985
        %v987 = vpop.f32.mrf.mxu0
        %v988 = vpop.f32.mrf.mxu0
        %v989 = vpop.f32.mrf.mxu0
        %990 = vdwg.mxu0
        %s991 = scalar_lea.vmem %s4, 16
        %v992 = vld [vmem:[%s991] sm:$0xf]
        %v993 = vld [vmem:[%s991 + $0x4] sm:$0xf]
        %v994 = vld [vmem:[%s991 + $0x8] sm:$0xf]
        %v995 = vld [vmem:[%s991 + $0xc] sm:$0xf]
        %s996 = scalar_lea.vmem %s5, 1
        %v997 = vld [vmem:[%s996] sm:$0x1]
        %v999 = vlaneseq
        %v1000 = vshrl.u32 %v999, 7
        %v1001 = vsub.s32 0, %v1000
        %v1002 = vrot.slane %v997, %v1001
        %v1008 = vunpack.c.l.b16 %v992
        %v1009 = vunpack.c.l.b16 %v993
        %v1010 = vunpack.c.l.b16 %v994
        %v1011 = vunpack.c.l.b16 %v995
        %v1012 = vpack.c.b16 %v1009, %v1008
        %v1013 = vpack.c.b16 %v1011, %v1010
        %1016 = vmatprep.subr.bf16.mxu0 0
        %1017 = vmatpush1.bf16.msra.mxu0 0
        %1018 = vmatprep.subr.bf16.mxu0 0
        %1019 = vmatpush1.bf16.msra.mxu0 0
        %1020 = vmatprep.subr.bf16.mxu0 0
        %1021 = vmatpush1.bf16.msra.mxu0 0
        %1022 = vmatprep.subr.bf16.mxu0 0
        %1023 = vmatpush1.bf16.msra.mxu0 0
        %1024 = vmatprep.subr.bf16.mxu0 0
        %1025 = vmatpush1.bf16.msra.mxu0 0
        %1026 = vmatprep.subr.bf16.mxu0 0
        %1027 = vmatpush1.bf16.msra.mxu0 0
        %1028 = vmatprep.subr.bf16.mxu0 0
        %1029 = vmatpush1.bf16.msra.mxu0 %v1013
        %1030 = vmatprep.subr.bf16.mxu0 0
        %1031 = vmatpush1.bf16.msra.mxu0 %v1012
        %1032 = vmatprep.subr.bf16.mxu0 0
        %1033 = vmatpush2.bf16.msra.mxu0 0
        %1034 = vmatprep.subr.bf16.mxu0 0
        %1035 = vmatpush2.bf16.msra.mxu0 0
        %1036 = vmatprep.subr.bf16.mxu0 0
        %1037 = vmatpush2.bf16.msra.mxu0 0
        %1038 = vmatprep.subr.bf16.mxu0 0
        %1039 = vmatpush2.bf16.msra.mxu0 0
        %1040 = vmatprep.subr.bf16.mxu0 0
        %1041 = vmatpush2.bf16.msra.mxu0 0
        %1042 = vmatprep.subr.bf16.mxu0 0
        %1043 = vmatpush2.bf16.msra.mxu0 0
        %1044 = vmatprep.subr.bf16.mxu0 0
        %1045 = vmatpush2.bf16.msra.mxu0 0
        %1046 = vmatprep.subr.bf16.mxu0 0
        %1047 = vmatpush2.bf16.msra.mxu0 0
        %1048 = vmatprep.mubr.bf16.mxu0 0
        %1049 = vmatmul.mubr.bf16.gmra.mxu0 %v639
        %v1050 = vpop.f32.mrf.mxu0
        %v1051 = vadd.f32 %v1002, %v1050
        %v1052 = vpop.f32.mrf.mxu0
        %v1053 = vpop.f32.mrf.mxu0
        %v1054 = vpop.f32.mrf.mxu0
        %1055 = vdwg.mxu0
        %s1056 = scalar_lea.vmem %s6, 16
        %v1057 = vld [vmem:[%s1056] sm:$0xf]
        %v1058 = vld [vmem:[%s1056 + $0x4] sm:$0xf]
        %v1059 = vld [vmem:[%s1056 + $0x8] sm:$0xf]
        %v1060 = vld [vmem:[%s1056 + $0xc] sm:$0xf]
        %s1061 = scalar_lea.vmem %s7, 1
        %v1062 = vld [vmem:[%s1061] sm:$0x1]
        %v1064 = vlaneseq
        %v1065 = vshrl.u32 %v1064, 7
        %v1066 = vsub.s32 0, %v1065
        %v1067 = vrot.slane %v1062, %v1066
        %v1073 = vunpack.c.l.b16 %v1057
        %v1074 = vunpack.c.l.b16 %v1058
        %v1075 = vunpack.c.l.b16 %v1059
        %v1076 = vunpack.c.l.b16 %v1060
        %v1077 = vpack.c.b16 %v1074, %v1073
        %v1078 = vpack.c.b16 %v1076, %v1075
        %1081 = vmatprep.subr.bf16.mxu0 0
        %1082 = vmatpush1.bf16.msra.mxu0 0
        %1083 = vmatprep.subr.bf16.mxu0 0
        %1084 = vmatpush1.bf16.msra.mxu0 0
        %1085 = vmatprep.subr.bf16.mxu0 0
        %1086 = vmatpush1.bf16.msra.mxu0 0
        %1087 = vmatprep.subr.bf16.mxu0 0
        %1088 = vmatpush1.bf16.msra.mxu0 0
        %1089 = vmatprep.subr.bf16.mxu0 0
        %1090 = vmatpush1.bf16.msra.mxu0 0
        %1091 = vmatprep.subr.bf16.mxu0 0
        %1092 = vmatpush1.bf16.msra.mxu0 0
        %1093 = vmatprep.subr.bf16.mxu0 0
        %1094 = vmatpush1.bf16.msra.mxu0 %v1078
        %1095 = vmatprep.subr.bf16.mxu0 0
        %1096 = vmatpush1.bf16.msra.mxu0 %v1077
        %1097 = vmatprep.subr.bf16.mxu0 0
        %1098 = vmatpush2.bf16.msra.mxu0 0
        %1099 = vmatprep.subr.bf16.mxu0 0
        %1100 = vmatpush2.bf16.msra.mxu0 0
        %1101 = vmatprep.subr.bf16.mxu0 0
        %1102 = vmatpush2.bf16.msra.mxu0 0
        %1103 = vmatprep.subr.bf16.mxu0 0
        %1104 = vmatpush2.bf16.msra.mxu0 0
        %1105 = vmatprep.subr.bf16.mxu0 0
        %1106 = vmatpush2.bf16.msra.mxu0 0
        %1107 = vmatprep.subr.bf16.mxu0 0
        %1108 = vmatpush2.bf16.msra.mxu0 0
        %1109 = vmatprep.subr.bf16.mxu0 0
        %1110 = vmatpush2.bf16.msra.mxu0 0
        %1111 = vmatprep.subr.bf16.mxu0 0
        %1112 = vmatpush2.bf16.msra.mxu0 0
        %1113 = vmatprep.mubr.bf16.mxu0 0
        %1114 = vmatmul.mubr.bf16.gmra.mxu0 %v639
        %v1115 = vpop.f32.mrf.mxu0
        %v1116 = vadd.f32 %v1067, %v1115
        %v1117 = vpop.f32.mrf.mxu0
        %v1118 = vpop.f32.mrf.mxu0
        %v1119 = vpop.f32.mrf.mxu0
        %1120 = vdwg.mxu0
        %v1121 = vpack.c.bf16 %v986, %v986
        %v1122 = vpack.c.bf16 %v1051, %v1051
        %v1124 = vsel %vm815, %v1121, 0
        %v1127 = vsel %vm815, %v1122, 0
        %1129 = vmatprep.subr.bf16.mxu0 0
        %1130 = vmatpush1.bf16.xpose.msra.mxu0 0
        %1131 = vmatprep.subr.bf16.mxu0 0
        %1132 = vmatpush1.bf16.xpose.msra.mxu0 0
        %1133 = vmatprep.subr.bf16.mxu0 0
        %1134 = vmatpush1.bf16.xpose.msra.mxu0 0
        %1135 = vmatprep.subr.bf16.mxu0 0
        %1136 = vmatpush1.bf16.xpose.msra.mxu0 0
        %1137 = vmatprep.subr.bf16.mxu0 0
        %1138 = vmatpush1.bf16.xpose.msra.mxu0 0
        %1139 = vmatprep.subr.bf16.mxu0 0
        %1140 = vmatpush1.bf16.xpose.msra.mxu0 0
        %1141 = vmatprep.subr.bf16.mxu0 0
        %1142 = vmatpush1.bf16.xpose.msra.mxu0 0
        %1143 = vmatprep.subr.bf16.mxu0 0
        %1144 = vmatpush1.bf16.xpose.msra.mxu0 %v1127
        %1145 = vmatprep.subr.bf16.mxu0 0
        %1146 = vmatpush2.bf16.xpose.msra.mxu0 0
        %1147 = vmatprep.subr.bf16.mxu0 0
        %1148 = vmatpush2.bf16.xpose.msra.mxu0 0
        %1149 = vmatprep.subr.bf16.mxu0 0
        %1150 = vmatpush2.bf16.xpose.msra.mxu0 0
        %1151 = vmatprep.subr.bf16.mxu0 0
        %1152 = vmatpush2.bf16.xpose.msra.mxu0 0
        %1153 = vmatprep.subr.bf16.mxu0 0
        %1154 = vmatpush2.bf16.xpose.msra.mxu0 0
        %1155 = vmatprep.subr.bf16.mxu0 0
        %1156 = vmatpush2.bf16.xpose.msra.mxu0 0
        %1157 = vmatprep.subr.bf16.mxu0 0
        %1158 = vmatpush2.bf16.xpose.msra.mxu0 0
        %1159 = vmatprep.subr.bf16.mxu0 0
        %1160 = vmatpush2.bf16.xpose.msra.mxu0 0
        %1161 = vmatprep.mubr.bf16.mxu0 0
        %1162 = vmatmul.mubr.bf16.gmra.mxu0 %v1124
        %v1163 = vpop.f32.mrf.mxu0
        %v1164 = vadd.f32 %v813, %v1163
        %v1165 = vpop.f32.mrf.mxu0
        %v1166 = vpop.f32.mrf.mxu0
        %v1167 = vpop.f32.mrf.mxu0
        %1168 = vdwg.mxu0
        %v1169 = vsel %vm862, %v1164, -inf
        %1170 = vmax.xlane.f32.xlu0 %v1169
        %v1171 = vpop.xlane.xlu0 %1170
        %v1172 = vsub.f32 %v1164, %v1171
        %v1173 = vmul.f32 %v1172, 1.442695
        %v1174 = vpow.pop %v1173
        %v1175 = vsel %vm862, %v1174, 0.0
        %1176 = vadd.xlane.f32.xlu0 %v1175
        %v1177 = vpop.xlane.xlu0 %1176
        %v1178 = vrcp.pop %v1177
        %v1179 = vmul.f32 %v1174, %v1178
        %v1180 = vpack.c.bf16 %v1179, %v1179
        %v1181 = vpack.c.bf16 %v1116, %v1116
        %v1183 = vsel %vm862, %v1180, 0
        %v1186 = vsel %vm879, %v1181, 0
        %1188 = vmatprep.subr.bf16.mxu0 0
        %1189 = vmatpush1.bf16.msra.mxu0 0
        %1190 = vmatprep.subr.bf16.mxu0 0
        %1191 = vmatpush1.bf16.msra.mxu0 0
        %1192 = vmatprep.subr.bf16.mxu0 0
        %1193 = vmatpush1.bf16.msra.mxu0 0
        %1194 = vmatprep.subr.bf16.mxu0 0
        %1195 = vmatpush1.bf16.msra.mxu0 0
        %1196 = vmatprep.subr.bf16.mxu0 0
        %1197 = vmatpush1.bf16.msra.mxu0 0
        %1198 = vmatprep.subr.bf16.mxu0 0
        %1199 = vmatpush1.bf16.msra.mxu0 0
        %1200 = vmatprep.subr.bf16.mxu0 0
        %1201 = vmatpush1.bf16.msra.mxu0 0
        %1202 = vmatprep.subr.bf16.mxu0 0
        %1203 = vmatpush1.bf16.msra.mxu0 %v1186
        %1204 = vmatprep.subr.bf16.mxu0 0
        %1205 = vmatpush2.bf16.msra.mxu0 0
        %1206 = vmatprep.subr.bf16.mxu0 0
        %1207 = vmatpush2.bf16.msra.mxu0 0
        %1208 = vmatprep.subr.bf16.mxu0 0
        %1209 = vmatpush2.bf16.msra.mxu0 0
        %1210 = vmatprep.subr.bf16.mxu0 0
        %1211 = vmatpush2.bf16.msra.mxu0 0
        %1212 = vmatprep.subr.bf16.mxu0 0
        %1213 = vmatpush2.bf16.msra.mxu0 0
        %1214 = vmatprep.subr.bf16.mxu0 0
        %1215 = vmatpush2.bf16.msra.mxu0 0
        %1216 = vmatprep.subr.bf16.mxu0 0
        %1217 = vmatpush2.bf16.msra.mxu0 0
        %1218 = vmatprep.subr.bf16.mxu0 0
        %1219 = vmatpush2.bf16.msra.mxu0 0
        %1220 = vmatprep.mubr.bf16.mxu0 0
        %1221 = vmatmul.mubr.bf16.gmra.mxu0 %v1183
        %v1222 = vpop.f32.mrf.mxu0
        %v1223 = vadd.f32 0.0, %v1222
        %v1224 = vpop.f32.mrf.mxu0
        %v1225 = vpop.f32.mrf.mxu0
        %v1226 = vpop.f32.mrf.mxu0
        %1227 = vdwg.mxu0
        %v1228 = vpack.c.bf16 %v1223, %v1223
        %s1229 = scalar_lea.vmem %s8, 8
        %v1230 = vld [vmem:[%s1229] sm:$0xf]
        %v1231 = vld [vmem:[%s1229 + $0x4] sm:$0xf]
        %v1234 = vunpack.c.l.b16 %v1230
        %v1235 = vunpack.c.l.b16 %v1231
        %v1236 = vpack.c.b16 %v1235, %v1234
        %v1239 = vsel %vm815, %v1228, 0
        %1241 = vmatprep.subr.bf16.mxu0 0
        %1242 = vmatpush1.bf16.msra.mxu0 0
        %1243 = vmatprep.subr.bf16.mxu0 0
        %1244 = vmatpush1.bf16.msra.mxu0 0
        %1245 = vmatprep.subr.bf16.mxu0 0
        %1246 = vmatpush1.bf16.msra.mxu0 0
        %1247 = vmatprep.subr.bf16.mxu0 0
        %1248 = vmatpush1.bf16.msra.mxu0 0
        %1249 = vmatprep.subr.bf16.mxu0 0
        %1250 = vmatpush1.bf16.msra.mxu0 0
        %1251 = vmatprep.subr.bf16.mxu0 0
        %1252 = vmatpush1.bf16.msra.mxu0 0
        %1253 = vmatprep.subr.bf16.mxu0 0
        %1254 = vmatpush1.bf16.msra.mxu0 0
        %1255 = vmatprep.subr.bf16.mxu0 0
        %1256 = vmatpush1.bf16.msra.mxu0 %v1236
        %1257 = vmatprep.subr.bf16.mxu0 0
        %1258 = vmatpush2.bf16.msra.mxu0 0
        %1259 = vmatprep.subr.bf16.mxu0 0
        %1260 = vmatpush2.bf16.msra.mxu0 0
        %1261 = vmatprep.subr.bf16.mxu0 0
        %1262 = vmatpush2.bf16.msra.mxu0 0
        %1263 = vmatprep.subr.bf16.mxu0 0
        %1264 = vmatpush2.bf16.msra.mxu0 0
        %1265 = vmatprep.subr.bf16.mxu0 0
        %1266 = vmatpush2.bf16.msra.mxu0 0
        %1267 = vmatprep.subr.bf16.mxu0 0
        %1268 = vmatpush2.bf16.msra.mxu0 0
        %1269 = vmatprep.subr.bf16.mxu0 0
        %1270 = vmatpush2.bf16.msra.mxu0 0
        %1271 = vmatprep.subr.bf16.mxu0 0
        %1272 = vmatpush2.bf16.msra.mxu0 0
        %1273 = vmatprep.mubr.bf16.mxu0 0
        %1274 = vmatmul.mubr.bf16.gmra.mxu0 %v1239
        %v1275 = vpop.f32.mrf.mxu0
        %v1276 = vadd.f32 0.0, %v1275
        %v1277 = vpop.f32.mrf.mxu0
        %v1278 = vpop.f32.mrf.mxu0
        %v1279 = vpop.f32.mrf.mxu0
        %1280 = vdwg.mxu0
        %v1283 = vunpack.c.l.b16 %v924
        %v1284 = vunpack.c.l.b16 %v925
        %v1285 = vpack.c.b16 %v1284, %v1283
        %v1288 = vsel %vm815, %v923, 0
        %1290 = vmatprep.subr.bf16.mxu0 0
        %1291 = vmatpush1.bf16.msra.mxu0 0
        %1292 = vmatprep.subr.bf16.mxu0 0
        %1293 = vmatpush1.bf16.msra.mxu0 0
        %1294 = vmatprep.subr.bf16.mxu0 0
        %1295 = vmatpush1.bf16.msra.mxu0 0
        %1296 = vmatprep.subr.bf16.mxu0 0
        %1297 = vmatpush1.bf16.msra.mxu0 0
        %1298 = vmatprep.subr.bf16.mxu0 0
        %1299 = vmatpush1.bf16.msra.mxu0 0
        %1300 = vmatprep.subr.bf16.mxu0 0
        %1301 = vmatpush1.bf16.msra.mxu0 0
        %1302 = vmatprep.subr.bf16.mxu0 0
        %1303 = vmatpush1.bf16.msra.mxu0 0
        %1304 = vmatprep.subr.bf16.mxu0 0
        %1305 = vmatpush1.bf16.msra.mxu0 %v1285
        %1306 = vmatprep.subr.bf16.mxu0 0
        %1307 = vmatpush2.bf16.msra.mxu0 0
        %1308 = vmatprep.subr.bf16.mxu0 0
        %1309 = vmatpush2.bf16.msra.mxu0 0
        %1310 = vmatprep.subr.bf16.mxu0 0
        %1311 = vmatpush2.bf16.msra.mxu0 0
        %1312 = vmatprep.subr.bf16.mxu0 0
        %1313 = vmatpush2.bf16.msra.mxu0 0
        %1314 = vmatprep.subr.bf16.mxu0 0
        %1315 = vmatpush2.bf16.msra.mxu0 0
        %1316 = vmatprep.subr.bf16.mxu0 0
        %1317 = vmatpush2.bf16.msra.mxu0 0
        %1318 = vmatprep.subr.bf16.mxu0 0
        %1319 = vmatpush2.bf16.msra.mxu0 0
        %1320 = vmatprep.subr.bf16.mxu0 0
        %1321 = vmatpush2.bf16.msra.mxu0 0
        %1322 = vmatprep.mubr.bf16.mxu0 0
        %1323 = vmatmul.mubr.bf16.gmra.mxu0 %v1288
        %v1324 = vpop.f32.mrf.mxu0
        %v1325 = vadd.f32 %v1276, %v1324
        %v1326 = vpop.f32.mrf.mxu0
        %v1327 = vpop.f32.mrf.mxu0
        %v1328 = vpop.f32.mrf.mxu0
        %1329 = vdwg.mxu0
        %v1330 = vld [vmem:[%s9] sm:$0x1]
        %v1332 = vlaneseq
        %v1333 = vshrl.u32 %v1332, 7
        %v1334 = vsub.s32 0, %v1333
        %v1335 = vrot.slane %v1330, %v1334
        %v1337 = vadd.f32 %v1325, %v1335
        %v1338 = vadd.f32 %v1337, %v611
        %v1339 = vld [vmem:[%s10] sm:$0x1]
        %v1340 = vld [vmem:[%s11] sm:$0x1]
        %v1341 = vsel %vm637, %v1338, 0.0
        %1342 = vadd.xlane.f32.xlu0 %v1341
        %v1343 = vpop.xlane.xlu0 %1342
        %v1344 = vrcp.pop 32.0
        %v1345 = vmul.f32 %v1343, %v1344
        %v1346 = vsub.f32 %v1338, %v1345
        %v1347 = vmul.f32 %v1346, %v1346
        %v1348 = vsel %vm637, %v1347, 0.0
        %1349 = vadd.xlane.f32.xlu0 %v1348
        %v1350 = vpop.xlane.xlu0 %1349
        %v1351 = vmul.f32 %v1350, %v1344
        %v1352 = vadd.f32 %v1351, 1e-05
        %v1353 = vrsqrt.pop %v1352
        %v1354 = vmul.f32 %v1346, %v1353
        %v1356 = vlaneseq
        %v1357 = vshrl.u32 %v1356, 7
        %v1358 = vsub.s32 0, %v1357
        %v1359 = vrot.slane %v1339, %v1358
        %v1361 = vmul.f32 %v1354, %v1359
        %v1363 = vlaneseq
        %v1364 = vshrl.u32 %v1363, 7
        %v1365 = vsub.s32 0, %v1364
        %v1366 = vrot.slane %v1340, %v1365
        %v1368 = vadd.f32 %v1361, %v1366
        %v1369 = vpack.c.bf16 %v1368, %v1368
        %v1370 = vld [vmem:[%s12] sm:$0xf]
        %v1371 = vld [vmem:[%s12 + $0x4] sm:$0xf]
        %v1372 = vld [vmem:[%s12 + $0x8] sm:$0xf]
        %v1373 = vld [vmem:[%s12 + $0xc] sm:$0xf]
        %v1374 = vld [vmem:[%s13] sm:$0x1]
        %v1376 = vlaneseq
        %v1377 = vshrl.u32 %v1376, 7
        %v1378 = vsub.s32 0, %v1377
        %v1379 = vrot.slane %v1374, %v1378
        %v1385 = vunpack.c.l.b16 %v1370
        %v1386 = vunpack.c.l.b16 %v1371
        %v1387 = vunpack.c.l.b16 %v1372
        %v1388 = vunpack.c.l.b16 %v1373
        %v1389 = vpack.c.b16 %v1386, %v1385
        %v1390 = vpack.c.b16 %v1388, %v1387
        %v1394 = vsel %vm637, %v1369, 0
        %1396 = vmatprep.subr.bf16.mxu0 0
        %1397 = vmatpush1.bf16.msra.mxu0 0
        %1398 = vmatprep.subr.bf16.mxu0 0
        %1399 = vmatpush1.bf16.msra.mxu0 0
        %1400 = vmatprep.subr.bf16.mxu0 0
        %1401 = vmatpush1.bf16.msra.mxu0 0
        %1402 = vmatprep.subr.bf16.mxu0 0
        %1403 = vmatpush1.bf16.msra.mxu0 0
        %1404 = vmatprep.subr.bf16.mxu0 0
        %1405 = vmatpush1.bf16.msra.mxu0 0
        %1406 = vmatprep.subr.bf16.mxu0 0
        %1407 = vmatpush1.bf16.msra.mxu0 0
        %1408 = vmatprep.subr.bf16.mxu0 0
        %1409 = vmatpush1.bf16.msra.mxu0 %v1390
        %1410 = vmatprep.subr.bf16.mxu0 0
        %1411 = vmatpush1.bf16.msra.mxu0 %v1389
        %1412 = vmatprep.subr.bf16.mxu0 0
        %1413 = vmatpush2.bf16.msra.mxu0 0
        %1414 = vmatprep.subr.bf16.mxu0 0
        %1415 = vmatpush2.bf16.msra.mxu0 0
        %1416 = vmatprep.subr.bf16.mxu0 0
        %1417 = vmatpush2.bf16.msra.mxu0 0
        %1418 = vmatprep.subr.bf16.mxu0 0
        %1419 = vmatpush2.bf16.msra.mxu0 0
        %1420 = vmatprep.subr.bf16.mxu0 0
        %1421 = vmatpush2.bf16.msra.mxu0 0
        %1422 = vmatprep.subr.bf16.mxu0 0
        %1423 = vmatpush2.bf16.msra.mxu0 0
        %1424 = vmatprep.subr.bf16.mxu0 0
        %1425 = vmatpush2.bf16.msra.mxu0 0
        %1426 = vmatprep.subr.bf16.mxu0 0
        %1427 = vmatpush2.bf16.msra.mxu0 0
        %1428 = vmatprep.mubr.bf16.mxu0 0
        %1429 = vmatmul.mubr.bf16.gmra.mxu0 %v1394
        %v1430 = vpop.f32.mrf.mxu0
        %v1431 = vadd.f32 %v1379, %v1430
        %v1432 = vpop.f32.mrf.mxu0
        %v1433 = vpop.f32.mrf.mxu0
        %v1434 = vpop.f32.mrf.mxu0
        %1435 = vdwg.mxu0
        %v1436 = vmul.f32 %v1431, 0.5
        %v1437 = vmul.f32 %v1431, 0.044715
        %v1438 = vmul.f32 %v1437, %v1431
        %v1439 = vmul.f32 %v1438, %v1431
        %v1440 = vadd.f32 %v1431, %v1439
        %v1441 = vmul.f32 %v1440, 0.7978846
        %v1442 = vtanh.pop %v1441
        %v1443 = vadd.f32 %v1442, 1.0
        %v1444 = vmul.f32 %v1436, %v1443
        %v1445 = vpack.c.bf16 %v1444, %v1444
        %v1446 = vld [vmem:[%s14] sm:$0xf]
        %v1447 = vld [vmem:[%s14 + $0x4] sm:$0xf]
        %v1448 = vld [vmem:[%s14 + $0x8] sm:$0xf]
        %v1449 = vld [vmem:[%s14 + $0xc] sm:$0xf]
        %v1450 = vld [vmem:[%s14 + $0x10] sm:$0xf]
        %v1451 = vld [vmem:[%s14 + $0x14] sm:$0xf]
        %v1452 = vld [vmem:[%s14 + $0x18] sm:$0xf]
        %v1453 = vld [vmem:[%s14 + $0x1c] sm:$0xf]
        %v1454 = vld [vmem:[%s15] sm:$0x1]
        %v1456 = vlaneseq
        %v1457 = vshrl.u32 %v1456, 7
        %v1458 = vsub.s32 0, %v1457
        %v1459 = vrot.slane %v1454, %v1458
        %v1469 = vunpack.c.l.b16 %v1446
        %v1470 = vunpack.c.l.b16 %v1447
        %v1471 = vunpack.c.l.b16 %v1448
        %v1472 = vunpack.c.l.b16 %v1449
        %v1473 = vunpack.c.l.b16 %v1450
        %v1474 = vunpack.c.l.b16 %v1451
        %v1475 = vunpack.c.l.b16 %v1452
        %v1476 = vunpack.c.l.b16 %v1453
        %v1477 = vpack.c.b16 %v1470, %v1469
        %v1478 = vpack.c.b16 %v1472, %v1471
        %v1479 = vpack.c.b16 %v1474, %v1473
        %v1480 = vpack.c.b16 %v1476, %v1475
        %vm1485 = vcmask 523264
        %v1487 = vsel %vm1485, %v1445, 0
        %1489 = vmatprep.subr.bf16.mxu0 0
        %1490 = vmatpush1.bf16.msra.mxu0 0
        %1491 = vmatprep.subr.bf16.mxu0 0
        %1492 = vmatpush1.bf16.msra.mxu0 0
        %1493 = vmatprep.subr.bf16.mxu0 0
        %1494 = vmatpush1.bf16.msra.mxu0 0
        %1495 = vmatprep.subr.bf16.mxu0 0
        %1496 = vmatpush1.bf16.msra.mxu0 0
        %1497 = vmatprep.subr.bf16.mxu0 0
        %1498 = vmatpush1.bf16.msra.mxu0 %v1480
        %1499 = vmatprep.subr.bf16.mxu0 0
        %1500 = vmatpush1.bf16.msra.mxu0 %v1479
        %1501 = vmatprep.subr.bf16.mxu0 0
        %1502 = vmatpush1.bf16.msra.mxu0 %v1478
        %1503 = vmatprep.subr.bf16.mxu0 0
        %1504 = vmatpush1.bf16.msra.mxu0 %v1477
        %1505 = vmatprep.subr.bf16.mxu0 0
        %1506 = vmatpush2.bf16.msra.mxu0 0
        %1507 = vmatprep.subr.bf16.mxu0 0
        %1508 = vmatpush2.bf16.msra.mxu0 0
        %1509 = vmatprep.subr.bf16.mxu0 0
        %1510 = vmatpush2.bf16.msra.mxu0 0
        %1511 = vmatprep.subr.bf16.mxu0 0
        %1512 = vmatpush2.bf16.msra.mxu0 0
        %1513 = vmatprep.subr.bf16.mxu0 0
        %1514 = vmatpush2.bf16.msra.mxu0 0
        %1515 = vmatprep.subr.bf16.mxu0 0
        %1516 = vmatpush2.bf16.msra.mxu0 0
        %1517 = vmatprep.subr.bf16.mxu0 0
        %1518 = vmatpush2.bf16.msra.mxu0 0
        %1519 = vmatprep.subr.bf16.mxu0 0
        %1520 = vmatpush2.bf16.msra.mxu0 0
        %1521 = vmatprep.mubr.bf16.mxu0 0
        %1522 = vmatmul.mubr.bf16.gmra.mxu0 %v1487
        %v1523 = vpop.f32.mrf.mxu0
        %v1524 = vadd.f32 %v1459, %v1523
        %v1525 = vpop.f32.mrf.mxu0
        %v1526 = vpop.f32.mrf.mxu0
        %v1527 = vpop.f32.mrf.mxu0
        %1528 = vdwg.mxu0
        %v1529 = vadd.f32 %v1524, %v1368
        %v1530 = vld [vmem:[%s16] sm:$0x1]
        %v1531 = vld [vmem:[%s17] sm:$0x1]
        %v1532 = vsel %vm637, %v1529, 0.0
        %1533 = vadd.xlane.f32.xlu0 %v1532
        %v1534 = vpop.xlane.xlu0 %1533
        %v1535 = vmul.f32 %v1534, %v1344
        %v1536 = vsub.f32 %v1529, %v1535
        %v1537 = vmul.f32 %v1536, %v1536
        %v1538 = vsel %vm637, %v1537, 0.0
        %1539 = vadd.xlane.f32.xlu0 %v1538
        %v1540 = vpop.xlane.xlu0 %1539
        %v1541 = vmul.f32 %v1540, %v1344
        %v1542 = vadd.f32 %v1541, 1e-05
        %v1543 = vrsqrt.pop %v1542
        %v1544 = vmul.f32 %v1536, %v1543
        %v1546 = vlaneseq
        %v1547 = vshrl.u32 %v1546, 7
        %v1548 = vsub.s32 0, %v1547
        %v1549 = vrot.slane %v1530, %v1548
        %v1551 = vmul.f32 %v1544, %v1549
        %v1553 = vlaneseq
        %v1554 = vshrl.u32 %v1553, 7
        %v1555 = vsub.s32 0, %v1554
        %v1556 = vrot.slane %v1531, %v1555
        %v1558 = vadd.f32 %v1551, %v1556
        %1559 = vst.msk [vmem:[%s599] sm:$0xff] %vm637, %v1558
        %s1560 = sand.u32 %s444, 1
        %s1561 = scalar_lea.sflag [#allocation3], %s1560
        %s1562 = sand.u32 %s444, 1
        %s1563 = smul.addr %s1562, 8
        %s1564 = scalar_lea.vmem [#allocation2], %s1563
        // Predicated region
        $region93: #{tpu_custom_call.1} parent=91 // pred_check
          %p1565 = pneg %p454
        $region94: #{tpu_custom_call.1} parent=91 // pred_check_branch
          %1567 = sbr.rel (%p1565) target = $region96
        $region95: #{tpu_custom_call.1} parent=91 // pred_region
          %s1569 = ssub.s32 128, 128
          %1570 = vsyncadd %s1561, %s1569
          %s1571 = sadd.s32 %s37, %s36
          %s1572 = smul.addr %s1571, 128
          %s1573 = scalar_lea.hbm %s18, %s1572
          %s1575 = sshll.u32 %s1564, 4
          %s1576 = int_to_ptr.vmem [resolvable:$true] %s1575
          %1578 = dma.vmem_to_hbm [thread:$0]  %s1576, 128, %s1573, %s1561
        $region96: #{tpu_custom_call.1} parent=91 // pred_fallthru
          _
      $region92: #{tpu_custom_call.1} parent=5 // pred_fallthru
        _
      %p1579 = scmp.le.s32.totalorder 2, %s27
      // Predicated region
      $region97: #{tpu_custom_call.1} parent=5 // pred_check
        %p1580 = pneg %p1579
      $region98: #{tpu_custom_call.1} parent=5 // pred_check_branch
        %1582 = sbr.rel (%p1580) target = $region100
      $region99: #{tpu_custom_call.1} parent=5 // pred_region
        %s1583 = ssub.s32 %s27, 2
        // Predicated region
        $region101: #{tpu_custom_call.1} parent=99 // pred_check
          %p1584 = pneg %p460
        $region102: #{tpu_custom_call.1} parent=99 // pred_check_branch
          %1586 = sbr.rel (%p1584) target = $region104
        $region103: #{tpu_custom_call.1} parent=99 // pred_region
          %s1587 = sand.u32 %s445, 1
          %s1588 = scalar_lea.sflag [#allocation3], %s1587
          %s1589 = sand.u32 %s445, 1
          %s1590 = smul.addr %s1589, 8
          %s1591 = scalar_lea.vmem [#allocation2], %s1590
          %1592 = dma.done %s1588, 128
        $region104: #{tpu_custom_call.1} parent=99 // pred_fallthru
          _
      $region100: #{tpu_custom_call.1} parent=5 // pred_fallthru
        _
    $region6: #{tpu_custom_call.1} parent=1 // loop_footer
      %s31 = sadd.s32 1, %s27
    $region7: #{tpu_custom_call.1} parent=1 // loop_footer_branch
      %26 = sbr.rel target = $region3
    $region8: #{tpu_custom_call.1} parent=1 // loop_exit
      _
    %1593 = vsyncpa [#allocation3], 1
    %s1594 = scalar_lea.sflag [#allocation3], 1
    %1595 = vsyncpa %s1594, 1

</llo_original>
